<compile_context>
chip_gen: v5e
topology: v5e:2x2
jax: 0.10.0
libtpu: 0.0.40
codegen_flags: <defaults>
</compile_context>

<pallas_src>
import functools

import jax
import jax.numpy as jnp
from jax.experimental import pallas as pl
from jax.experimental.pallas import tpu as pltpu


LANE = 128


def _round_up(x, m):
    return ((x + m - 1) // m) * m


# ----------------------------------------------------------------------------
# Kernel 1: one (tm, K) x (K, 128k) tile -> lane-dense (tm, 128k) + bias (+ReLU).
# bf16 MXU inputs, f32 accumulation, f32 epilogue, bf16 store.
# ----------------------------------------------------------------------------
def _matmul_bias_act_kernel(x_ref, w_ref, b_ref, o_ref, *, apply_relu):
    acc = jnp.dot(x_ref[...], w_ref[...], preferred_element_type=jnp.float32)
    acc = acc + b_ref[...]                 # (1, Np) broadcasts over rows, f32
    if apply_relu:
        acc = jnp.maximum(acc, 0.0)
    o_ref[...] = acc.astype(o_ref.dtype)


def pallas_matmul_bias_act(x, w, b, *, relu, out_dtype, tm):
    """y = relu?(x @ w + b).  x:(M,K) bf16, w:(K,Np) bf16, b:(1,Np) f32, Np%128==0."""
    M, K = x.shape
    K2, Np = w.shape
    assert K == K2 and Np % LANE == 0 and b.shape == (1, Np)
    grid = pl.cdiv(M, tm)          # edge block is masked; no explicit M padding
    return pl.pallas_call(
        functools.partial(_matmul_bias_act_kernel, apply_relu=relu),
        out_shape=jax.ShapeDtypeStruct((M, Np), out_dtype),
        grid=(grid,),
        in_specs=[
            pl.BlockSpec((tm, K), lambda i: (i, 0)),
            pl.BlockSpec((K, Np), lambda i: (0, 0)),
            pl.BlockSpec((1, Np), lambda i: (0, 0)),
        ],
        out_specs=pl.BlockSpec((tm, Np), lambda i: (i, 0)),
        compiler_params=pltpu.CompilerParams(
            dimension_semantics=("parallel",)),
    )(x, w, b)


# ----------------------------------------------------------------------------
# Kernel 2: the whole linear stack (l1..l4 with ReLU in between) fused into a
# single pallas_call; the tiny intermediates stay on-chip.
# ----------------------------------------------------------------------------
def _linear_stack_kernel(x_ref, w1_ref, w2_ref, w3_ref, w4_ref,
                         b1_ref, b2_ref, b3_ref, b4_ref, o_ref):
    h = jnp.dot(x_ref[...], w1_ref[...], preferred_element_type=jnp.float32)
    h = jnp.maximum(h + b1_ref[...], 0.0).astype(jnp.bfloat16)
    h = jnp.dot(h, w2_ref[...], preferred_element_type=jnp.float32)
    h = jnp.maximum(h + b2_ref[...], 0.0).astype(jnp.bfloat16)
    h = jnp.dot(h, w3_ref[...], preferred_element_type=jnp.float32)
    h = jnp.maximum(h + b3_ref[...], 0.0).astype(jnp.bfloat16)
    h = jnp.dot(h, w4_ref[...], preferred_element_type=jnp.float32)
    o_ref[...] = h + b4_ref[...]           # f32 output (no ReLU after l4)


def pallas_linear_stack(x, ws, bs):
    """x:(Mp, 5808) bf16; ws/bs: 4 lane-padded weights (K,128) bf16 / biases (1,128) f32."""
    Mp, _ = x.shape
    out_n = ws[3].shape[1]

    def full(a):
        return pl.BlockSpec(a.shape, lambda i: (0,) * a.ndim)

    return pl.pallas_call(
        _linear_stack_kernel,
        out_shape=jax.ShapeDtypeStruct((Mp, out_n), jnp.float32),
        grid=(1,),
        in_specs=[full(x)] + [full(w) for w in ws] + [full(b) for b in bs],
        out_specs=pl.BlockSpec((Mp, out_n), lambda i: (0, 0)),
        compiler_params=pltpu.CompilerParams(
            dimension_semantics=("arbitrary",)),
    )(x, *ws, *bs)


# ----------------------------------------------------------------------------
# Conv2d (3x3, stride 2, valid) = im2col glue + the Pallas matmul kernel.
# TODO(synk): the stride-2 window gather (im2col) itself stays as XLA-side
# static strided slices + concat; an in-kernel 9-dot accumulation needs strided
# VMEM reads that are not expressed here.
# ----------------------------------------------------------------------------
def pallas_conv2d(x_nhwc, w_mat, b_row, cout, *, relu, stride=2, ksize=3):
    """x_nhwc:(B,H,W,Cin) bf16; w_mat:(Kp,128) bf16; b_row:(1,128) f32."""
    B, H, W, Cin = x_nhwc.shape
    Ho = (H - ksize) // stride + 1
    Wo = (W - ksize) // stride + 1

    patches = []
    for kh in range(ksize):
        for kw in range(ksize):
            patches.append(
                x_nhwc[:,
                       kh:kh + stride * (Ho - 1) + 1:stride,
                       kw:kw + stride * (Wo - 1) + 1:stride,
                       :])
    k_raw = ksize * ksize * Cin
    k_pad = w_mat.shape[0]                 # bf16-sublane aligned (32/112/224)
    if k_pad > k_raw:                      # fold the K pad into the same concat
        patches.append(jnp.zeros((B, Ho, Wo, k_pad - k_raw), x_nhwc.dtype))
    p = jnp.concatenate(patches, axis=-1).reshape(B * Ho * Wo, k_pad)

    M = B * Ho * Wo
    # Big tiles (per-step overhead dominates tiny ones) but keep >=2 grid steps
    # so the parallel axis can use both TensorCores on v7x.
    tm = min(512, _round_up(pl.cdiv(M, 2), 8))
    y = pallas_matmul_bias_act(p, w_mat, b_row, relu=relu,
                               out_dtype=jnp.bfloat16, tm=tm)
    return y[:, :cout].reshape(B, Ho, Wo, cout)


# ----------------------------------------------------------------------------
# Parameters: synthetic weights generated in *PyTorch* layouts, then converted
# once into the kernel layouts (bf16, lane/sublane padding, flatten-permuted l1).
# ----------------------------------------------------------------------------
def init_torch_layout_params(key):
    def nrm(k, shape, scale):
        return jax.random.normal(k, shape, dtype=jnp.float32) * scale

    ks = jax.random.split(key, 14)
    return {
        "c1_w": nrm(ks[0], (12, 3, 3, 3), 0.1),   "c1_b": nrm(ks[1], (12,), 0.1),
        "c2_w": nrm(ks[2], (24, 12, 3, 3), 0.05), "c2_b": nrm(ks[3], (24,), 0.05),
        "c3_w": nrm(ks[4], (48, 24, 3, 3), 0.05), "c3_b": nrm(ks[5], (48,), 0.05),
        "l1_w": nrm(ks[6], (100, 5808), 0.01),    "l1_b": nrm(ks[7], (100,), 0.01),
        "l2_w": nrm(ks[8], (50, 100), 0.05),      "l2_b": nrm(ks[9], (50,), 0.05),
        "l3_w": nrm(ks[10], (10, 50), 0.1),       "l3_b": nrm(ks[11], (10,), 0.1),
        "l4_w": nrm(ks[12], (3, 10), 0.1),        "l4_b": nrm(ks[13], (3,), 0.1),
    }


def prepare_params(pt):
    def conv_w(w):                         # (Cout,Cin,Kh,Kw) -> (Kp, 128) bf16
        cout, cin, kh, kw = w.shape
        m = jnp.transpose(w, (2, 3, 1, 0)).reshape(kh * kw * cin, cout)
        kp = _round_up(kh * kw * cin, 16)
        m = jnp.pad(m, ((0, kp - kh * kw * cin), (0, LANE - cout)))
        return m.astype(jnp.bfloat16)

    def bias(b):                           # (n,) -> (1, 128) f32
        return jnp.pad(b, (0, LANE - b.shape[0])).reshape(1, LANE)

    def lin_w(w, kp):                      # (out,in) -> (kp, 128) bf16
        o, i = w.shape
        return jnp.pad(w.T, ((0, kp - i), (0, LANE - o))).astype(jnp.bfloat16)

    # Fold the NCHW Flatten into l1_w: PyTorch row order is (c, h, w); the conv
    # stack hands the activation over flattened in NHWC (h, w, c) order.
    l1 = pt["l1_w"].T.reshape(48, 11, 11, 100)                # (c,h,w,out)
    l1 = jnp.transpose(l1, (1, 2, 0, 3)).reshape(5808, 100)   # (h,w,c,out)
    l1 = jnp.pad(l1, ((0, 0), (0, LANE - 100))).astype(jnp.bfloat16)

    return {
        "c1_w": conv_w(pt["c1_w"]), "c1_b": bias(pt["c1_b"]),
        "c2_w": conv_w(pt["c2_w"]), "c2_b": bias(pt["c2_b"]),
        "c3_w": conv_w(pt["c3_w"]), "c3_b": bias(pt["c3_b"]),
        "l1_w": l1,                      "l1_b": bias(pt["l1_b"]),
        "l2_w": lin_w(pt["l2_w"], LANE), "l2_b": bias(pt["l2_b"]),
        "l3_w": lin_w(pt["l3_w"], LANE), "l3_b": bias(pt["l3_b"]),
        "l4_w": lin_w(pt["l4_w"], LANE), "l4_b": bias(pt["l4_b"]),
    }


# ----------------------------------------------------------------------------
# Full forward pass, mirroring myNetwork.forward.
# ----------------------------------------------------------------------------
@jax.jit
def my_network_forward(x_nchw, params):
    B = x_nchw.shape[0]
    # NCHW -> NHWC, bf16 activations for the MXU (accumulation stays f32 in-kernel)
    x = jnp.transpose(x_nchw, (0, 2, 3, 1)).astype(jnp.bfloat16)   # (B,96,96,3)

    x = pallas_conv2d(x, params["c1_w"], params["c1_b"], 12, relu=True)   # (B,47,47,12)
    x = pallas_conv2d(x, params["c2_w"], params["c2_b"], 24, relu=True)   # (B,23,23,24)
    x = pallas_conv2d(x, params["c3_w"], params["c3_b"], 48, relu=False)  # (B,11,11,48)

    # Natural NHWC flatten; the NCHW-Flatten reorder lives in l1_w's rows.
    xf = x.reshape(B, -1)                                   # (B, 5808) bf16
    mp = _round_up(max(B, 8), 8)
    xf = jnp.pad(xf, ((0, mp - B), (0, 0)))

    ws = (params["l1_w"], params["l2_w"], params["l3_w"], params["l4_w"])
    bs = (params["l1_b"], params["l2_b"], params["l3_b"], params["l4_b"])
    y = pallas_linear_stack(xf, ws, bs)                     # (mp, 128) f32
    return y[:B, :3]


if __name__ == "__main__":
    key = jax.random.PRNGKey(0)
    k_in, k_par = jax.random.split(key)

    # 5808 = 48*11*11 flat features requires a 3x96x96 input (96 -> 47 -> 23 -> 11).
    x = jax.random.normal(k_in, (2, 3, 96, 96), dtype=jnp.float32)
    params = prepare_params(init_torch_layout_params(k_par))

    out = my_network_forward(x, params)
    out = jax.block_until_ready(out)
    assert out.shape == (2, 3), out.shape
    assert out.dtype == jnp.float32
    print("KERNEL_OK")
</pallas_src>

<mosaic_0001>
module attributes {stable_mosaic.version = 11 : i64} {
  func.func @_matmul_bias_act_kernel(%arg0: i32, %arg1: memref<512x32xbf16, #tpu.memory_space<vmem>>, %arg2: memref<32x128xbf16, #tpu.memory_space<vmem>>, %arg3: memref<1x128xf32, #tpu.memory_space<vmem>>, %arg4: memref<512x128xbf16, #tpu.memory_space<vmem>>) attributes {dimension_semantics = [#tpu.dimension_semantics<parallel>], iteration_bounds = array<i64: 9>, scalar_prefetch = 0 : i64, scratch_operands = 0 : i64, tpu.core_type = #tpu.core_type<tc>, window_params = [{transform_indices = @transform_0, window_bounds = array<i64: 512, 32>}, {pipeline_mode = #tpu.pipeline_mode<synchronous>, transform_indices = @transform_1, window_bounds = array<i64: 32, 128>}, {pipeline_mode = #tpu.pipeline_mode<synchronous>, transform_indices = @transform_2, window_bounds = array<i64: 1, 128>}, {transform_indices = @transform_3, window_bounds = array<i64: 512, 128>}]} {
    %c0 = arith.constant 0 : index
    %c0_0 = arith.constant 0 : index
    %0 = vector.load %arg1[%c0, %c0_0] : memref<512x32xbf16, #tpu.memory_space<vmem>>, vector<512x32xbf16>
    %c0_1 = arith.constant 0 : index
    %c0_2 = arith.constant 0 : index
    %1 = vector.load %arg2[%c0_1, %c0_2] : memref<32x128xbf16, #tpu.memory_space<vmem>>, vector<32x128xbf16>
    %cst = arith.constant dense<0.000000e+00> : vector<512x128xf32>
    %2 = tpu.matmul %0, %1, %cst {dimension_numbers = #tpu.dot_dimension_numbers<[1], [0], [0], [1], [0, 0, 1, 1], [], []>} : vector<512x32xbf16>, vector<32x128xbf16>, vector<512x128xf32> -> vector<512x128xf32>
    %c0_3 = arith.constant 0 : index
    %c0_4 = arith.constant 0 : index
    %3 = vector.load %arg3[%c0_3, %c0_4] : memref<1x128xf32, #tpu.memory_space<vmem>>, vector<1x128xf32>
    %4 = vector.broadcast %3 : vector<1x128xf32> to vector<512x128xf32>
    %5 = arith.addf %2, %4 : vector<512x128xf32>
    %cst_5 = arith.constant 0.000000e+00 : f32
    %6 = vector.broadcast %cst_5 : f32 to vector<512x128xf32>
    %7 = arith.maximumf %5, %6 : vector<512x128xf32>
    %8 = arith.truncf %7 : vector<512x128xf32> to vector<512x128xbf16>
    %c0_6 = arith.constant 0 : index
    %c0_7 = arith.constant 0 : index
    %9 = vector.load %arg4[%c0_6, %c0_7] : memref<512x128xbf16, #tpu.memory_space<vmem>>, vector<512x128xbf16>
    tpu.vector_store %arg4[%c0_6, %c0_7], %8 {strides = array<i32>} : memref<512x128xbf16, #tpu.memory_space<vmem>>, vector<512x128xbf16>,
    return
  }
  func.func @transform_0(%arg0: i32) -> (i32, i32) {
    %c0_i32 = arith.constant 0 : i32
    %c0_i32_0 = arith.constant 0 : i32
    return %arg0, %c0_i32 : i32, i32
  }
  func.func @transform_1(%arg0: i32) -> (i32, i32) {
    %c0_i32 = arith.constant 0 : i32
    %c0_i32_0 = arith.constant 0 : i32
    %c0_i32_1 = arith.constant 0 : i32
    return %c0_i32, %c0_i32_0 : i32, i32
  }
  func.func @transform_2(%arg0: i32) -> (i32, i32) {
    %c0_i32 = arith.constant 0 : i32
    %c0_i32_0 = arith.constant 0 : i32
    %c0_i32_1 = arith.constant 0 : i32
    return %c0_i32, %c0_i32_0 : i32, i32
  }
  func.func @transform_3(%arg0: i32) -> (i32, i32) {
    %c0_i32 = arith.constant 0 : i32
    %c0_i32_0 = arith.constant 0 : i32
    return %arg0, %c0_i32 : i32, i32
  }
}

module attributes {stable_mosaic.version = 11 : i64} {
  func.func @_matmul_bias_act_kernel(%arg0: i32, %arg1: memref<512x112xbf16, #tpu.memory_space<vmem>>, %arg2: memref<112x128xbf16, #tpu.memory_space<vmem>>, %arg3: memref<1x128xf32, #tpu.memory_space<vmem>>, %arg4: memref<512x128xbf16, #tpu.memory_space<vmem>>) attributes {dimension_semantics = [#tpu.dimension_semantics<parallel>], iteration_bounds = array<i64: 3>, scalar_prefetch = 0 : i64, scratch_operands = 0 : i64, tpu.core_type = #tpu.core_type<tc>, window_params = [{transform_indices = @transform_0, window_bounds = array<i64: 512, 112>}, {pipeline_mode = #tpu.pipeline_mode<synchronous>, transform_indices = @transform_1, window_bounds = array<i64: 112, 128>}, {pipeline_mode = #tpu.pipeline_mode<synchronous>, transform_indices = @transform_2, window_bounds = array<i64: 1, 128>}, {transform_indices = @transform_3, window_bounds = array<i64: 512, 128>}]} {
    %c0 = arith.constant 0 : index
    %c0_0 = arith.constant 0 : index
    %0 = vector.load %arg1[%c0, %c0_0] : memref<512x112xbf16, #tpu.memory_space<vmem>>, vector<512x112xbf16>
    %c0_1 = arith.constant 0 : index
    %c0_2 = arith.constant 0 : index
    %1 = vector.load %arg2[%c0_1, %c0_2] : memref<112x128xbf16, #tpu.memory_space<vmem>>, vector<112x128xbf16>
    %cst = arith.constant dense<0.000000e+00> : vector<512x128xf32>
    %2 = tpu.matmul %0, %1, %cst {dimension_numbers = #tpu.dot_dimension_numbers<[1], [0], [0], [1], [0, 0, 1, 1], [], []>} : vector<512x112xbf16>, vector<112x128xbf16>, vector<512x128xf32> -> vector<512x128xf32>
    %c0_3 = arith.constant 0 : index
    %c0_4 = arith.constant 0 : index
    %3 = vector.load %arg3[%c0_3, %c0_4] : memref<1x128xf32, #tpu.memory_space<vmem>>, vector<1x128xf32>
    %4 = vector.broadcast %3 : vector<1x128xf32> to vector<512x128xf32>
    %5 = arith.addf %2, %4 : vector<512x128xf32>
    %cst_5 = arith.constant 0.000000e+00 : f32
    %6 = vector.broadcast %cst_5 : f32 to vector<512x128xf32>
    %7 = arith.maximumf %5, %6 : vector<512x128xf32>
    %8 = arith.truncf %7 : vector<512x128xf32> to vector<512x128xbf16>
    %c0_6 = arith.constant 0 : index
    %c0_7 = arith.constant 0 : index
    %9 = vector.load %arg4[%c0_6, %c0_7] : memref<512x128xbf16, #tpu.memory_space<vmem>>, vector<512x128xbf16>
    tpu.vector_store %arg4[%c0_6, %c0_7], %8 {strides = array<i32>} : memref<512x128xbf16, #tpu.memory_space<vmem>>, vector<512x128xbf16>,
    return
  }
  func.func @transform_0(%arg0: i32) -> (i32, i32) {
    %c0_i32 = arith.constant 0 : i32
    %c0_i32_0 = arith.constant 0 : i32
    return %arg0, %c0_i32 : i32, i32
  }
  func.func @transform_1(%arg0: i32) -> (i32, i32) {
    %c0_i32 = arith.constant 0 : i32
    %c0_i32_0 = arith.constant 0 : i32
    %c0_i32_1 = arith.constant 0 : i32
    return %c0_i32, %c0_i32_0 : i32, i32
  }
  func.func @transform_2(%arg0: i32) -> (i32, i32) {
    %c0_i32 = arith.constant 0 : i32
    %c0_i32_0 = arith.constant 0 : i32
    %c0_i32_1 = arith.constant 0 : i32
    return %c0_i32, %c0_i32_0 : i32, i32
  }
  func.func @transform_3(%arg0: i32) -> (i32, i32) {
    %c0_i32 = arith.constant 0 : i32
    %c0_i32_0 = arith.constant 0 : i32
    return %arg0, %c0_i32 : i32, i32
  }
}

module attributes {stable_mosaic.version = 11 : i64} {
  func.func @_matmul_bias_act_kernel(%arg0: i32, %arg1: memref<128x224xbf16, #tpu.memory_space<vmem>>, %arg2: memref<224x128xbf16, #tpu.memory_space<vmem>>, %arg3: memref<1x128xf32, #tpu.memory_space<vmem>>, %arg4: memref<128x128xbf16, #tpu.memory_space<vmem>>) attributes {dimension_semantics = [#tpu.dimension_semantics<parallel>], iteration_bounds = array<i64: 2>, scalar_prefetch = 0 : i64, scratch_operands = 0 : i64, tpu.core_type = #tpu.core_type<tc>, window_params = [{transform_indices = @transform_0, window_bounds = array<i64: 128, 224>}, {pipeline_mode = #tpu.pipeline_mode<synchronous>, transform_indices = @transform_1, window_bounds = array<i64: 224, 128>}, {pipeline_mode = #tpu.pipeline_mode<synchronous>, transform_indices = @transform_2, window_bounds = array<i64: 1, 128>}, {transform_indices = @transform_3, window_bounds = array<i64: 128, 128>}]} {
    %c0 = arith.constant 0 : index
    %c0_0 = arith.constant 0 : index
    %0 = vector.load %arg1[%c0, %c0_0] : memref<128x224xbf16, #tpu.memory_space<vmem>>, vector<128x224xbf16>
    %c0_1 = arith.constant 0 : index
    %c0_2 = arith.constant 0 : index
    %1 = vector.load %arg2[%c0_1, %c0_2] : memref<224x128xbf16, #tpu.memory_space<vmem>>, vector<224x128xbf16>
    %cst = arith.constant dense<0.000000e+00> : vector<128x128xf32>
    %2 = tpu.matmul %0, %1, %cst {dimension_numbers = #tpu.dot_dimension_numbers<[1], [0], [0], [1], [0, 0, 1, 1], [], []>} : vector<128x224xbf16>, vector<224x128xbf16>, vector<128x128xf32> -> vector<128x128xf32>
    %c0_3 = arith.constant 0 : index
    %c0_4 = arith.constant 0 : index
    %3 = vector.load %arg3[%c0_3, %c0_4] : memref<1x128xf32, #tpu.memory_space<vmem>>, vector<1x128xf32>
    %4 = vector.broadcast %3 : vector<1x128xf32> to vector<128x128xf32>
    %5 = arith.addf %2, %4 : vector<128x128xf32>
    %6 = arith.truncf %5 : vector<128x128xf32> to vector<128x128xbf16>
    %c0_5 = arith.constant 0 : index
    %c0_6 = arith.constant 0 : index
    %7 = vector.load %arg4[%c0_5, %c0_6] : memref<128x128xbf16, #tpu.memory_space<vmem>>, vector<128x128xbf16>
    tpu.vector_store %arg4[%c0_5, %c0_6], %6 {strides = array<i32>} : memref<128x128xbf16, #tpu.memory_space<vmem>>, vector<128x128xbf16>,
    return
  }
  func.func @transform_0(%arg0: i32) -> (i32, i32) {
    %c0_i32 = arith.constant 0 : i32
    %c0_i32_0 = arith.constant 0 : i32
    return %arg0, %c0_i32 : i32, i32
  }
  func.func @transform_1(%arg0: i32) -> (i32, i32) {
    %c0_i32 = arith.constant 0 : i32
    %c0_i32_0 = arith.constant 0 : i32
    %c0_i32_1 = arith.constant 0 : i32
    return %c0_i32, %c0_i32_0 : i32, i32
  }
  func.func @transform_2(%arg0: i32) -> (i32, i32) {
    %c0_i32 = arith.constant 0 : i32
    %c0_i32_0 = arith.constant 0 : i32
    %c0_i32_1 = arith.constant 0 : i32
    return %c0_i32, %c0_i32_0 : i32, i32
  }
  func.func @transform_3(%arg0: i32) -> (i32, i32) {
    %c0_i32 = arith.constant 0 : i32
    %c0_i32_0 = arith.constant 0 : i32
    return %arg0, %c0_i32 : i32, i32
  }
}

module attributes {stable_mosaic.version = 11 : i64} {
  func.func @_linear_stack_kernel(%arg0: i32, %arg1: memref<8x5808xbf16, #tpu.memory_space<vmem>>, %arg2: memref<5808x128xbf16, #tpu.memory_space<vmem>>, %arg3: memref<128x128xbf16, #tpu.memory_space<vmem>>, %arg4: memref<128x128xbf16, #tpu.memory_space<vmem>>, %arg5: memref<128x128xbf16, #tpu.memory_space<vmem>>, %arg6: memref<1x128xf32, #tpu.memory_space<vmem>>, %arg7: memref<1x128xf32, #tpu.memory_space<vmem>>, %arg8: memref<1x128xf32, #tpu.memory_space<vmem>>, %arg9: memref<1x128xf32, #tpu.memory_space<vmem>>, %arg10: memref<8x128xf32, #tpu.memory_space<vmem>>) attributes {dimension_semantics = [#tpu.dimension_semantics<arbitrary>], iteration_bounds = array<i64: 1>, scalar_prefetch = 0 : i64, scratch_operands = 0 : i64, tpu.core_type = #tpu.core_type<tc>, window_params = [{pipeline_mode = #tpu.pipeline_mode<synchronous>, transform_indices = @transform_0, window_bounds = array<i64: 8, 5808>}, {pipeline_mode = #tpu.pipeline_mode<synchronous>, transform_indices = @transform_1, window_bounds = array<i64: 5808, 128>}, {pipeline_mode = #tpu.pipeline_mode<synchronous>, transform_indices = @transform_2, window_bounds = array<i64: 128, 128>}, {pipeline_mode = #tpu.pipeline_mode<synchronous>, transform_indices = @transform_3, window_bounds = array<i64: 128, 128>}, {pipeline_mode = #tpu.pipeline_mode<synchronous>, transform_indices = @transform_4, window_bounds = array<i64: 128, 128>}, {pipeline_mode = #tpu.pipeline_mode<synchronous>, transform_indices = @transform_5, window_bounds = array<i64: 1, 128>}, {pipeline_mode = #tpu.pipeline_mode<synchronous>, transform_indices = @transform_6, window_bounds = array<i64: 1, 128>}, {pipeline_mode = #tpu.pipeline_mode<synchronous>, transform_indices = @transform_7, window_bounds = array<i64: 1, 128>}, {pipeline_mode = #tpu.pipeline_mode<synchronous>, transform_indices = @transform_8, window_bounds = array<i64: 1, 128>}, {pipeline_mode = #tpu.pipeline_mode<synchronous>, transform_indices = @transform_9, window_bounds = array<i64: 8, 128>}]} {
    %c0 = arith.constant 0 : index
    %c0_0 = arith.constant 0 : index
    %0 = vector.load %arg1[%c0, %c0_0] : memref<8x5808xbf16, #tpu.memory_space<vmem>>, vector<8x5808xbf16>
    %c0_1 = arith.constant 0 : index
    %c0_2 = arith.constant 0 : index
    %1 = vector.load %arg2[%c0_1, %c0_2] : memref<5808x128xbf16, #tpu.memory_space<vmem>>, vector<5808x128xbf16>
    %cst = arith.constant dense<0.000000e+00> : vector<8x128xf32>
    %2 = tpu.matmul %0, %1, %cst {dimension_numbers = #tpu.dot_dimension_numbers<[1], [0], [0], [1], [0, 0, 1, 1], [], []>} : vector<8x5808xbf16>, vector<5808x128xbf16>, vector<8x128xf32> -> vector<8x128xf32>
    %c0_3 = arith.constant 0 : index
    %c0_4 = arith.constant 0 : index
    %3 = vector.load %arg6[%c0_3, %c0_4] : memref<1x128xf32, #tpu.memory_space<vmem>>, vector<1x128xf32>
    %4 = vector.broadcast %3 : vector<1x128xf32> to vector<8x128xf32>
    %5 = arith.addf %2, %4 : vector<8x128xf32>
    %cst_5 = arith.constant 0.000000e+00 : f32
    %6 = vector.broadcast %cst_5 : f32 to vector<8x128xf32>
    %7 = arith.maximumf %5, %6 : vector<8x128xf32>
    %8 = arith.truncf %7 : vector<8x128xf32> to vector<8x128xbf16>
    %c0_6 = arith.constant 0 : index
    %c0_7 = arith.constant 0 : index
    %9 = vector.load %arg3[%c0_6, %c0_7] : memref<128x128xbf16, #tpu.memory_space<vmem>>, vector<128x128xbf16>
    %cst_8 = arith.constant dense<0.000000e+00> : vector<8x128xf32>
    %10 = tpu.matmul %8, %9, %cst_8 {dimension_numbers = #tpu.dot_dimension_numbers<[1], [0], [0], [1], [0, 0, 1, 1], [], []>} : vector<8x128xbf16>, vector<128x128xbf16>, vector<8x128xf32> -> vector<8x128xf32>
    %c0_9 = arith.constant 0 : index
    %c0_10 = arith.constant 0 : index
    %11 = vector.load %arg7[%c0_9, %c0_10] : memref<1x128xf32, #tpu.memory_space<vmem>>, vector<1x128xf32>
    %12 = vector.broadcast %11 : vector<1x128xf32> to vector<8x128xf32>
    %13 = arith.addf %10, %12 : vector<8x128xf32>
    %cst_11 = arith.constant 0.000000e+00 : f32
    %14 = vector.broadcast %cst_11 : f32 to vector<8x128xf32>
    %15 = arith.maximumf %13, %14 : vector<8x128xf32>
    %16 = arith.truncf %15 : vector<8x128xf32> to vector<8x128xbf16>
    %c0_12 = arith.constant 0 : index
    %c0_13 = arith.constant 0 : index
    %17 = vector.load %arg4[%c0_12, %c0_13] : memref<128x128xbf16, #tpu.memory_space<vmem>>, vector<128x128xbf16>
    %cst_14 = arith.constant dense<0.000000e+00> : vector<8x128xf32>
    %18 = tpu.matmul %16, %17, %cst_14 {dimension_numbers = #tpu.dot_dimension_numbers<[1], [0], [0], [1], [0, 0, 1, 1], [], []>} : vector<8x128xbf16>, vector<128x128xbf16>, vector<8x128xf32> -> vector<8x128xf32>
    %c0_15 = arith.constant 0 : index
    %c0_16 = arith.constant 0 : index
    %19 = vector.load %arg8[%c0_15, %c0_16] : memref<1x128xf32, #tpu.memory_space<vmem>>, vector<1x128xf32>
    %20 = vector.broadcast %19 : vector<1x128xf32> to vector<8x128xf32>
    %21 = arith.addf %18, %20 : vector<8x128xf32>
    %cst_17 = arith.constant 0.000000e+00 : f32
    %22 = vector.broadcast %cst_17 : f32 to vector<8x128xf32>
    %23 = arith.maximumf %21, %22 : vector<8x128xf32>
    %24 = arith.truncf %23 : vector<8x128xf32> to vector<8x128xbf16>
    %c0_18 = arith.constant 0 : index
    %c0_19 = arith.constant 0 : index
    %25 = vector.load %arg5[%c0_18, %c0_19] : memref<128x128xbf16, #tpu.memory_space<vmem>>, vector<128x128xbf16>
    %cst_20 = arith.constant dense<0.000000e+00> : vector<8x128xf32>
    %26 = tpu.matmul %24, %25, %cst_20 {dimension_numbers = #tpu.dot_dimension_numbers<[1], [0], [0], [1], [0, 0, 1, 1], [], []>} : vector<8x128xbf16>, vector<128x128xbf16>, vector<8x128xf32> -> vector<8x128xf32>
    %c0_21 = arith.constant 0 : index
    %c0_22 = arith.constant 0 : index
    %27 = vector.load %arg9[%c0_21, %c0_22] : memref<1x128xf32, #tpu.memory_space<vmem>>, vector<1x128xf32>
    %28 = vector.broadcast %27 : vector<1x128xf32> to vector<8x128xf32>
    %29 = arith.addf %26, %28 : vector<8x128xf32>
    %c0_23 = arith.constant 0 : index
    %c0_24 = arith.constant 0 : index
    %30 = vector.load %arg10[%c0_23, %c0_24] : memref<8x128xf32, #tpu.memory_space<vmem>>, vector<8x128xf32>
    tpu.vector_store %arg10[%c0_23, %c0_24], %29 {strides = array<i32>} : memref<8x128xf32, #tpu.memory_space<vmem>>, vector<8x128xf32>,
    return
  }
  func.func @transform_0(%arg0: i32) -> (i32, i32) {
    %c0_i32 = arith.constant 0 : i32
    %c0_i32_0 = arith.constant 0 : i32
    %c0_i32_1 = arith.constant 0 : i32
    return %c0_i32, %c0_i32_0 : i32, i32
  }
  func.func @transform_1(%arg0: i32) -> (i32, i32) {
    %c0_i32 = arith.constant 0 : i32
    %c0_i32_0 = arith.constant 0 : i32
    %c0_i32_1 = arith.constant 0 : i32
    return %c0_i32, %c0_i32_0 : i32, i32
  }
  func.func @transform_2(%arg0: i32) -> (i32, i32) {
    %c0_i32 = arith.constant 0 : i32
    %c0_i32_0 = arith.constant 0 : i32
    %c0_i32_1 = arith.constant 0 : i32
    return %c0_i32, %c0_i32_0 : i32, i32
  }
  func.func @transform_3(%arg0: i32) -> (i32, i32) {
    %c0_i32 = arith.constant 0 : i32
    %c0_i32_0 = arith.constant 0 : i32
    %c0_i32_1 = arith.constant 0 : i32
    return %c0_i32, %c0_i32_0 : i32, i32
  }
  func.func @transform_4(%arg0: i32) -> (i32, i32) {
    %c0_i32 = arith.constant 0 : i32
    %c0_i32_0 = arith.constant 0 : i32
    %c0_i32_1 = arith.constant 0 : i32
    return %c0_i32, %c0_i32_0 : i32, i32
  }
  func.func @transform_5(%arg0: i32) -> (i32, i32) {
    %c0_i32 = arith.constant 0 : i32
    %c0_i32_0 = arith.constant 0 : i32
    %c0_i32_1 = arith.constant 0 : i32
    return %c0_i32, %c0_i32_0 : i32, i32
  }
  func.func @transform_6(%arg0: i32) -> (i32, i32) {
    %c0_i32 = arith.constant 0 : i32
    %c0_i32_0 = arith.constant 0 : i32
    %c0_i32_1 = arith.constant 0 : i32
    return %c0_i32, %c0_i32_0 : i32, i32
  }
  func.func @transform_7(%arg0: i32) -> (i32, i32) {
    %c0_i32 = arith.constant 0 : i32
    %c0_i32_0 = arith.constant 0 : i32
    %c0_i32_1 = arith.constant 0 : i32
    return %c0_i32, %c0_i32_0 : i32, i32
  }
  func.func @transform_8(%arg0: i32) -> (i32, i32) {
    %c0_i32 = arith.constant 0 : i32
    %c0_i32_0 = arith.constant 0 : i32
    %c0_i32_1 = arith.constant 0 : i32
    return %c0_i32, %c0_i32_0 : i32, i32
  }
  func.func @transform_9(%arg0: i32) -> (i32, i32) {
    %c0_i32 = arith.constant 0 : i32
    %c0_i32_0 = arith.constant 0 : i32
    %c0_i32_1 = arith.constant 0 : i32
    return %c0_i32, %c0_i32_0 : i32, i32
  }
}

</mosaic_0001>

<llo_original>
// kernel: my_network_forward.4
$region0: #{my_network_forward.4}
  #allocation0 [shape = 'u32[]', space=smem, size = 0x4, offset = 0x4, fixed_abs, tag = 'smem constant byte address 0x4 - core index']
  #allocation1 [shape = 'u32[72,128]{1,0:T(1,128)}', space=vmem, size = 0x9000, scoped, tag = 'internal scratch']
  %s0 = inlined_call_operand.vmem [shape: bf16[4418,32], index: 0, kind: input, shape index: {}]
  %s1 = inlined_call_operand.vmem [shape: bf16[32,128], index: 1, kind: input, shape index: {}]
  %s2 = inlined_call_operand.vmem [shape: f32[1,128], index: 2, kind: input, shape index: {}]
  %s3 = inlined_call_operand.vmem [shape: bf16[4418,128], index: 3, kind: output, shape index: {}]
  %s4 = sld [smem:[#allocation0]]
  $region89: #{my_network_forward.4} parent=0
    _
  %s6 = ssub.s32 1, %s4
  %s7 = scalar_select 0, %s6, %s4
  $region1: #{my_network_forward.4} parent=0
    #allocation2 [shape = 'u8[262144]{0}', space=vmem, size = 0x40000, scoped, tag = 'output window, operand 0']
    loop: start=0, step=1, limit=11
    $region2: #{my_network_forward.4} parent=1 // loop_pre_header
      _
    $region3: #{my_network_forward.4} parent=1 // loop_header
      %s9 = sphi 0, %s13
      %p10 = scmp.ge.s32.totalorder %s9, 11
      %s19 = sphi 0, %s21
      %s22 = sphi 0, %s19
      %s23 = sphi 0, %s22
      %s39 = sphi 0, %s23
      %s43 = sphi 0, %s43
      %s45 = sphi 0, %s43
      %s46 = sphi 0, %s45
      %s60 = sphi 0, %s46
      %s64 = sphi 0, %s64
      %s66 = sphi 0, %s64
      %s67 = sphi 0, %s66
      %s81 = sphi 0, %s67
      %s87 = sphi 0, %s89
      %s90 = sphi 0, %s87
      %s91 = sphi 0, %s90
      %s107 = sphi 0, %s91
    $region4: #{my_network_forward.4} parent=1 // loop_header_branch
      %12 = sbr.rel (%p10) target = $region8
    $region5: #{my_network_forward.4} parent=1 // loop_body
      %s14 = ssub.s32 %s9, 1
      %s15 = ssub.s32 %s9, 2
      %s16 = sadd.s32 %s9, 1
      %s17 = ssub.s32 %s9, %s16
      %p18 = scmp.eq.s32.totalorder %s17, 0
      %s20 = sadd.s32 %s19, 1
      %s21 = scalar_select %p18, %s19, %s20
      %p24 = pneg %p18
      %p25 = scmp.eq.s32.totalorder %s9, 8
      %p26 = por %p24, %p25
      %p27 = scmp.ne.s32.totalorder %s19, %s22
      %p28 = scmp.eq.s32.totalorder %s9, 0
      %p29 = por %p27, %p28
      %p30 = scmp.ne.s32.totalorder %s19, %s22
      %p31 = scmp.eq.s32.totalorder %s14, 8
      %p32 = por %p30, %p31
      %p33 = scmp.ne.s32.totalorder %s22, %s23
      %p34 = scmp.eq.s32.totalorder %s14, 0
      %p35 = por %p33, %p34
      %p36 = scmp.ne.s32.totalorder %s22, %s23
      %p37 = scmp.eq.s32.totalorder %s15, 8
      %p38 = por %p36, %p37
      %p40 = scmp.ne.s32.totalorder %s23, %s39
      %p41 = scmp.eq.s32.totalorder %s15, 0
      %p42 = por %p40, %p41
      %s44 = sadd.s32 %s43, 1
      %p47 = scmp.eq.s32.totalorder %s9, 8
      %p48 = scmp.ne.s32.totalorder %s43, %s45
      %p49 = scmp.eq.s32.totalorder %s9, 0
      %p50 = por %p48, %p49
      %p51 = scmp.ne.s32.totalorder %s43, %s45
      %p52 = scmp.eq.s32.totalorder %s14, 8
      %p53 = por %p51, %p52
      %p54 = scmp.ne.s32.totalorder %s45, %s46
      %p55 = scmp.eq.s32.totalorder %s14, 0
      %p56 = por %p54, %p55
      %p57 = scmp.ne.s32.totalorder %s45, %s46
      %p58 = scmp.eq.s32.totalorder %s15, 8
      %p59 = por %p57, %p58
      %p61 = scmp.ne.s32.totalorder %s46, %s60
      %p62 = scmp.eq.s32.totalorder %s15, 0
      %p63 = por %p61, %p62
      %s65 = sadd.s32 %s64, 1
      %p68 = scmp.eq.s32.totalorder %s9, 8
      %p69 = scmp.ne.s32.totalorder %s64, %s66
      %p70 = scmp.eq.s32.totalorder %s9, 0
      %p71 = por %p69, %p70
      %p72 = scmp.ne.s32.totalorder %s64, %s66
      %p73 = scmp.eq.s32.totalorder %s14, 8
      %p74 = por %p72, %p73
      %p75 = scmp.ne.s32.totalorder %s66, %s67
      %p76 = scmp.eq.s32.totalorder %s14, 0
      %p77 = por %p75, %p76
      %p78 = scmp.ne.s32.totalorder %s66, %s67
      %p79 = scmp.eq.s32.totalorder %s15, 8
      %p80 = por %p78, %p79
      %p82 = scmp.ne.s32.totalorder %s67, %s81
      %p83 = scmp.eq.s32.totalorder %s15, 0
      %p84 = por %p82, %p83
      %s85 = ssub.s32 %s9, %s16
      %p86 = scmp.eq.s32.totalorder %s85, 0
      %s88 = sadd.s32 %s87, 1
      %s89 = scalar_select %p86, %s87, %s88
      %p92 = pneg %p86
      %p93 = scmp.eq.s32.totalorder %s9, 8
      %p94 = por %p92, %p93
      %p95 = scmp.ne.s32.totalorder %s87, %s90
      %p96 = scmp.eq.s32.totalorder %s9, 0
      %p97 = por %p95, %p96
      %p98 = scmp.ne.s32.totalorder %s87, %s90
      %p99 = scmp.eq.s32.totalorder %s14, 8
      %p100 = por %p98, %p99
      %p101 = scmp.ne.s32.totalorder %s90, %s91
      %p102 = scmp.eq.s32.totalorder %s14, 0
      %p103 = por %p101, %p102
      %p104 = scmp.ne.s32.totalorder %s90, %s91
      %p105 = scmp.eq.s32.totalorder %s15, 8
      %p106 = por %p104, %p105
      %p108 = scmp.ne.s32.totalorder %s91, %s107
      %p109 = scmp.eq.s32.totalorder %s15, 0
      %p110 = por %p108, %p109
      %p111 = scmp.le.s32.totalorder 1, %s9
      %p112 = scmp.lt.s32.totalorder %s9, 10
      %p113 = pnand %p111, %p112
      %p114 = pneg %p113
      // Predicated region
      $region9: #{my_network_forward.4} parent=5 // pred_check
        _
      $region10: #{my_network_forward.4} parent=5 // pred_check_branch
        %116 = sbr.rel (%p113) target = $region12
      $region11: #{my_network_forward.4} parent=5 // pred_region
        %s117 = ssub.s32 %s9, 1
        // Predicated region
        $region13: #{my_network_forward.4} parent=11 // pred_check
          %p118 = pneg %p56
        $region14: #{my_network_forward.4} parent=11 // pred_check_branch
          %120 = sbr.rel (%p118) target = $region16
        $region15: #{my_network_forward.4} parent=11 // pred_region
          _
        $region16: #{my_network_forward.4} parent=11 // pred_fallthru
          _
        // Predicated region
        $region17: #{my_network_forward.4} parent=11 // pred_check
          %p121 = pneg %p77
        $region18: #{my_network_forward.4} parent=11 // pred_check_branch
          %123 = sbr.rel (%p121) target = $region20
        $region19: #{my_network_forward.4} parent=11 // pred_region
          _
        $region20: #{my_network_forward.4} parent=11 // pred_fallthru
          _
      $region12: #{my_network_forward.4} parent=5 // pred_fallthru
        _
      %p124 = scmp.lt.s32.totalorder %s9, 9
      // Predicated region
      $region21: #{my_network_forward.4} parent=5 // pred_check
        %p125 = pneg %p124
      $region22: #{my_network_forward.4} parent=5 // pred_check_branch
        %127 = sbr.rel (%p125) target = $region24
      $region23: #{my_network_forward.4} parent=5 // pred_region
        // Predicated region
        $region25: #{my_network_forward.4} parent=23 // pred_check
          %p128 = pneg %p29
        $region26: #{my_network_forward.4} parent=23 // pred_check_branch
          %130 = sbr.rel (%p128) target = $region28
        $region27: #{my_network_forward.4} parent=23 // pred_region
          %s131 = smul.u32 64, %s9
          %s132 = ssub.s32 553, %s131
          %p133 = scmp.lt.s32.totalorder %s132, 64
          %s134 = scalar_select %p133, %s132, 64
          %s135 = smul.u32 4, %s134
          %p136 = scmp.lt.s32.totalorder %s131, 552
          %s137 = scalar_select %p136, %s131, 552
          %s138 = smul.addr %s137, 4
          %s139 = scalar_lea.vmem %s0, %s138
          %s140 = smul.u32 64, %s9
          %s141 = ssub.s32 553, %s140
          %p142 = scmp.lt.s32.totalorder %s141, 64
          %s143 = scalar_select %p142, %s141, 64
          %s144 = smul.u32 4, %s143
        $region28: #{my_network_forward.4} parent=23 // pred_fallthru
          _
      $region24: #{my_network_forward.4} parent=5 // pred_fallthru
        _
      %p145 = scmp.le.s32.totalorder 1, %s9
      %p146 = scmp.lt.s32.totalorder %s9, 10
      %p147 = pnand %p145, %p146
      %p148 = pneg %p147
      // Predicated region
      $region29: #{my_network_forward.4} parent=5 // pred_check
        _
      $region30: #{my_network_forward.4} parent=5 // pred_check_branch
        %150 = sbr.rel (%p147) target = $region32
      $region31: #{my_network_forward.4} parent=5 // pred_region
        %s151 = ssub.s32 %s9, 1
        %s152 = smul.u32 64, %s14
        %s153 = ssub.s32 553, %s152
        %p154 = scmp.lt.s32.totalorder %s153, 64
        %s155 = scalar_select %p154, %s153, 64
        %s156 = smul.u32 4, %s155
        %p157 = scmp.lt.s32.totalorder %s152, 552
        %s158 = scalar_select %p157, %s152, 552
        %s159 = smul.addr %s158, 4
        %s160 = scalar_lea.vmem %s0, %s159
        %p161 = pneg %p35
        %p162 = pneg %p32
        %p163 = pneg %p56
        %p164 = pneg %p53
        %p165 = pneg %p77
        %p166 = pneg %p74
        %p167 = pneg %p103
        %p168 = pneg %p100
        %s169 = sand.u32 %s90, 1
        %s170 = sand.u32 %s90, 1
        %s171 = smul.addr %s170, 256
        %s172 = scalar_lea.vmem [#allocation2], %s171
        %s173 = smul.u32 64, %s14
        %s174 = ssub.s32 553, %s173
        %p175 = scmp.lt.s32.totalorder %s174, 64
        %s176 = scalar_select %p175, %s174, 64
        %s177 = smul.u32 4, %s176
        %p178 = scmp.lt.s32.totalorder %s173, 552
        %s179 = scalar_select %p178, %s173, 552
        %s180 = smul.addr %s179, 4
        %s181 = scalar_lea.vmem %s0, %s180
        %s182 = smul.u32 64, %s14
        %s183 = ssub.s32 553, %s182
        %p184 = scmp.lt.s32.totalorder %s183, 64
        %s185 = scalar_select %p184, %s183, 64
        %s186 = smul.u32 4, %s185
        %s187 = smul.u32 64, %s14
        %s188 = ssub.s32 553, %s187
        %p189 = scmp.lt.s32.totalorder %s188, 64
        %s190 = scalar_select %p189, %s188, 64
        %s191 = smul.u32 4, %s190
        %v193 = vld [vmem:[%s181] sm:$0xf]
        %v194 = vld [vmem:[%s181 + $0x4] sm:$0xf]
        %v195 = vld [vmem:[%s181 + $0x8] sm:$0xf]
        %v196 = vld [vmem:[%s181 + $0xc] sm:$0xf]
        %v197 = vld [vmem:[%s181 + $0x10] sm:$0xf]
        %v198 = vld [vmem:[%s181 + $0x14] sm:$0xf]
        %v199 = vld [vmem:[%s181 + $0x18] sm:$0xf]
        %v200 = vld [vmem:[%s181 + $0x1c] sm:$0xf]
        %v201 = vld [vmem:[%s181 + $0x20] sm:$0xf]
        %v202 = vld [vmem:[%s181 + $0x24] sm:$0xf]
        %v203 = vld [vmem:[%s181 + $0x28] sm:$0xf]
        %v204 = vld [vmem:[%s181 + $0x2c] sm:$0xf]
        %v205 = vld [vmem:[%s181 + $0x30] sm:$0xf]
        %v206 = vld [vmem:[%s181 + $0x34] sm:$0xf]
        %v207 = vld [vmem:[%s181 + $0x38] sm:$0xf]
        %v208 = vld [vmem:[%s181 + $0x3c] sm:$0xf]
        %v209 = vld [vmem:[%s181 + $0x40] sm:$0xf]
        %v210 = vld [vmem:[%s181 + $0x44] sm:$0xf]
        %v211 = vld [vmem:[%s181 + $0x48] sm:$0xf]
        %v212 = vld [vmem:[%s181 + $0x4c] sm:$0xf]
        %v213 = vld [vmem:[%s181 + $0x50] sm:$0xf]
        %v214 = vld [vmem:[%s181 + $0x54] sm:$0xf]
        %v215 = vld [vmem:[%s181 + $0x58] sm:$0xf]
        %v216 = vld [vmem:[%s181 + $0x5c] sm:$0xf]
        %v217 = vld [vmem:[%s181 + $0x60] sm:$0xf]
        %v218 = vld [vmem:[%s181 + $0x64] sm:$0xf]
        %v219 = vld [vmem:[%s181 + $0x68] sm:$0xf]
        %v220 = vld [vmem:[%s181 + $0x6c] sm:$0xf]
        %v221 = vld [vmem:[%s181 + $0x70] sm:$0xf]
        %v222 = vld [vmem:[%s181 + $0x74] sm:$0xf]
        %v223 = vld [vmem:[%s181 + $0x78] sm:$0xf]
        %v224 = vld [vmem:[%s181 + $0x7c] sm:$0xf]
        %v225 = vld [vmem:[%s181 + $0x80] sm:$0xf]
        %v226 = vld [vmem:[%s181 + $0x84] sm:$0xf]
        %v227 = vld [vmem:[%s181 + $0x88] sm:$0xf]
        %v228 = vld [vmem:[%s181 + $0x8c] sm:$0xf]
        %v229 = vld [vmem:[%s181 + $0x90] sm:$0xf]
        %v230 = vld [vmem:[%s181 + $0x94] sm:$0xf]
        %v231 = vld [vmem:[%s181 + $0x98] sm:$0xf]
        %v232 = vld [vmem:[%s181 + $0x9c] sm:$0xf]
        %v233 = vld [vmem:[%s181 + $0xa0] sm:$0xf]
        %v234 = vld [vmem:[%s181 + $0xa4] sm:$0xf]
        %v235 = vld [vmem:[%s181 + $0xa8] sm:$0xf]
        %v236 = vld [vmem:[%s181 + $0xac] sm:$0xf]
        %v237 = vld [vmem:[%s181 + $0xb0] sm:$0xf]
        %v238 = vld [vmem:[%s181 + $0xb4] sm:$0xf]
        %v239 = vld [vmem:[%s181 + $0xb8] sm:$0xf]
        %v240 = vld [vmem:[%s181 + $0xbc] sm:$0xf]
        %v241 = vld [vmem:[%s181 + $0xc0] sm:$0xf]
        %v242 = vld [vmem:[%s181 + $0xc4] sm:$0xf]
        %v243 = vld [vmem:[%s181 + $0xc8] sm:$0xf]
        %v244 = vld [vmem:[%s181 + $0xcc] sm:$0xf]
        %v245 = vld [vmem:[%s181 + $0xd0] sm:$0xf]
        %v246 = vld [vmem:[%s181 + $0xd4] sm:$0xf]
        %v247 = vld [vmem:[%s181 + $0xd8] sm:$0xf]
        %v248 = vld [vmem:[%s181 + $0xdc] sm:$0xf]
        %v249 = vld [vmem:[%s181 + $0xe0] sm:$0xf]
        %v250 = vld [vmem:[%s181 + $0xe4] sm:$0xf]
        %v251 = vld [vmem:[%s181 + $0xe8] sm:$0xf]
        %v252 = vld [vmem:[%s181 + $0xec] sm:$0xf]
        %v253 = vld [vmem:[%s181 + $0xf0] sm:$0xf]
        %v254 = vld [vmem:[%s181 + $0xf4] sm:$0xf]
        %v255 = vld [vmem:[%s181 + $0xf8] sm:$0xf]
        %v256 = vld [vmem:[%s181 + $0xfc] sm:$0xf]
        %v257 = vld [vmem:[%s1] sm:$0xf]
        %v258 = vld [vmem:[%s1 + $0x4] sm:$0xf]
        %v259 = vld [vmem:[%s1 + $0x8] sm:$0xf]
        %v260 = vld [vmem:[%s1 + $0xc] sm:$0xf]
        %v261 = vld [vmem:[%s2] sm:$0x1]
        %v263 = vperm.slane %v261, 0
        %v329 = vunpack.c.l.b16 %v193
        %v330 = vunpack.c.l.b16 %v194
        %v331 = vunpack.c.l.b16 %v195
        %v332 = vunpack.c.l.b16 %v196
        %v333 = vunpack.c.l.b16 %v197
        %v334 = vunpack.c.l.b16 %v198
        %v335 = vunpack.c.l.b16 %v199
        %v336 = vunpack.c.l.b16 %v200
        %v337 = vunpack.c.l.b16 %v201
        %v338 = vunpack.c.l.b16 %v202
        %v339 = vunpack.c.l.b16 %v203
        %v340 = vunpack.c.l.b16 %v204
        %v341 = vunpack.c.l.b16 %v205
        %v342 = vunpack.c.l.b16 %v206
        %v343 = vunpack.c.l.b16 %v207
        %v344 = vunpack.c.l.b16 %v208
        %v345 = vunpack.c.l.b16 %v209
        %v346 = vunpack.c.l.b16 %v210
        %v347 = vunpack.c.l.b16 %v211
        %v348 = vunpack.c.l.b16 %v212
        %v349 = vunpack.c.l.b16 %v213
        %v350 = vunpack.c.l.b16 %v214
        %v351 = vunpack.c.l.b16 %v215
        %v352 = vunpack.c.l.b16 %v216
        %v353 = vunpack.c.l.b16 %v217
        %v354 = vunpack.c.l.b16 %v218
        %v355 = vunpack.c.l.b16 %v219
        %v356 = vunpack.c.l.b16 %v220
        %v357 = vunpack.c.l.b16 %v221
        %v358 = vunpack.c.l.b16 %v222
        %v359 = vunpack.c.l.b16 %v223
        %v360 = vunpack.c.l.b16 %v224
        %v361 = vunpack.c.l.b16 %v225
        %v362 = vunpack.c.l.b16 %v226
        %v363 = vunpack.c.l.b16 %v227
        %v364 = vunpack.c.l.b16 %v228
        %v365 = vunpack.c.l.b16 %v229
        %v366 = vunpack.c.l.b16 %v230
        %v367 = vunpack.c.l.b16 %v231
        %v368 = vunpack.c.l.b16 %v232
        %v369 = vunpack.c.l.b16 %v233
        %v370 = vunpack.c.l.b16 %v234
        %v371 = vunpack.c.l.b16 %v235
        %v372 = vunpack.c.l.b16 %v236
        %v373 = vunpack.c.l.b16 %v237
        %v374 = vunpack.c.l.b16 %v238
        %v375 = vunpack.c.l.b16 %v239
        %v376 = vunpack.c.l.b16 %v240
        %v377 = vunpack.c.l.b16 %v241
        %v378 = vunpack.c.l.b16 %v242
        %v379 = vunpack.c.l.b16 %v243
        %v380 = vunpack.c.l.b16 %v244
        %v381 = vunpack.c.l.b16 %v245
        %v382 = vunpack.c.l.b16 %v246
        %v383 = vunpack.c.l.b16 %v247
        %v384 = vunpack.c.l.b16 %v248
        %v385 = vunpack.c.l.b16 %v249
        %v386 = vunpack.c.l.b16 %v250
        %v387 = vunpack.c.l.b16 %v251
        %v388 = vunpack.c.l.b16 %v252
        %v389 = vunpack.c.l.b16 %v253
        %v390 = vunpack.c.l.b16 %v254
        %v391 = vunpack.c.l.b16 %v255
        %v392 = vunpack.c.l.b16 %v256
        %v393 = vpack.c.b16 %v330, %v329
        %v394 = vpack.c.b16 %v332, %v331
        %v395 = vpack.c.b16 %v334, %v333
        %v396 = vpack.c.b16 %v336, %v335
        %v397 = vpack.c.b16 %v338, %v337
        %v398 = vpack.c.b16 %v340, %v339
        %v399 = vpack.c.b16 %v342, %v341
        %v400 = vpack.c.b16 %v344, %v343
        %v401 = vpack.c.b16 %v346, %v345
        %v402 = vpack.c.b16 %v348, %v347
        %v403 = vpack.c.b16 %v350, %v349
        %v404 = vpack.c.b16 %v352, %v351
        %v405 = vpack.c.b16 %v354, %v353
        %v406 = vpack.c.b16 %v356, %v355
        %v407 = vpack.c.b16 %v358, %v357
        %v408 = vpack.c.b16 %v360, %v359
        %v409 = vpack.c.b16 %v362, %v361
        %v410 = vpack.c.b16 %v364, %v363
        %v411 = vpack.c.b16 %v366, %v365
        %v412 = vpack.c.b16 %v368, %v367
        %v413 = vpack.c.b16 %v370, %v369
        %v414 = vpack.c.b16 %v372, %v371
        %v415 = vpack.c.b16 %v374, %v373
        %v416 = vpack.c.b16 %v376, %v375
        %v417 = vpack.c.b16 %v378, %v377
        %v418 = vpack.c.b16 %v380, %v379
        %v419 = vpack.c.b16 %v382, %v381
        %v420 = vpack.c.b16 %v384, %v383
        %v421 = vpack.c.b16 %v386, %v385
        %v422 = vpack.c.b16 %v388, %v387
        %v423 = vpack.c.b16 %v390, %v389
        %v424 = vpack.c.b16 %v392, %v391
        %v429 = vunpack.c.l.b16 %v257
        %v430 = vunpack.c.l.b16 %v258
        %v431 = vunpack.c.l.b16 %v259
        %v432 = vunpack.c.l.b16 %v260
        %v433 = vpack.c.b16 %v430, %v429
        %v434 = vpack.c.b16 %v432, %v431
        %vm437 = vcmask 261120
        %v439 = vsel %vm437, %v393, 0
        %v442 = vsel %vm437, %v394, 0
        %v445 = vsel %vm437, %v395, 0
        %v448 = vsel %vm437, %v396, 0
        %v451 = vsel %vm437, %v397, 0
        %v454 = vsel %vm437, %v398, 0
        %v457 = vsel %vm437, %v399, 0
        %v460 = vsel %vm437, %v400, 0
        %v463 = vsel %vm437, %v401, 0
        %v466 = vsel %vm437, %v402, 0
        %v469 = vsel %vm437, %v403, 0
        %v472 = vsel %vm437, %v404, 0
        %v475 = vsel %vm437, %v405, 0
        %v478 = vsel %vm437, %v406, 0
        %v481 = vsel %vm437, %v407, 0
        %v484 = vsel %vm437, %v408, 0
        %v487 = vsel %vm437, %v409, 0
        %v490 = vsel %vm437, %v410, 0
        %v493 = vsel %vm437, %v411, 0
        %v496 = vsel %vm437, %v412, 0
        %v499 = vsel %vm437, %v413, 0
        %v502 = vsel %vm437, %v414, 0
        %v505 = vsel %vm437, %v415, 0
        %v508 = vsel %vm437, %v416, 0
        %v511 = vsel %vm437, %v417, 0
        %v514 = vsel %vm437, %v418, 0
        %v517 = vsel %vm437, %v419, 0
        %v520 = vsel %vm437, %v420, 0
        %v523 = vsel %vm437, %v421, 0
        %v526 = vsel %vm437, %v422, 0
        %v529 = vsel %vm437, %v423, 0
        %v532 = vsel %vm437, %v424, 0
        %534 = vmatpush.bf16.msra.mxu0 0
        %535 = vmatpush.bf16.msra.mxu0 0
        %536 = vmatpush.bf16.msra.mxu0 0
        %537 = vmatpush.bf16.msra.mxu0 0
        %538 = vmatpush.bf16.msra.mxu0 0
        %539 = vmatpush.bf16.msra.mxu0 0
        %540 = vmatpush.bf16.msra.mxu0 %v434
        %541 = vmatpush.bf16.msra.mxu0 %v433
        %542 = vmatmul.bf16.gmra.mxu0 %v439
        %v543 = vpop.f32.mrf.mxu0
        %v544 = vadd.f32 %v263, %v543
        %v545 = vpop.f32.mrf.mxu0
        %v546 = vadd.f32 %v263, %v545
        %547 = vmatmul.bf16.gmra.mxu0 %v442
        %v548 = vpop.f32.mrf.mxu0
        %v549 = vadd.f32 %v263, %v548
        %v550 = vpop.f32.mrf.mxu0
        %v551 = vadd.f32 %v263, %v550
        %552 = vmatmul.bf16.gmra.mxu0 %v445
        %v553 = vpop.f32.mrf.mxu0
        %v554 = vadd.f32 %v263, %v553
        %v555 = vpop.f32.mrf.mxu0
        %v556 = vadd.f32 %v263, %v555
        %557 = vmatmul.bf16.gmra.mxu0 %v448
        %v558 = vpop.f32.mrf.mxu0
        %v559 = vadd.f32 %v263, %v558
        %v560 = vpop.f32.mrf.mxu0
        %v561 = vadd.f32 %v263, %v560
        %562 = vmatmul.bf16.gmra.mxu0 %v451
        %v563 = vpop.f32.mrf.mxu0
        %v564 = vadd.f32 %v263, %v563
        %v565 = vpop.f32.mrf.mxu0
        %v566 = vadd.f32 %v263, %v565
        %567 = vmatmul.bf16.gmra.mxu0 %v454
        %v568 = vpop.f32.mrf.mxu0
        %v569 = vadd.f32 %v263, %v568
        %v570 = vpop.f32.mrf.mxu0
        %v571 = vadd.f32 %v263, %v570
        %572 = vmatmul.bf16.gmra.mxu0 %v457
        %v573 = vpop.f32.mrf.mxu0
        %v574 = vadd.f32 %v263, %v573
        %v575 = vpop.f32.mrf.mxu0
        %v576 = vadd.f32 %v263, %v575
        %577 = vmatmul.bf16.gmra.mxu0 %v460
        %v578 = vpop.f32.mrf.mxu0
        %v579 = vadd.f32 %v263, %v578
        %v580 = vpop.f32.mrf.mxu0
        %v581 = vadd.f32 %v263, %v580
        %582 = vmatmul.bf16.gmra.mxu0 %v463
        %v583 = vpop.f32.mrf.mxu0
        %v584 = vadd.f32 %v263, %v583
        %v585 = vpop.f32.mrf.mxu0
        %v586 = vadd.f32 %v263, %v585
        %587 = vmatmul.bf16.gmra.mxu0 %v466
        %v588 = vpop.f32.mrf.mxu0
        %v589 = vadd.f32 %v263, %v588
        %v590 = vpop.f32.mrf.mxu0
        %v591 = vadd.f32 %v263, %v590
        %592 = vmatmul.bf16.gmra.mxu0 %v469
        %v593 = vpop.f32.mrf.mxu0
        %v594 = vadd.f32 %v263, %v593
        %v595 = vpop.f32.mrf.mxu0
        %v596 = vadd.f32 %v263, %v595
        %597 = vmatmul.bf16.gmra.mxu0 %v472
        %v598 = vpop.f32.mrf.mxu0
        %v599 = vadd.f32 %v263, %v598
        %v600 = vpop.f32.mrf.mxu0
        %v601 = vadd.f32 %v263, %v600
        %602 = vmatmul.bf16.gmra.mxu0 %v475
        %v603 = vpop.f32.mrf.mxu0
        %v604 = vadd.f32 %v263, %v603
        %v605 = vpop.f32.mrf.mxu0
        %v606 = vadd.f32 %v263, %v605
        %607 = vmatmul.bf16.gmra.mxu0 %v478
        %v608 = vpop.f32.mrf.mxu0
        %v609 = vadd.f32 %v263, %v608
        %v610 = vpop.f32.mrf.mxu0
        %v611 = vadd.f32 %v263, %v610
        %612 = vmatmul.bf16.gmra.mxu0 %v481
        %v613 = vpop.f32.mrf.mxu0
        %v614 = vadd.f32 %v263, %v613
        %v615 = vpop.f32.mrf.mxu0
        %v616 = vadd.f32 %v263, %v615
        %617 = vmatmul.bf16.gmra.mxu0 %v484
        %v618 = vpop.f32.mrf.mxu0
        %v619 = vadd.f32 %v263, %v618
        %v620 = vpop.f32.mrf.mxu0
        %v621 = vadd.f32 %v263, %v620
        %622 = vmatmul.bf16.gmra.mxu0 %v487
        %v623 = vpop.f32.mrf.mxu0
        %v624 = vadd.f32 %v263, %v623
        %v625 = vpop.f32.mrf.mxu0
        %v626 = vadd.f32 %v263, %v625
        %627 = vmatmul.bf16.gmra.mxu0 %v490
        %v628 = vpop.f32.mrf.mxu0
        %v629 = vadd.f32 %v263, %v628
        %v630 = vpop.f32.mrf.mxu0
        %v631 = vadd.f32 %v263, %v630
        %632 = vmatmul.bf16.gmra.mxu0 %v493
        %v633 = vpop.f32.mrf.mxu0
        %v634 = vadd.f32 %v263, %v633
        %v635 = vpop.f32.mrf.mxu0
        %v636 = vadd.f32 %v263, %v635
        %637 = vmatmul.bf16.gmra.mxu0 %v496
        %v638 = vpop.f32.mrf.mxu0
        %v639 = vadd.f32 %v263, %v638
        %v640 = vpop.f32.mrf.mxu0
        %v641 = vadd.f32 %v263, %v640
        %642 = vmatmul.bf16.gmra.mxu0 %v499
        %v643 = vpop.f32.mrf.mxu0
        %v644 = vadd.f32 %v263, %v643
        %v645 = vpop.f32.mrf.mxu0
        %v646 = vadd.f32 %v263, %v645
        %647 = vmatmul.bf16.gmra.mxu0 %v502
        %v648 = vpop.f32.mrf.mxu0
        %v649 = vadd.f32 %v263, %v648
        %v650 = vpop.f32.mrf.mxu0
        %v651 = vadd.f32 %v263, %v650
        %652 = vmatmul.bf16.gmra.mxu0 %v505
        %v653 = vpop.f32.mrf.mxu0
        %v654 = vadd.f32 %v263, %v653
        %v655 = vpop.f32.mrf.mxu0
        %v656 = vadd.f32 %v263, %v655
        %657 = vmatmul.bf16.gmra.mxu0 %v508
        %v658 = vpop.f32.mrf.mxu0
        %v659 = vadd.f32 %v263, %v658
        %v660 = vpop.f32.mrf.mxu0
        %v661 = vadd.f32 %v263, %v660
        %662 = vmatmul.bf16.gmra.mxu0 %v511
        %v663 = vpop.f32.mrf.mxu0
        %v664 = vadd.f32 %v263, %v663
        %v665 = vpop.f32.mrf.mxu0
        %v666 = vadd.f32 %v263, %v665
        %667 = vmatmul.bf16.gmra.mxu0 %v514
        %v668 = vpop.f32.mrf.mxu0
        %v669 = vadd.f32 %v263, %v668
        %v670 = vpop.f32.mrf.mxu0
        %v671 = vadd.f32 %v263, %v670
        %672 = vmatmul.bf16.gmra.mxu0 %v517
        %v673 = vpop.f32.mrf.mxu0
        %v674 = vadd.f32 %v263, %v673
        %v675 = vpop.f32.mrf.mxu0
        %v676 = vadd.f32 %v263, %v675
        %677 = vmatmul.bf16.gmra.mxu0 %v520
        %v678 = vpop.f32.mrf.mxu0
        %v679 = vadd.f32 %v263, %v678
        %v680 = vpop.f32.mrf.mxu0
        %v681 = vadd.f32 %v263, %v680
        %682 = vmatmul.bf16.gmra.mxu0 %v523
        %v683 = vpop.f32.mrf.mxu0
        %v684 = vadd.f32 %v263, %v683
        %v685 = vpop.f32.mrf.mxu0
        %v686 = vadd.f32 %v263, %v685
        %687 = vmatmul.bf16.gmra.mxu0 %v526
        %v688 = vpop.f32.mrf.mxu0
        %v689 = vadd.f32 %v263, %v688
        %v690 = vpop.f32.mrf.mxu0
        %v691 = vadd.f32 %v263, %v690
        %692 = vmatmul.bf16.gmra.mxu0 %v529
        %v693 = vpop.f32.mrf.mxu0
        %v694 = vadd.f32 %v263, %v693
        %v695 = vpop.f32.mrf.mxu0
        %v696 = vadd.f32 %v263, %v695
        %697 = vmatmul.bf16.gmra.mxu0 %v532
        %v698 = vpop.f32.mrf.mxu0
        %v699 = vadd.f32 %v263, %v698
        %v700 = vpop.f32.mrf.mxu0
        %v701 = vadd.f32 %v263, %v700
        %702 = vdwg.mxu0
        %v703 = vmax.f32 %v544, 0.0
        %v704 = vmax.f32 %v546, 0.0
        %v705 = vmax.f32 %v549, 0.0
        %v706 = vmax.f32 %v551, 0.0
        %v707 = vmax.f32 %v554, 0.0
        %v708 = vmax.f32 %v556, 0.0
        %v709 = vmax.f32 %v559, 0.0
        %v710 = vmax.f32 %v561, 0.0
        %v711 = vmax.f32 %v564, 0.0
        %v712 = vmax.f32 %v566, 0.0
        %v713 = vmax.f32 %v569, 0.0
        %v714 = vmax.f32 %v571, 0.0
        %v715 = vmax.f32 %v574, 0.0
        %v716 = vmax.f32 %v576, 0.0
        %v717 = vmax.f32 %v579, 0.0
        %v718 = vmax.f32 %v581, 0.0
        %v719 = vmax.f32 %v584, 0.0
        %v720 = vmax.f32 %v586, 0.0
        %v721 = vmax.f32 %v589, 0.0
        %v722 = vmax.f32 %v591, 0.0
        %v723 = vmax.f32 %v594, 0.0
        %v724 = vmax.f32 %v596, 0.0
        %v725 = vmax.f32 %v599, 0.0
        %v726 = vmax.f32 %v601, 0.0
        %v727 = vmax.f32 %v604, 0.0
        %v728 = vmax.f32 %v606, 0.0
        %v729 = vmax.f32 %v609, 0.0
        %v730 = vmax.f32 %v611, 0.0
        %v731 = vmax.f32 %v614, 0.0
        %v732 = vmax.f32 %v616, 0.0
        %v733 = vmax.f32 %v619, 0.0
        %v734 = vmax.f32 %v621, 0.0
        %v735 = vmax.f32 %v624, 0.0
        %v736 = vmax.f32 %v626, 0.0
        %v737 = vmax.f32 %v629, 0.0
        %v738 = vmax.f32 %v631, 0.0
        %v739 = vmax.f32 %v634, 0.0
        %v740 = vmax.f32 %v636, 0.0
        %v741 = vmax.f32 %v639, 0.0
        %v742 = vmax.f32 %v641, 0.0
        %v743 = vmax.f32 %v644, 0.0
        %v744 = vmax.f32 %v646, 0.0
        %v745 = vmax.f32 %v649, 0.0
        %v746 = vmax.f32 %v651, 0.0
        %v747 = vmax.f32 %v654, 0.0
        %v748 = vmax.f32 %v656, 0.0
        %v749 = vmax.f32 %v659, 0.0
        %v750 = vmax.f32 %v661, 0.0
        %v751 = vmax.f32 %v664, 0.0
        %v752 = vmax.f32 %v666, 0.0
        %v753 = vmax.f32 %v669, 0.0
        %v754 = vmax.f32 %v671, 0.0
        %v755 = vmax.f32 %v674, 0.0
        %v756 = vmax.f32 %v676, 0.0
        %v757 = vmax.f32 %v679, 0.0
        %v758 = vmax.f32 %v681, 0.0
        %v759 = vmax.f32 %v684, 0.0
        %v760 = vmax.f32 %v686, 0.0
        %v761 = vmax.f32 %v689, 0.0
        %v762 = vmax.f32 %v691, 0.0
        %v763 = vmax.f32 %v694, 0.0
        %v764 = vmax.f32 %v696, 0.0
        %v765 = vmax.f32 %v699, 0.0
        %v766 = vmax.f32 %v701, 0.0
        %v767 = vpack.c.bf16 %v703, %v703
        %v768 = vpack.c.bf16 %v704, %v704
        %v769 = vpack.c.bf16 %v705, %v705
        %v770 = vpack.c.bf16 %v706, %v706
        %v771 = vpack.c.bf16 %v707, %v707
        %v772 = vpack.c.bf16 %v708, %v708
        %v773 = vpack.c.bf16 %v709, %v709
        %v774 = vpack.c.bf16 %v710, %v710
        %v775 = vpack.c.bf16 %v711, %v711
        %v776 = vpack.c.bf16 %v712, %v712
        %v777 = vpack.c.bf16 %v713, %v713
        %v778 = vpack.c.bf16 %v714, %v714
        %v779 = vpack.c.bf16 %v715, %v715
        %v780 = vpack.c.bf16 %v716, %v716
        %v781 = vpack.c.bf16 %v717, %v717
        %v782 = vpack.c.bf16 %v718, %v718
        %v783 = vpack.c.bf16 %v719, %v719
        %v784 = vpack.c.bf16 %v720, %v720
        %v785 = vpack.c.bf16 %v721, %v721
        %v786 = vpack.c.bf16 %v722, %v722
        %v787 = vpack.c.bf16 %v723, %v723
        %v788 = vpack.c.bf16 %v724, %v724
        %v789 = vpack.c.bf16 %v725, %v725
        %v790 = vpack.c.bf16 %v726, %v726
        %v791 = vpack.c.bf16 %v727, %v727
        %v792 = vpack.c.bf16 %v728, %v728
        %v793 = vpack.c.bf16 %v729, %v729
        %v794 = vpack.c.bf16 %v730, %v730
        %v795 = vpack.c.bf16 %v731, %v731
        %v796 = vpack.c.bf16 %v732, %v732
        %v797 = vpack.c.bf16 %v733, %v733
        %v798 = vpack.c.bf16 %v734, %v734
        %v799 = vpack.c.bf16 %v735, %v735
        %v800 = vpack.c.bf16 %v736, %v736
        %v801 = vpack.c.bf16 %v737, %v737
        %v802 = vpack.c.bf16 %v738, %v738
        %v803 = vpack.c.bf16 %v739, %v739
        %v804 = vpack.c.bf16 %v740, %v740
        %v805 = vpack.c.bf16 %v741, %v741
        %v806 = vpack.c.bf16 %v742, %v742
        %v807 = vpack.c.bf16 %v743, %v743
        %v808 = vpack.c.bf16 %v744, %v744
        %v809 = vpack.c.bf16 %v745, %v745
        %v810 = vpack.c.bf16 %v746, %v746
        %v811 = vpack.c.bf16 %v747, %v747
        %v812 = vpack.c.bf16 %v748, %v748
        %v813 = vpack.c.bf16 %v749, %v749
        %v814 = vpack.c.bf16 %v750, %v750
        %v815 = vpack.c.bf16 %v751, %v751
        %v816 = vpack.c.bf16 %v752, %v752
        %v817 = vpack.c.bf16 %v753, %v753
        %v818 = vpack.c.bf16 %v754, %v754
        %v819 = vpack.c.bf16 %v755, %v755
        %v820 = vpack.c.bf16 %v756, %v756
        %v821 = vpack.c.bf16 %v757, %v757
        %v822 = vpack.c.bf16 %v758, %v758
        %v823 = vpack.c.bf16 %v759, %v759
        %v824 = vpack.c.bf16 %v760, %v760
        %v825 = vpack.c.bf16 %v761, %v761
        %v826 = vpack.c.bf16 %v762, %v762
        %v827 = vpack.c.bf16 %v763, %v763
        %v828 = vpack.c.bf16 %v764, %v764
        %v829 = vpack.c.bf16 %v765, %v765
        %v830 = vpack.c.bf16 %v766, %v766
        %831 = vst [vmem:[%s172] sm:$0xf] %v767
        %832 = vst [vmem:[%s172 + $0x4] sm:$0xf] %v768
        %833 = vst [vmem:[%s172 + $0x8] sm:$0xf] %v769
        %834 = vst [vmem:[%s172 + $0xc] sm:$0xf] %v770
        %835 = vst [vmem:[%s172 + $0x10] sm:$0xf] %v771
        %836 = vst [vmem:[%s172 + $0x14] sm:$0xf] %v772
        %837 = vst [vmem:[%s172 + $0x18] sm:$0xf] %v773
        %838 = vst [vmem:[%s172 + $0x1c] sm:$0xf] %v774
        %839 = vst [vmem:[%s172 + $0x20] sm:$0xf] %v775
        %840 = vst [vmem:[%s172 + $0x24] sm:$0xf] %v776
        %841 = vst [vmem:[%s172 + $0x28] sm:$0xf] %v777
        %842 = vst [vmem:[%s172 + $0x2c] sm:$0xf] %v778
        %843 = vst [vmem:[%s172 + $0x30] sm:$0xf] %v779
        %844 = vst [vmem:[%s172 + $0x34] sm:$0xf] %v780
        %845 = vst [vmem:[%s172 + $0x38] sm:$0xf] %v781
        %846 = vst [vmem:[%s172 + $0x3c] sm:$0xf] %v782
        %847 = vst [vmem:[%s172 + $0x40] sm:$0xf] %v783
        %848 = vst [vmem:[%s172 + $0x44] sm:$0xf] %v784
        %849 = vst [vmem:[%s172 + $0x48] sm:$0xf] %v785
        %850 = vst [vmem:[%s172 + $0x4c] sm:$0xf] %v786
        %851 = vst [vmem:[%s172 + $0x50] sm:$0xf] %v787
        %852 = vst [vmem:[%s172 + $0x54] sm:$0xf] %v788
        %853 = vst [vmem:[%s172 + $0x58] sm:$0xf] %v789
        %854 = vst [vmem:[%s172 + $0x5c] sm:$0xf] %v790
        %855 = vst [vmem:[%s172 + $0x60] sm:$0xf] %v791
        %856 = vst [vmem:[%s172 + $0x64] sm:$0xf] %v792
        %857 = vst [vmem:[%s172 + $0x68] sm:$0xf] %v793
        %858 = vst [vmem:[%s172 + $0x6c] sm:$0xf] %v794
        %859 = vst [vmem:[%s172 + $0x70] sm:$0xf] %v795
        %860 = vst [vmem:[%s172 + $0x74] sm:$0xf] %v796
        %861 = vst [vmem:[%s172 + $0x78] sm:$0xf] %v797
        %862 = vst [vmem:[%s172 + $0x7c] sm:$0xf] %v798
        %863 = vst [vmem:[%s172 + $0x80] sm:$0xf] %v799
        %864 = vst [vmem:[%s172 + $0x84] sm:$0xf] %v800
        %865 = vst [vmem:[%s172 + $0x88] sm:$0xf] %v801
        %866 = vst [vmem:[%s172 + $0x8c] sm:$0xf] %v802
        %867 = vst [vmem:[%s172 + $0x90] sm:$0xf] %v803
        %868 = vst [vmem:[%s172 + $0x94] sm:$0xf] %v804
        %869 = vst [vmem:[%s172 + $0x98] sm:$0xf] %v805
        %870 = vst [vmem:[%s172 + $0x9c] sm:$0xf] %v806
        %871 = vst [vmem:[%s172 + $0xa0] sm:$0xf] %v807
        %872 = vst [vmem:[%s172 + $0xa4] sm:$0xf] %v808
        %873 = vst [vmem:[%s172 + $0xa8] sm:$0xf] %v809
        %874 = vst [vmem:[%s172 + $0xac] sm:$0xf] %v810
        %875 = vst [vmem:[%s172 + $0xb0] sm:$0xf] %v811
        %876 = vst [vmem:[%s172 + $0xb4] sm:$0xf] %v812
        %877 = vst [vmem:[%s172 + $0xb8] sm:$0xf] %v813
        %878 = vst [vmem:[%s172 + $0xbc] sm:$0xf] %v814
        %879 = vst [vmem:[%s172 + $0xc0] sm:$0xf] %v815
        %880 = vst [vmem:[%s172 + $0xc4] sm:$0xf] %v816
        %881 = vst [vmem:[%s172 + $0xc8] sm:$0xf] %v817
        %882 = vst [vmem:[%s172 + $0xcc] sm:$0xf] %v818
        %883 = vst [vmem:[%s172 + $0xd0] sm:$0xf] %v819
        %884 = vst [vmem:[%s172 + $0xd4] sm:$0xf] %v820
        %885 = vst [vmem:[%s172 + $0xd8] sm:$0xf] %v821
        %886 = vst [vmem:[%s172 + $0xdc] sm:$0xf] %v822
        %887 = vst [vmem:[%s172 + $0xe0] sm:$0xf] %v823
        %888 = vst [vmem:[%s172 + $0xe4] sm:$0xf] %v824
        %889 = vst [vmem:[%s172 + $0xe8] sm:$0xf] %v825
        %890 = vst [vmem:[%s172 + $0xec] sm:$0xf] %v826
        %891 = vst [vmem:[%s172 + $0xf0] sm:$0xf] %v827
        %892 = vst [vmem:[%s172 + $0xf4] sm:$0xf] %v828
        %893 = vst [vmem:[%s172 + $0xf8] sm:$0xf] %v829
        %894 = vst [vmem:[%s172 + $0xfc] sm:$0xf] %v830
        %s895 = sand.u32 %s90, 1
        %s896 = sand.u32 %s90, 1
        %s897 = smul.addr %s896, 256
        %s898 = scalar_lea.vmem [#allocation2], %s897
        // Predicated region
        $region33: #{my_network_forward.4} parent=31 // pred_check
          %p899 = pneg %p100
        $region34: #{my_network_forward.4} parent=31 // pred_check_branch
          %901 = sbr.rel (%p899) target = $region36
        $region35: #{my_network_forward.4} parent=31 // pred_region
          %s902 = smul.u32 64, %s14
          %s903 = ssub.s32 553, %s902
          %p904 = scmp.lt.s32.totalorder %s903, 64
          %s905 = scalar_select %p904, %s903, 64
          %s906 = smul.u32 4, %s905
          %p907 = scmp.ne.s32.totalorder 0, %s906
          %s908 = smul.addr %s902, 4
          %s909 = scalar_lea.vmem %s3, %s908
          // Predicated region
          $region37: #{my_network_forward.4} parent=35 // pred_check
            %p910 = pneg %p907
          $region38: #{my_network_forward.4} parent=35 // pred_check_branch
            %912 = sbr.rel (%p910) target = $region40
          $region39: #{my_network_forward.4} parent=35 // pred_region
            // Predicated region
            $region41: #{my_network_forward.4} parent=39 // pred_check
              _
            $region42: #{my_network_forward.4} parent=39 // pred_check_branch
              %914 = sbr.rel target = $region44
            $region43: #{my_network_forward.4} parent=39 // pred_region
              // Predicated region
              $region63: #{my_network_forward.4} parent=43 // pred_check
                _
              $region64: #{my_network_forward.4} parent=43 // pred_check_branch
                %1026 = sbr.rel (0) target = $region66
              $region65: #{my_network_forward.4} parent=43 // pred_region
                %s1028 = ssub.s32 16, 1
                %s1029 = sshrl.u32 %s905, 5
                // While loop
                $region67: #{my_network_forward.4} parent=65 // loop_pre_header
                  _
                $region68: #{my_network_forward.4} parent=65 // loop_header
                  %s1031 = sphi 0, %s1033
                  %p1032 = scmp.ge.s32.totalorder %s1031, %s1029
                  %s1036 = sphi 0, %s1105
                  %s1037 = sphi %s898, %s1108
                  %s1038 = sphi %s909, %s1109
                $region69: #{my_network_forward.4} parent=65 // loop_header_branch
                  %1035 = sbr.rel (%p1032) target = $region73
                $region70: #{my_network_forward.4} parent=65 // loop_body
                  %v1039 = vld [vmem:[%s1037] sm:%s1028]
                  %1040 = vst [vmem:[%s1038] sm:%s1028] %v1039
                  %v1041 = vld [vmem:[%s1037 + $0x4] sm:%s1028]
                  %1042 = vst [vmem:[%s1038 + $0x4] sm:%s1028] %v1041
                  %v1043 = vld [vmem:[%s1037 + $0x8] sm:%s1028]
                  %1044 = vst [vmem:[%s1038 + $0x8] sm:%s1028] %v1043
                  %v1045 = vld [vmem:[%s1037 + $0xc] sm:%s1028]
                  %1046 = vst [vmem:[%s1038 + $0xc] sm:%s1028] %v1045
                  %v1047 = vld [vmem:[%s1037 + $0x10] sm:%s1028]
                  %1048 = vst [vmem:[%s1038 + $0x10] sm:%s1028] %v1047
                  %v1049 = vld [vmem:[%s1037 + $0x14] sm:%s1028]
                  %1050 = vst [vmem:[%s1038 + $0x14] sm:%s1028] %v1049
                  %v1051 = vld [vmem:[%s1037 + $0x18] sm:%s1028]
                  %1052 = vst [vmem:[%s1038 + $0x18] sm:%s1028] %v1051
                  %v1053 = vld [vmem:[%s1037 + $0x1c] sm:%s1028]
                  %1054 = vst [vmem:[%s1038 + $0x1c] sm:%s1028] %v1053
                  %v1055 = vld [vmem:[%s1037 + $0x20] sm:%s1028]
                  %1056 = vst [vmem:[%s1038 + $0x20] sm:%s1028] %v1055
                  %v1057 = vld [vmem:[%s1037 + $0x24] sm:%s1028]
                  %1058 = vst [vmem:[%s1038 + $0x24] sm:%s1028] %v1057
                  %v1059 = vld [vmem:[%s1037 + $0x28] sm:%s1028]
                  %1060 = vst [vmem:[%s1038 + $0x28] sm:%s1028] %v1059
                  %v1061 = vld [vmem:[%s1037 + $0x2c] sm:%s1028]
                  %1062 = vst [vmem:[%s1038 + $0x2c] sm:%s1028] %v1061
                  %v1063 = vld [vmem:[%s1037 + $0x30] sm:%s1028]
                  %1064 = vst [vmem:[%s1038 + $0x30] sm:%s1028] %v1063
                  %v1065 = vld [vmem:[%s1037 + $0x34] sm:%s1028]
                  %1066 = vst [vmem:[%s1038 + $0x34] sm:%s1028] %v1065
                  %v1067 = vld [vmem:[%s1037 + $0x38] sm:%s1028]
                  %1068 = vst [vmem:[%s1038 + $0x38] sm:%s1028] %v1067
                  %v1069 = vld [vmem:[%s1037 + $0x3c] sm:%s1028]
                  %1070 = vst [vmem:[%s1038 + $0x3c] sm:%s1028] %v1069
                  %v1071 = vld [vmem:[%s1037 + $0x40] sm:%s1028]
                  %1072 = vst [vmem:[%s1038 + $0x40] sm:%s1028] %v1071
                  %v1073 = vld [vmem:[%s1037 + $0x44] sm:%s1028]
                  %1074 = vst [vmem:[%s1038 + $0x44] sm:%s1028] %v1073
                  %v1075 = vld [vmem:[%s1037 + $0x48] sm:%s1028]
                  %1076 = vst [vmem:[%s1038 + $0x48] sm:%s1028] %v1075
                  %v1077 = vld [vmem:[%s1037 + $0x4c] sm:%s1028]
                  %1078 = vst [vmem:[%s1038 + $0x4c] sm:%s1028] %v1077
                  %v1079 = vld [vmem:[%s1037 + $0x50] sm:%s1028]
                  %1080 = vst [vmem:[%s1038 + $0x50] sm:%s1028] %v1079
                  %v1081 = vld [vmem:[%s1037 + $0x54] sm:%s1028]
                  %1082 = vst [vmem:[%s1038 + $0x54] sm:%s1028] %v1081
                  %v1083 = vld [vmem:[%s1037 + $0x58] sm:%s1028]
                  %1084 = vst [vmem:[%s1038 + $0x58] sm:%s1028] %v1083
                  %v1085 = vld [vmem:[%s1037 + $0x5c] sm:%s1028]
                  %1086 = vst [vmem:[%s1038 + $0x5c] sm:%s1028] %v1085
                  %v1087 = vld [vmem:[%s1037 + $0x60] sm:%s1028]
                  %1088 = vst [vmem:[%s1038 + $0x60] sm:%s1028] %v1087
                  %v1089 = vld [vmem:[%s1037 + $0x64] sm:%s1028]
                  %1090 = vst [vmem:[%s1038 + $0x64] sm:%s1028] %v1089
                  %v1091 = vld [vmem:[%s1037 + $0x68] sm:%s1028]
                  %1092 = vst [vmem:[%s1038 + $0x68] sm:%s1028] %v1091
                  %v1093 = vld [vmem:[%s1037 + $0x6c] sm:%s1028]
                  %1094 = vst [vmem:[%s1038 + $0x6c] sm:%s1028] %v1093
                  %v1095 = vld [vmem:[%s1037 + $0x70] sm:%s1028]
                  %1096 = vst [vmem:[%s1038 + $0x70] sm:%s1028] %v1095
                  %v1097 = vld [vmem:[%s1037 + $0x74] sm:%s1028]
                  %1098 = vst [vmem:[%s1038 + $0x74] sm:%s1028] %v1097
                  %v1099 = vld [vmem:[%s1037 + $0x78] sm:%s1028]
                  %1100 = vst [vmem:[%s1038 + $0x78] sm:%s1028] %v1099
                  %v1101 = vld [vmem:[%s1037 + $0x7c] sm:%s1028]
                  %1102 = vst [vmem:[%s1038 + $0x7c] sm:%s1028] %v1101
                  %s1103 = sadd.s32 1, %s1036
                  %p1104 = scmp.ge.s32.totalorder %s1103, %s1029
                  %s1105 = scalar_select %p1104, 0, %s1103
                  %s1106 = smul.u32 %s1105, 128
                  %s1107 = smul.u32 %s1105, 128
                  %s1108 = scalar_lea.vmem %s898, %s1106 [#allocation2]
                  %s1109 = scalar_lea.vmem %s909, %s1107
                $region71: #{my_network_forward.4} parent=65 // loop_footer
                  %s1033 = sadd.s32 %s1031, 1
                $region72: #{my_network_forward.4} parent=65 // loop_footer_branch
                  %1030 = sbr.rel target = $region68
                $region73: #{my_network_forward.4} parent=65 // loop_exit
                  _
                %s1110 = sshrl.u32 %s905, 5
                %s1111 = sand.u32 %s905, 31
                %s1112 = smul.u32 %s1110, 32
                %s1113 = smul.u32 4, %s1112
                %s1114 = scalar_lea.vmem %s898, %s1113 [#allocation2]
                %s1115 = smul.u32 4, %s1112
                %s1116 = scalar_lea.vmem %s909, %s1115
                // While loop
                $region74: #{my_network_forward.4} parent=65 // loop_pre_header
                  _
                $region75: #{my_network_forward.4} parent=65 // loop_header
                  %s1118 = sphi 0, %s1120
                  %p1119 = scmp.ge.s32.totalorder %s1118, %s1111
                  %s1123 = sphi 0, %s1130
                  %s1124 = sphi %s1114, %s1133
                  %s1125 = sphi %s1116, %s1134
                $region76: #{my_network_forward.4} parent=65 // loop_header_branch
                  %1122 = sbr.rel (%p1119) target = $region80
                $region77: #{my_network_forward.4} parent=65 // loop_body
                  %v1126 = vld [vmem:[%s1124] sm:%s1028]
                  %1127 = vst [vmem:[%s1125] sm:%s1028] %v1126
                  %s1128 = sadd.s32 1, %s1123
                  %p1129 = scmp.ge.s32.totalorder %s1128, %s1111
                  %s1130 = scalar_select %p1129, 0, %s1128
                  %s1131 = smul.u32 %s1130, 4
                  %s1132 = smul.u32 %s1130, 4
                  %s1133 = scalar_lea.vmem %s1114, %s1131 [#allocation2]
                  %s1134 = scalar_lea.vmem %s1116, %s1132
                $region78: #{my_network_forward.4} parent=65 // loop_footer
                  %s1120 = sadd.s32 %s1118, 1
                $region79: #{my_network_forward.4} parent=65 // loop_footer_branch
                  %1117 = sbr.rel target = $region75
                $region80: #{my_network_forward.4} parent=65 // loop_exit
                  _
              $region66: #{my_network_forward.4} parent=43 // pred_fallthru
                _
            $region44: #{my_network_forward.4} parent=39 // pred_fallthru
              _
            // Predicated region
            $region45: #{my_network_forward.4} parent=39 // pred_check
              _
            $region46: #{my_network_forward.4} parent=39 // pred_check_branch
              %916 = sbr.rel (0) target = $region48
            $region47: #{my_network_forward.4} parent=39 // pred_region
              %s918 = ssub.s32 16, 1
              %s919 = sshrl.u32 %s905, 5
              // While loop
              $region49: #{my_network_forward.4} parent=47 // loop_pre_header
                _
              $region50: #{my_network_forward.4} parent=47 // loop_header
                %s921 = sphi 0, %s923
                %p922 = scmp.ge.s32.totalorder %s921, %s919
                %s926 = sphi 0, %s995
                %s927 = sphi %s898, %s998
                %s928 = sphi %s909, %s999
              $region51: #{my_network_forward.4} parent=47 // loop_header_branch
                %925 = sbr.rel (%p922) target = $region55
              $region52: #{my_network_forward.4} parent=47 // loop_body
                %v929 = vld [vmem:[%s927] sm:%s918]
                %930 = vst [vmem:[%s928] sm:%s918] %v929
                %v931 = vld [vmem:[%s927 + $0x4] sm:%s918]
                %932 = vst [vmem:[%s928 + $0x4] sm:%s918] %v931
                %v933 = vld [vmem:[%s927 + $0x8] sm:%s918]
                %934 = vst [vmem:[%s928 + $0x8] sm:%s918] %v933
                %v935 = vld [vmem:[%s927 + $0xc] sm:%s918]
                %936 = vst [vmem:[%s928 + $0xc] sm:%s918] %v935
                %v937 = vld [vmem:[%s927 + $0x10] sm:%s918]
                %938 = vst [vmem:[%s928 + $0x10] sm:%s918] %v937
                %v939 = vld [vmem:[%s927 + $0x14] sm:%s918]
                %940 = vst [vmem:[%s928 + $0x14] sm:%s918] %v939
                %v941 = vld [vmem:[%s927 + $0x18] sm:%s918]
                %942 = vst [vmem:[%s928 + $0x18] sm:%s918] %v941
                %v943 = vld [vmem:[%s927 + $0x1c] sm:%s918]
                %944 = vst [vmem:[%s928 + $0x1c] sm:%s918] %v943
                %v945 = vld [vmem:[%s927 + $0x20] sm:%s918]
                %946 = vst [vmem:[%s928 + $0x20] sm:%s918] %v945
                %v947 = vld [vmem:[%s927 + $0x24] sm:%s918]
                %948 = vst [vmem:[%s928 + $0x24] sm:%s918] %v947
                %v949 = vld [vmem:[%s927 + $0x28] sm:%s918]
                %950 = vst [vmem:[%s928 + $0x28] sm:%s918] %v949
                %v951 = vld [vmem:[%s927 + $0x2c] sm:%s918]
                %952 = vst [vmem:[%s928 + $0x2c] sm:%s918] %v951
                %v953 = vld [vmem:[%s927 + $0x30] sm:%s918]
                %954 = vst [vmem:[%s928 + $0x30] sm:%s918] %v953
                %v955 = vld [vmem:[%s927 + $0x34] sm:%s918]
                %956 = vst [vmem:[%s928 + $0x34] sm:%s918] %v955
                %v957 = vld [vmem:[%s927 + $0x38] sm:%s918]
                %958 = vst [vmem:[%s928 + $0x38] sm:%s918] %v957
                %v959 = vld [vmem:[%s927 + $0x3c] sm:%s918]
                %960 = vst [vmem:[%s928 + $0x3c] sm:%s918] %v959
                %v961 = vld [vmem:[%s927 + $0x40] sm:%s918]
                %962 = vst [vmem:[%s928 + $0x40] sm:%s918] %v961
                %v963 = vld [vmem:[%s927 + $0x44] sm:%s918]
                %964 = vst [vmem:[%s928 + $0x44] sm:%s918] %v963
                %v965 = vld [vmem:[%s927 + $0x48] sm:%s918]
                %966 = vst [vmem:[%s928 + $0x48] sm:%s918] %v965
                %v967 = vld [vmem:[%s927 + $0x4c] sm:%s918]
                %968 = vst [vmem:[%s928 + $0x4c] sm:%s918] %v967
                %v969 = vld [vmem:[%s927 + $0x50] sm:%s918]
                %970 = vst [vmem:[%s928 + $0x50] sm:%s918] %v969
                %v971 = vld [vmem:[%s927 + $0x54] sm:%s918]
                %972 = vst [vmem:[%s928 + $0x54] sm:%s918] %v971
                %v973 = vld [vmem:[%s927 + $0x58] sm:%s918]
                %974 = vst [vmem:[%s928 + $0x58] sm:%s918] %v973
                %v975 = vld [vmem:[%s927 + $0x5c] sm:%s918]
                %976 = vst [vmem:[%s928 + $0x5c] sm:%s918] %v975
                %v977 = vld [vmem:[%s927 + $0x60] sm:%s918]
                %978 = vst [vmem:[%s928 + $0x60] sm:%s918] %v977
                %v979 = vld [vmem:[%s927 + $0x64] sm:%s918]
                %980 = vst [vmem:[%s928 + $0x64] sm:%s918] %v979
                %v981 = vld [vmem:[%s927 + $0x68] sm:%s918]
                %982 = vst [vmem:[%s928 + $0x68] sm:%s918] %v981
                %v983 = vld [vmem:[%s927 + $0x6c] sm:%s918]
                %984 = vst [vmem:[%s928 + $0x6c] sm:%s918] %v983
                %v985 = vld [vmem:[%s927 + $0x70] sm:%s918]
                %986 = vst [vmem:[%s928 + $0x70] sm:%s918] %v985
                %v987 = vld [vmem:[%s927 + $0x74] sm:%s918]
                %988 = vst [vmem:[%s928 + $0x74] sm:%s918] %v987
                %v989 = vld [vmem:[%s927 + $0x78] sm:%s918]
                %990 = vst [vmem:[%s928 + $0x78] sm:%s918] %v989
                %v991 = vld [vmem:[%s927 + $0x7c] sm:%s918]
                %992 = vst [vmem:[%s928 + $0x7c] sm:%s918] %v991
                %s993 = sadd.s32 1, %s926
                %p994 = scmp.ge.s32.totalorder %s993, %s919
                %s995 = scalar_select %p994, 0, %s993
                %s996 = smul.u32 %s995, 128
                %s997 = smul.u32 %s995, 128
                %s998 = scalar_lea.vmem %s898, %s996 [#allocation2]
                %s999 = scalar_lea.vmem %s909, %s997
              $region53: #{my_network_forward.4} parent=47 // loop_footer
                %s923 = sadd.s32 %s921, 1
              $region54: #{my_network_forward.4} parent=47 // loop_footer_branch
                %920 = sbr.rel target = $region50
              $region55: #{my_network_forward.4} parent=47 // loop_exit
                _
              %s1000 = sshrl.u32 %s905, 5
              %s1001 = sand.u32 %s905, 31
              %s1002 = smul.u32 %s1000, 32
              %s1003 = smul.u32 4, %s1002
              %s1004 = scalar_lea.vmem %s898, %s1003 [#allocation2]
              %s1005 = smul.u32 4, %s1002
              %s1006 = scalar_lea.vmem %s909, %s1005
              // While loop
              $region56: #{my_network_forward.4} parent=47 // loop_pre_header
                _
              $region57: #{my_network_forward.4} parent=47 // loop_header
                %s1008 = sphi 0, %s1010
                %p1009 = scmp.ge.s32.totalorder %s1008, %s1001
                %s1013 = sphi 0, %s1020
                %s1014 = sphi %s1004, %s1023
                %s1015 = sphi %s1006, %s1024
              $region58: #{my_network_forward.4} parent=47 // loop_header_branch
                %1012 = sbr.rel (%p1009) target = $region62
              $region59: #{my_network_forward.4} parent=47 // loop_body
                %v1016 = vld [vmem:[%s1014] sm:%s918]
                %1017 = vst [vmem:[%s1015] sm:%s918] %v1016
                %s1018 = sadd.s32 1, %s1013
                %p1019 = scmp.ge.s32.totalorder %s1018, %s1001
                %s1020 = scalar_select %p1019, 0, %s1018
                %s1021 = smul.u32 %s1020, 4
                %s1022 = smul.u32 %s1020, 4
                %s1023 = scalar_lea.vmem %s1004, %s1021 [#allocation2]
                %s1024 = scalar_lea.vmem %s1006, %s1022
              $region60: #{my_network_forward.4} parent=47 // loop_footer
                %s1010 = sadd.s32 %s1008, 1
              $region61: #{my_network_forward.4} parent=47 // loop_footer_branch
                %1007 = sbr.rel target = $region57
              $region62: #{my_network_forward.4} parent=47 // loop_exit
                _
            $region48: #{my_network_forward.4} parent=39 // pred_fallthru
              _
          $region40: #{my_network_forward.4} parent=35 // pred_fallthru
            _
          %1135 = vnop
        $region36: #{my_network_forward.4} parent=31 // pred_fallthru
          _
      $region32: #{my_network_forward.4} parent=5 // pred_fallthru
        _
      %p1136 = scmp.le.s32.totalorder 2, %s9
      // Predicated region
      $region81: #{my_network_forward.4} parent=5 // pred_check
        %p1137 = pneg %p1136
      $region82: #{my_network_forward.4} parent=5 // pred_check_branch
        %1139 = sbr.rel (%p1137) target = $region84
      $region83: #{my_network_forward.4} parent=5 // pred_region
        %s1140 = ssub.s32 %s9, 2
        // Predicated region
        $region85: #{my_network_forward.4} parent=83 // pred_check
          %p1141 = pneg %p106
        $region86: #{my_network_forward.4} parent=83 // pred_check_branch
          %1143 = sbr.rel (%p1141) target = $region88
        $region87: #{my_network_forward.4} parent=83 // pred_region
          %s1144 = sand.u32 %s91, 1
          %s1145 = sand.u32 %s91, 1
          %s1146 = smul.addr %s1145, 256
          %s1147 = scalar_lea.vmem [#allocation2], %s1146
        $region88: #{my_network_forward.4} parent=83 // pred_fallthru
          _
      $region84: #{my_network_forward.4} parent=5 // pred_fallthru
        _
    $region6: #{my_network_forward.4} parent=1 // loop_footer
      %s13 = sadd.s32 1, %s9
    $region7: #{my_network_forward.4} parent=1 // loop_footer_branch
      %8 = sbr.rel target = $region3
    $region8: #{my_network_forward.4} parent=1 // loop_exit
      _

// kernel: my_network_forward.5
$region0: #{my_network_forward.5}
  #allocation0 [shape = 'u32[]', space=smem, size = 0x4, offset = 0x4, fixed_abs, tag = 'smem constant byte address 0x4 - core index']
  #allocation1 [shape = 'u32[72,128]{1,0:T(1,128)}', space=vmem, size = 0x9000, scoped, tag = 'internal scratch']
  %s0 = inlined_call_operand.vmem [shape: bf16[1058,112], index: 0, kind: input, shape index: {}]
  %s1 = inlined_call_operand.vmem [shape: bf16[112,128], index: 1, kind: input, shape index: {}]
  %s2 = inlined_call_operand.vmem [shape: f32[1,128], index: 2, kind: input, shape index: {}]
  %s3 = inlined_call_operand.vmem [shape: bf16[1058,128], index: 3, kind: output, shape index: {}]
  %s4 = sld [smem:[#allocation0]]
  $region89: #{my_network_forward.5} parent=0
    _
  %s6 = ssub.s32 1, %s4
  %s7 = scalar_select 0, %s6, %s4
  $region1: #{my_network_forward.5} parent=0
    #allocation2 [shape = 'u8[262144]{0}', space=vmem, size = 0x40000, scoped, tag = 'output window, operand 0']
    loop: start=0, step=1, limit=5
    $region2: #{my_network_forward.5} parent=1 // loop_pre_header
      _
    $region3: #{my_network_forward.5} parent=1 // loop_header
      %s9 = sphi 0, %s13
      %p10 = scmp.ge.s32.totalorder %s9, 5
      %s19 = sphi 0, %s21
      %s22 = sphi 0, %s19
      %s23 = sphi 0, %s22
      %s39 = sphi 0, %s23
      %s43 = sphi 0, %s43
      %s45 = sphi 0, %s43
      %s46 = sphi 0, %s45
      %s60 = sphi 0, %s46
      %s64 = sphi 0, %s64
      %s66 = sphi 0, %s64
      %s67 = sphi 0, %s66
      %s81 = sphi 0, %s67
      %s87 = sphi 0, %s89
      %s90 = sphi 0, %s87
      %s91 = sphi 0, %s90
      %s107 = sphi 0, %s91
    $region4: #{my_network_forward.5} parent=1 // loop_header_branch
      %12 = sbr.rel (%p10) target = $region8
    $region5: #{my_network_forward.5} parent=1 // loop_body
      %s14 = ssub.s32 %s9, 1
      %s15 = ssub.s32 %s9, 2
      %s16 = sadd.s32 %s9, 1
      %s17 = ssub.s32 %s9, %s16
      %p18 = scmp.eq.s32.totalorder %s17, 0
      %s20 = sadd.s32 %s19, 1
      %s21 = scalar_select %p18, %s19, %s20
      %p24 = pneg %p18
      %p25 = scmp.eq.s32.totalorder %s9, 2
      %p26 = por %p24, %p25
      %p27 = scmp.ne.s32.totalorder %s19, %s22
      %p28 = scmp.eq.s32.totalorder %s9, 0
      %p29 = por %p27, %p28
      %p30 = scmp.ne.s32.totalorder %s19, %s22
      %p31 = scmp.eq.s32.totalorder %s14, 2
      %p32 = por %p30, %p31
      %p33 = scmp.ne.s32.totalorder %s22, %s23
      %p34 = scmp.eq.s32.totalorder %s14, 0
      %p35 = por %p33, %p34
      %p36 = scmp.ne.s32.totalorder %s22, %s23
      %p37 = scmp.eq.s32.totalorder %s15, 2
      %p38 = por %p36, %p37
      %p40 = scmp.ne.s32.totalorder %s23, %s39
      %p41 = scmp.eq.s32.totalorder %s15, 0
      %p42 = por %p40, %p41
      %s44 = sadd.s32 %s43, 1
      %p47 = scmp.eq.s32.totalorder %s9, 2
      %p48 = scmp.ne.s32.totalorder %s43, %s45
      %p49 = scmp.eq.s32.totalorder %s9, 0
      %p50 = por %p48, %p49
      %p51 = scmp.ne.s32.totalorder %s43, %s45
      %p52 = scmp.eq.s32.totalorder %s14, 2
      %p53 = por %p51, %p52
      %p54 = scmp.ne.s32.totalorder %s45, %s46
      %p55 = scmp.eq.s32.totalorder %s14, 0
      %p56 = por %p54, %p55
      %p57 = scmp.ne.s32.totalorder %s45, %s46
      %p58 = scmp.eq.s32.totalorder %s15, 2
      %p59 = por %p57, %p58
      %p61 = scmp.ne.s32.totalorder %s46, %s60
      %p62 = scmp.eq.s32.totalorder %s15, 0
      %p63 = por %p61, %p62
      %s65 = sadd.s32 %s64, 1
      %p68 = scmp.eq.s32.totalorder %s9, 2
      %p69 = scmp.ne.s32.totalorder %s64, %s66
      %p70 = scmp.eq.s32.totalorder %s9, 0
      %p71 = por %p69, %p70
      %p72 = scmp.ne.s32.totalorder %s64, %s66
      %p73 = scmp.eq.s32.totalorder %s14, 2
      %p74 = por %p72, %p73
      %p75 = scmp.ne.s32.totalorder %s66, %s67
      %p76 = scmp.eq.s32.totalorder %s14, 0
      %p77 = por %p75, %p76
      %p78 = scmp.ne.s32.totalorder %s66, %s67
      %p79 = scmp.eq.s32.totalorder %s15, 2
      %p80 = por %p78, %p79
      %p82 = scmp.ne.s32.totalorder %s67, %s81
      %p83 = scmp.eq.s32.totalorder %s15, 0
      %p84 = por %p82, %p83
      %s85 = ssub.s32 %s9, %s16
      %p86 = scmp.eq.s32.totalorder %s85, 0
      %s88 = sadd.s32 %s87, 1
      %s89 = scalar_select %p86, %s87, %s88
      %p92 = pneg %p86
      %p93 = scmp.eq.s32.totalorder %s9, 2
      %p94 = por %p92, %p93
      %p95 = scmp.ne.s32.totalorder %s87, %s90
      %p96 = scmp.eq.s32.totalorder %s9, 0
      %p97 = por %p95, %p96
      %p98 = scmp.ne.s32.totalorder %s87, %s90
      %p99 = scmp.eq.s32.totalorder %s14, 2
      %p100 = por %p98, %p99
      %p101 = scmp.ne.s32.totalorder %s90, %s91
      %p102 = scmp.eq.s32.totalorder %s14, 0
      %p103 = por %p101, %p102
      %p104 = scmp.ne.s32.totalorder %s90, %s91
      %p105 = scmp.eq.s32.totalorder %s15, 2
      %p106 = por %p104, %p105
      %p108 = scmp.ne.s32.totalorder %s91, %s107
      %p109 = scmp.eq.s32.totalorder %s15, 0
      %p110 = por %p108, %p109
      %p111 = scmp.le.s32.totalorder 1, %s9
      %p112 = scmp.lt.s32.totalorder %s9, 4
      %p113 = pnand %p111, %p112
      %p114 = pneg %p113
      // Predicated region
      $region9: #{my_network_forward.5} parent=5 // pred_check
        _
      $region10: #{my_network_forward.5} parent=5 // pred_check_branch
        %116 = sbr.rel (%p113) target = $region12
      $region11: #{my_network_forward.5} parent=5 // pred_region
        %s117 = ssub.s32 %s9, 1
        // Predicated region
        $region13: #{my_network_forward.5} parent=11 // pred_check
          %p118 = pneg %p56
        $region14: #{my_network_forward.5} parent=11 // pred_check_branch
          %120 = sbr.rel (%p118) target = $region16
        $region15: #{my_network_forward.5} parent=11 // pred_region
          _
        $region16: #{my_network_forward.5} parent=11 // pred_fallthru
          _
        // Predicated region
        $region17: #{my_network_forward.5} parent=11 // pred_check
          %p121 = pneg %p77
        $region18: #{my_network_forward.5} parent=11 // pred_check_branch
          %123 = sbr.rel (%p121) target = $region20
        $region19: #{my_network_forward.5} parent=11 // pred_region
          _
        $region20: #{my_network_forward.5} parent=11 // pred_fallthru
          _
      $region12: #{my_network_forward.5} parent=5 // pred_fallthru
        _
      %p124 = scmp.lt.s32.totalorder %s9, 3
      // Predicated region
      $region21: #{my_network_forward.5} parent=5 // pred_check
        %p125 = pneg %p124
      $region22: #{my_network_forward.5} parent=5 // pred_check_branch
        %127 = sbr.rel (%p125) target = $region24
      $region23: #{my_network_forward.5} parent=5 // pred_region
        // Predicated region
        $region25: #{my_network_forward.5} parent=23 // pred_check
          %p128 = pneg %p29
        $region26: #{my_network_forward.5} parent=23 // pred_check_branch
          %130 = sbr.rel (%p128) target = $region28
        $region27: #{my_network_forward.5} parent=23 // pred_region
          %s131 = smul.u32 64, %s9
          %s132 = ssub.s32 133, %s131
          %p133 = scmp.lt.s32.totalorder %s132, 64
          %s134 = scalar_select %p133, %s132, 64
          %s135 = smul.u32 4, %s134
          %p136 = scmp.lt.s32.totalorder %s131, 132
          %s137 = scalar_select %p136, %s131, 132
          %s138 = smul.addr %s137, 4
          %s139 = scalar_lea.vmem %s0, %s138
          %s140 = smul.u32 64, %s9
          %s141 = ssub.s32 133, %s140
          %p142 = scmp.lt.s32.totalorder %s141, 64
          %s143 = scalar_select %p142, %s141, 64
          %s144 = smul.u32 4, %s143
        $region28: #{my_network_forward.5} parent=23 // pred_fallthru
          _
      $region24: #{my_network_forward.5} parent=5 // pred_fallthru
        _
      %p145 = scmp.le.s32.totalorder 1, %s9
      %p146 = scmp.lt.s32.totalorder %s9, 4
      %p147 = pnand %p145, %p146
      %p148 = pneg %p147
      // Predicated region
      $region29: #{my_network_forward.5} parent=5 // pred_check
        _
      $region30: #{my_network_forward.5} parent=5 // pred_check_branch
        %150 = sbr.rel (%p147) target = $region32
      $region31: #{my_network_forward.5} parent=5 // pred_region
        %s151 = ssub.s32 %s9, 1
        %s152 = smul.u32 64, %s14
        %s153 = ssub.s32 133, %s152
        %p154 = scmp.lt.s32.totalorder %s153, 64
        %s155 = scalar_select %p154, %s153, 64
        %s156 = smul.u32 4, %s155
        %p157 = scmp.lt.s32.totalorder %s152, 132
        %s158 = scalar_select %p157, %s152, 132
        %s159 = smul.addr %s158, 4
        %s160 = scalar_lea.vmem %s0, %s159
        %p161 = pneg %p35
        %p162 = pneg %p32
        %p163 = pneg %p56
        %p164 = pneg %p53
        %p165 = pneg %p77
        %p166 = pneg %p74
        %p167 = pneg %p103
        %p168 = pneg %p100
        %s169 = sand.u32 %s90, 1
        %s170 = sand.u32 %s90, 1
        %s171 = smul.addr %s170, 256
        %s172 = scalar_lea.vmem [#allocation2], %s171
        %s173 = smul.u32 64, %s14
        %s174 = ssub.s32 133, %s173
        %p175 = scmp.lt.s32.totalorder %s174, 64
        %s176 = scalar_select %p175, %s174, 64
        %s177 = smul.u32 4, %s176
        %p178 = scmp.lt.s32.totalorder %s173, 132
        %s179 = scalar_select %p178, %s173, 132
        %s180 = smul.addr %s179, 4
        %s181 = scalar_lea.vmem %s0, %s180
        %s182 = smul.u32 64, %s14
        %s183 = ssub.s32 133, %s182
        %p184 = scmp.lt.s32.totalorder %s183, 64
        %s185 = scalar_select %p184, %s183, 64
        %s186 = smul.u32 4, %s185
        %s187 = smul.u32 64, %s14
        %s188 = ssub.s32 133, %s187
        %p189 = scmp.lt.s32.totalorder %s188, 64
        %s190 = scalar_select %p189, %s188, 64
        %s191 = smul.u32 4, %s190
        %v193 = vld [vmem:[%s181] sm:$0xf]
        %v194 = vld [vmem:[%s181 + $0x4] sm:$0xf]
        %v195 = vld [vmem:[%s181 + $0x8] sm:$0xf]
        %v196 = vld [vmem:[%s181 + $0xc] sm:$0xf]
        %v197 = vld [vmem:[%s181 + $0x10] sm:$0xf]
        %v198 = vld [vmem:[%s181 + $0x14] sm:$0xf]
        %v199 = vld [vmem:[%s181 + $0x18] sm:$0xf]
        %v200 = vld [vmem:[%s181 + $0x1c] sm:$0xf]
        %v201 = vld [vmem:[%s181 + $0x20] sm:$0xf]
        %v202 = vld [vmem:[%s181 + $0x24] sm:$0xf]
        %v203 = vld [vmem:[%s181 + $0x28] sm:$0xf]
        %v204 = vld [vmem:[%s181 + $0x2c] sm:$0xf]
        %v205 = vld [vmem:[%s181 + $0x30] sm:$0xf]
        %v206 = vld [vmem:[%s181 + $0x34] sm:$0xf]
        %v207 = vld [vmem:[%s181 + $0x38] sm:$0xf]
        %v208 = vld [vmem:[%s181 + $0x3c] sm:$0xf]
        %v209 = vld [vmem:[%s181 + $0x40] sm:$0xf]
        %v210 = vld [vmem:[%s181 + $0x44] sm:$0xf]
        %v211 = vld [vmem:[%s181 + $0x48] sm:$0xf]
        %v212 = vld [vmem:[%s181 + $0x4c] sm:$0xf]
        %v213 = vld [vmem:[%s181 + $0x50] sm:$0xf]
        %v214 = vld [vmem:[%s181 + $0x54] sm:$0xf]
        %v215 = vld [vmem:[%s181 + $0x58] sm:$0xf]
        %v216 = vld [vmem:[%s181 + $0x5c] sm:$0xf]
        %v217 = vld [vmem:[%s181 + $0x60] sm:$0xf]
        %v218 = vld [vmem:[%s181 + $0x64] sm:$0xf]
        %v219 = vld [vmem:[%s181 + $0x68] sm:$0xf]
        %v220 = vld [vmem:[%s181 + $0x6c] sm:$0xf]
        %v221 = vld [vmem:[%s181 + $0x70] sm:$0xf]
        %v222 = vld [vmem:[%s181 + $0x74] sm:$0xf]
        %v223 = vld [vmem:[%s181 + $0x78] sm:$0xf]
        %v224 = vld [vmem:[%s181 + $0x7c] sm:$0xf]
        %v225 = vld [vmem:[%s181 + $0x80] sm:$0xf]
        %v226 = vld [vmem:[%s181 + $0x84] sm:$0xf]
        %v227 = vld [vmem:[%s181 + $0x88] sm:$0xf]
        %v228 = vld [vmem:[%s181 + $0x8c] sm:$0xf]
        %v229 = vld [vmem:[%s181 + $0x90] sm:$0xf]
        %v230 = vld [vmem:[%s181 + $0x94] sm:$0xf]
        %v231 = vld [vmem:[%s181 + $0x98] sm:$0xf]
        %v232 = vld [vmem:[%s181 + $0x9c] sm:$0xf]
        %v233 = vld [vmem:[%s181 + $0xa0] sm:$0xf]
        %v234 = vld [vmem:[%s181 + $0xa4] sm:$0xf]
        %v235 = vld [vmem:[%s181 + $0xa8] sm:$0xf]
        %v236 = vld [vmem:[%s181 + $0xac] sm:$0xf]
        %v237 = vld [vmem:[%s181 + $0xb0] sm:$0xf]
        %v238 = vld [vmem:[%s181 + $0xb4] sm:$0xf]
        %v239 = vld [vmem:[%s181 + $0xb8] sm:$0xf]
        %v240 = vld [vmem:[%s181 + $0xbc] sm:$0xf]
        %v241 = vld [vmem:[%s181 + $0xc0] sm:$0xf]
        %v242 = vld [vmem:[%s181 + $0xc4] sm:$0xf]
        %v243 = vld [vmem:[%s181 + $0xc8] sm:$0xf]
        %v244 = vld [vmem:[%s181 + $0xcc] sm:$0xf]
        %v245 = vld [vmem:[%s181 + $0xd0] sm:$0xf]
        %v246 = vld [vmem:[%s181 + $0xd4] sm:$0xf]
        %v247 = vld [vmem:[%s181 + $0xd8] sm:$0xf]
        %v248 = vld [vmem:[%s181 + $0xdc] sm:$0xf]
        %v249 = vld [vmem:[%s181 + $0xe0] sm:$0xf]
        %v250 = vld [vmem:[%s181 + $0xe4] sm:$0xf]
        %v251 = vld [vmem:[%s181 + $0xe8] sm:$0xf]
        %v252 = vld [vmem:[%s181 + $0xec] sm:$0xf]
        %v253 = vld [vmem:[%s181 + $0xf0] sm:$0xf]
        %v254 = vld [vmem:[%s181 + $0xf4] sm:$0xf]
        %v255 = vld [vmem:[%s181 + $0xf8] sm:$0xf]
        %v256 = vld [vmem:[%s181 + $0xfc] sm:$0xf]
        %v257 = vld [vmem:[%s1] sm:$0xf]
        %v258 = vld [vmem:[%s1 + $0x4] sm:$0xf]
        %v259 = vld [vmem:[%s1 + $0x8] sm:$0xf]
        %v260 = vld [vmem:[%s1 + $0xc] sm:$0xf]
        %v261 = vld [vmem:[%s1 + $0x10] sm:$0xf]
        %v262 = vld [vmem:[%s1 + $0x14] sm:$0xf]
        %v263 = vld [vmem:[%s1 + $0x18] sm:$0xf]
        %v264 = vld [vmem:[%s1 + $0x1c] sm:$0xf]
        %v265 = vld [vmem:[%s1 + $0x20] sm:$0xf]
        %v266 = vld [vmem:[%s1 + $0x24] sm:$0xf]
        %v267 = vld [vmem:[%s1 + $0x28] sm:$0xf]
        %v268 = vld [vmem:[%s1 + $0x2c] sm:$0xf]
        %v269 = vld [vmem:[%s1 + $0x30] sm:$0xf]
        %v270 = vld [vmem:[%s1 + $0x34] sm:$0xf]
        %v271 = vld [vmem:[%s2] sm:$0x1]
        %v273 = vperm.slane %v271, 0
        %v339 = vunpack.c.l.b16 %v193
        %v340 = vunpack.c.l.b16 %v194
        %v341 = vunpack.c.l.b16 %v195
        %v342 = vunpack.c.l.b16 %v196
        %v343 = vunpack.c.l.b16 %v197
        %v344 = vunpack.c.l.b16 %v198
        %v345 = vunpack.c.l.b16 %v199
        %v346 = vunpack.c.l.b16 %v200
        %v347 = vunpack.c.l.b16 %v201
        %v348 = vunpack.c.l.b16 %v202
        %v349 = vunpack.c.l.b16 %v203
        %v350 = vunpack.c.l.b16 %v204
        %v351 = vunpack.c.l.b16 %v205
        %v352 = vunpack.c.l.b16 %v206
        %v353 = vunpack.c.l.b16 %v207
        %v354 = vunpack.c.l.b16 %v208
        %v355 = vunpack.c.l.b16 %v209
        %v356 = vunpack.c.l.b16 %v210
        %v357 = vunpack.c.l.b16 %v211
        %v358 = vunpack.c.l.b16 %v212
        %v359 = vunpack.c.l.b16 %v213
        %v360 = vunpack.c.l.b16 %v214
        %v361 = vunpack.c.l.b16 %v215
        %v362 = vunpack.c.l.b16 %v216
        %v363 = vunpack.c.l.b16 %v217
        %v364 = vunpack.c.l.b16 %v218
        %v365 = vunpack.c.l.b16 %v219
        %v366 = vunpack.c.l.b16 %v220
        %v367 = vunpack.c.l.b16 %v221
        %v368 = vunpack.c.l.b16 %v222
        %v369 = vunpack.c.l.b16 %v223
        %v370 = vunpack.c.l.b16 %v224
        %v371 = vunpack.c.l.b16 %v225
        %v372 = vunpack.c.l.b16 %v226
        %v373 = vunpack.c.l.b16 %v227
        %v374 = vunpack.c.l.b16 %v228
        %v375 = vunpack.c.l.b16 %v229
        %v376 = vunpack.c.l.b16 %v230
        %v377 = vunpack.c.l.b16 %v231
        %v378 = vunpack.c.l.b16 %v232
        %v379 = vunpack.c.l.b16 %v233
        %v380 = vunpack.c.l.b16 %v234
        %v381 = vunpack.c.l.b16 %v235
        %v382 = vunpack.c.l.b16 %v236
        %v383 = vunpack.c.l.b16 %v237
        %v384 = vunpack.c.l.b16 %v238
        %v385 = vunpack.c.l.b16 %v239
        %v386 = vunpack.c.l.b16 %v240
        %v387 = vunpack.c.l.b16 %v241
        %v388 = vunpack.c.l.b16 %v242
        %v389 = vunpack.c.l.b16 %v243
        %v390 = vunpack.c.l.b16 %v244
        %v391 = vunpack.c.l.b16 %v245
        %v392 = vunpack.c.l.b16 %v246
        %v393 = vunpack.c.l.b16 %v247
        %v394 = vunpack.c.l.b16 %v248
        %v395 = vunpack.c.l.b16 %v249
        %v396 = vunpack.c.l.b16 %v250
        %v397 = vunpack.c.l.b16 %v251
        %v398 = vunpack.c.l.b16 %v252
        %v399 = vunpack.c.l.b16 %v253
        %v400 = vunpack.c.l.b16 %v254
        %v401 = vunpack.c.l.b16 %v255
        %v402 = vunpack.c.l.b16 %v256
        %v403 = vpack.c.b16 %v340, %v339
        %v404 = vpack.c.b16 %v342, %v341
        %v405 = vpack.c.b16 %v344, %v343
        %v406 = vpack.c.b16 %v346, %v345
        %v407 = vpack.c.b16 %v348, %v347
        %v408 = vpack.c.b16 %v350, %v349
        %v409 = vpack.c.b16 %v352, %v351
        %v410 = vpack.c.b16 %v354, %v353
        %v411 = vpack.c.b16 %v356, %v355
        %v412 = vpack.c.b16 %v358, %v357
        %v413 = vpack.c.b16 %v360, %v359
        %v414 = vpack.c.b16 %v362, %v361
        %v415 = vpack.c.b16 %v364, %v363
        %v416 = vpack.c.b16 %v366, %v365
        %v417 = vpack.c.b16 %v368, %v367
        %v418 = vpack.c.b16 %v370, %v369
        %v419 = vpack.c.b16 %v372, %v371
        %v420 = vpack.c.b16 %v374, %v373
        %v421 = vpack.c.b16 %v376, %v375
        %v422 = vpack.c.b16 %v378, %v377
        %v423 = vpack.c.b16 %v380, %v379
        %v424 = vpack.c.b16 %v382, %v381
        %v425 = vpack.c.b16 %v384, %v383
        %v426 = vpack.c.b16 %v386, %v385
        %v427 = vpack.c.b16 %v388, %v387
        %v428 = vpack.c.b16 %v390, %v389
        %v429 = vpack.c.b16 %v392, %v391
        %v430 = vpack.c.b16 %v394, %v393
        %v431 = vpack.c.b16 %v396, %v395
        %v432 = vpack.c.b16 %v398, %v397
        %v433 = vpack.c.b16 %v400, %v399
        %v434 = vpack.c.b16 %v402, %v401
        %v449 = vunpack.c.l.b16 %v257
        %v450 = vunpack.c.l.b16 %v258
        %v451 = vunpack.c.l.b16 %v259
        %v452 = vunpack.c.l.b16 %v260
        %v453 = vunpack.c.l.b16 %v261
        %v454 = vunpack.c.l.b16 %v262
        %v455 = vunpack.c.l.b16 %v263
        %v456 = vunpack.c.l.b16 %v264
        %v457 = vunpack.c.l.b16 %v265
        %v458 = vunpack.c.l.b16 %v266
        %v459 = vunpack.c.l.b16 %v267
        %v460 = vunpack.c.l.b16 %v268
        %v461 = vunpack.c.l.b16 %v269
        %v462 = vunpack.c.l.b16 %v270
        %v463 = vpack.c.b16 %v450, %v449
        %v464 = vpack.c.b16 %v452, %v451
        %v465 = vpack.c.b16 %v454, %v453
        %v466 = vpack.c.b16 %v456, %v455
        %v467 = vpack.c.b16 %v458, %v457
        %v468 = vpack.c.b16 %v460, %v459
        %v469 = vpack.c.b16 %v462, %v461
        %vm477 = vcmask 916480
        %v479 = vsel %vm477, %v403, 0
        %v482 = vsel %vm477, %v404, 0
        %v485 = vsel %vm477, %v405, 0
        %v488 = vsel %vm477, %v406, 0
        %v491 = vsel %vm477, %v407, 0
        %v494 = vsel %vm477, %v408, 0
        %v497 = vsel %vm477, %v409, 0
        %v500 = vsel %vm477, %v410, 0
        %v503 = vsel %vm477, %v411, 0
        %v506 = vsel %vm477, %v412, 0
        %v509 = vsel %vm477, %v413, 0
        %v512 = vsel %vm477, %v414, 0
        %v515 = vsel %vm477, %v415, 0
        %v518 = vsel %vm477, %v416, 0
        %v521 = vsel %vm477, %v417, 0
        %v524 = vsel %vm477, %v418, 0
        %v527 = vsel %vm477, %v419, 0
        %v530 = vsel %vm477, %v420, 0
        %v533 = vsel %vm477, %v421, 0
        %v536 = vsel %vm477, %v422, 0
        %v539 = vsel %vm477, %v423, 0
        %v542 = vsel %vm477, %v424, 0
        %v545 = vsel %vm477, %v425, 0
        %v548 = vsel %vm477, %v426, 0
        %v551 = vsel %vm477, %v427, 0
        %v554 = vsel %vm477, %v428, 0
        %v557 = vsel %vm477, %v429, 0
        %v560 = vsel %vm477, %v430, 0
        %v563 = vsel %vm477, %v431, 0
        %v566 = vsel %vm477, %v432, 0
        %v569 = vsel %vm477, %v433, 0
        %v572 = vsel %vm477, %v434, 0
        %574 = vmatpush.bf16.msra.mxu0 0
        %575 = vmatpush.bf16.msra.mxu0 %v469
        %576 = vmatpush.bf16.msra.mxu0 %v468
        %577 = vmatpush.bf16.msra.mxu0 %v467
        %578 = vmatpush.bf16.msra.mxu0 %v466
        %579 = vmatpush.bf16.msra.mxu0 %v465
        %580 = vmatpush.bf16.msra.mxu0 %v464
        %581 = vmatpush.bf16.msra.mxu0 %v463
        %582 = vmatmul.bf16.gmra.mxu0 %v479
        %v583 = vpop.f32.mrf.mxu0
        %v584 = vadd.f32 %v273, %v583
        %v585 = vpop.f32.mrf.mxu0
        %v586 = vadd.f32 %v273, %v585
        %587 = vmatmul.bf16.gmra.mxu0 %v482
        %v588 = vpop.f32.mrf.mxu0
        %v589 = vadd.f32 %v273, %v588
        %v590 = vpop.f32.mrf.mxu0
        %v591 = vadd.f32 %v273, %v590
        %592 = vmatmul.bf16.gmra.mxu0 %v485
        %v593 = vpop.f32.mrf.mxu0
        %v594 = vadd.f32 %v273, %v593
        %v595 = vpop.f32.mrf.mxu0
        %v596 = vadd.f32 %v273, %v595
        %597 = vmatmul.bf16.gmra.mxu0 %v488
        %v598 = vpop.f32.mrf.mxu0
        %v599 = vadd.f32 %v273, %v598
        %v600 = vpop.f32.mrf.mxu0
        %v601 = vadd.f32 %v273, %v600
        %602 = vmatmul.bf16.gmra.mxu0 %v491
        %v603 = vpop.f32.mrf.mxu0
        %v604 = vadd.f32 %v273, %v603
        %v605 = vpop.f32.mrf.mxu0
        %v606 = vadd.f32 %v273, %v605
        %607 = vmatmul.bf16.gmra.mxu0 %v494
        %v608 = vpop.f32.mrf.mxu0
        %v609 = vadd.f32 %v273, %v608
        %v610 = vpop.f32.mrf.mxu0
        %v611 = vadd.f32 %v273, %v610
        %612 = vmatmul.bf16.gmra.mxu0 %v497
        %v613 = vpop.f32.mrf.mxu0
        %v614 = vadd.f32 %v273, %v613
        %v615 = vpop.f32.mrf.mxu0
        %v616 = vadd.f32 %v273, %v615
        %617 = vmatmul.bf16.gmra.mxu0 %v500
        %v618 = vpop.f32.mrf.mxu0
        %v619 = vadd.f32 %v273, %v618
        %v620 = vpop.f32.mrf.mxu0
        %v621 = vadd.f32 %v273, %v620
        %622 = vmatmul.bf16.gmra.mxu0 %v503
        %v623 = vpop.f32.mrf.mxu0
        %v624 = vadd.f32 %v273, %v623
        %v625 = vpop.f32.mrf.mxu0
        %v626 = vadd.f32 %v273, %v625
        %627 = vmatmul.bf16.gmra.mxu0 %v506
        %v628 = vpop.f32.mrf.mxu0
        %v629 = vadd.f32 %v273, %v628
        %v630 = vpop.f32.mrf.mxu0
        %v631 = vadd.f32 %v273, %v630
        %632 = vmatmul.bf16.gmra.mxu0 %v509
        %v633 = vpop.f32.mrf.mxu0
        %v634 = vadd.f32 %v273, %v633
        %v635 = vpop.f32.mrf.mxu0
        %v636 = vadd.f32 %v273, %v635
        %637 = vmatmul.bf16.gmra.mxu0 %v512
        %v638 = vpop.f32.mrf.mxu0
        %v639 = vadd.f32 %v273, %v638
        %v640 = vpop.f32.mrf.mxu0
        %v641 = vadd.f32 %v273, %v640
        %642 = vmatmul.bf16.gmra.mxu0 %v515
        %v643 = vpop.f32.mrf.mxu0
        %v644 = vadd.f32 %v273, %v643
        %v645 = vpop.f32.mrf.mxu0
        %v646 = vadd.f32 %v273, %v645
        %647 = vmatmul.bf16.gmra.mxu0 %v518
        %v648 = vpop.f32.mrf.mxu0
        %v649 = vadd.f32 %v273, %v648
        %v650 = vpop.f32.mrf.mxu0
        %v651 = vadd.f32 %v273, %v650
        %652 = vmatmul.bf16.gmra.mxu0 %v521
        %v653 = vpop.f32.mrf.mxu0
        %v654 = vadd.f32 %v273, %v653
        %v655 = vpop.f32.mrf.mxu0
        %v656 = vadd.f32 %v273, %v655
        %657 = vmatmul.bf16.gmra.mxu0 %v524
        %v658 = vpop.f32.mrf.mxu0
        %v659 = vadd.f32 %v273, %v658
        %v660 = vpop.f32.mrf.mxu0
        %v661 = vadd.f32 %v273, %v660
        %662 = vmatmul.bf16.gmra.mxu0 %v527
        %v663 = vpop.f32.mrf.mxu0
        %v664 = vadd.f32 %v273, %v663
        %v665 = vpop.f32.mrf.mxu0
        %v666 = vadd.f32 %v273, %v665
        %667 = vmatmul.bf16.gmra.mxu0 %v530
        %v668 = vpop.f32.mrf.mxu0
        %v669 = vadd.f32 %v273, %v668
        %v670 = vpop.f32.mrf.mxu0
        %v671 = vadd.f32 %v273, %v670
        %672 = vmatmul.bf16.gmra.mxu0 %v533
        %v673 = vpop.f32.mrf.mxu0
        %v674 = vadd.f32 %v273, %v673
        %v675 = vpop.f32.mrf.mxu0
        %v676 = vadd.f32 %v273, %v675
        %677 = vmatmul.bf16.gmra.mxu0 %v536
        %v678 = vpop.f32.mrf.mxu0
        %v679 = vadd.f32 %v273, %v678
        %v680 = vpop.f32.mrf.mxu0
        %v681 = vadd.f32 %v273, %v680
        %682 = vmatmul.bf16.gmra.mxu0 %v539
        %v683 = vpop.f32.mrf.mxu0
        %v684 = vadd.f32 %v273, %v683
        %v685 = vpop.f32.mrf.mxu0
        %v686 = vadd.f32 %v273, %v685
        %687 = vmatmul.bf16.gmra.mxu0 %v542
        %v688 = vpop.f32.mrf.mxu0
        %v689 = vadd.f32 %v273, %v688
        %v690 = vpop.f32.mrf.mxu0
        %v691 = vadd.f32 %v273, %v690
        %692 = vmatmul.bf16.gmra.mxu0 %v545
        %v693 = vpop.f32.mrf.mxu0
        %v694 = vadd.f32 %v273, %v693
        %v695 = vpop.f32.mrf.mxu0
        %v696 = vadd.f32 %v273, %v695
        %697 = vmatmul.bf16.gmra.mxu0 %v548
        %v698 = vpop.f32.mrf.mxu0
        %v699 = vadd.f32 %v273, %v698
        %v700 = vpop.f32.mrf.mxu0
        %v701 = vadd.f32 %v273, %v700
        %702 = vmatmul.bf16.gmra.mxu0 %v551
        %v703 = vpop.f32.mrf.mxu0
        %v704 = vadd.f32 %v273, %v703
        %v705 = vpop.f32.mrf.mxu0
        %v706 = vadd.f32 %v273, %v705
        %707 = vmatmul.bf16.gmra.mxu0 %v554
        %v708 = vpop.f32.mrf.mxu0
        %v709 = vadd.f32 %v273, %v708
        %v710 = vpop.f32.mrf.mxu0
        %v711 = vadd.f32 %v273, %v710
        %712 = vmatmul.bf16.gmra.mxu0 %v557
        %v713 = vpop.f32.mrf.mxu0
        %v714 = vadd.f32 %v273, %v713
        %v715 = vpop.f32.mrf.mxu0
        %v716 = vadd.f32 %v273, %v715
        %717 = vmatmul.bf16.gmra.mxu0 %v560
        %v718 = vpop.f32.mrf.mxu0
        %v719 = vadd.f32 %v273, %v718
        %v720 = vpop.f32.mrf.mxu0
        %v721 = vadd.f32 %v273, %v720
        %722 = vmatmul.bf16.gmra.mxu0 %v563
        %v723 = vpop.f32.mrf.mxu0
        %v724 = vadd.f32 %v273, %v723
        %v725 = vpop.f32.mrf.mxu0
        %v726 = vadd.f32 %v273, %v725
        %727 = vmatmul.bf16.gmra.mxu0 %v566
        %v728 = vpop.f32.mrf.mxu0
        %v729 = vadd.f32 %v273, %v728
        %v730 = vpop.f32.mrf.mxu0
        %v731 = vadd.f32 %v273, %v730
        %732 = vmatmul.bf16.gmra.mxu0 %v569
        %v733 = vpop.f32.mrf.mxu0
        %v734 = vadd.f32 %v273, %v733
        %v735 = vpop.f32.mrf.mxu0
        %v736 = vadd.f32 %v273, %v735
        %737 = vmatmul.bf16.gmra.mxu0 %v572
        %v738 = vpop.f32.mrf.mxu0
        %v739 = vadd.f32 %v273, %v738
        %v740 = vpop.f32.mrf.mxu0
        %v741 = vadd.f32 %v273, %v740
        %742 = vdwg.mxu0
        %v743 = vmax.f32 %v584, 0.0
        %v744 = vmax.f32 %v586, 0.0
        %v745 = vmax.f32 %v589, 0.0
        %v746 = vmax.f32 %v591, 0.0
        %v747 = vmax.f32 %v594, 0.0
        %v748 = vmax.f32 %v596, 0.0
        %v749 = vmax.f32 %v599, 0.0
        %v750 = vmax.f32 %v601, 0.0
        %v751 = vmax.f32 %v604, 0.0
        %v752 = vmax.f32 %v606, 0.0
        %v753 = vmax.f32 %v609, 0.0
        %v754 = vmax.f32 %v611, 0.0
        %v755 = vmax.f32 %v614, 0.0
        %v756 = vmax.f32 %v616, 0.0
        %v757 = vmax.f32 %v619, 0.0
        %v758 = vmax.f32 %v621, 0.0
        %v759 = vmax.f32 %v624, 0.0
        %v760 = vmax.f32 %v626, 0.0
        %v761 = vmax.f32 %v629, 0.0
        %v762 = vmax.f32 %v631, 0.0
        %v763 = vmax.f32 %v634, 0.0
        %v764 = vmax.f32 %v636, 0.0
        %v765 = vmax.f32 %v639, 0.0
        %v766 = vmax.f32 %v641, 0.0
        %v767 = vmax.f32 %v644, 0.0
        %v768 = vmax.f32 %v646, 0.0
        %v769 = vmax.f32 %v649, 0.0
        %v770 = vmax.f32 %v651, 0.0
        %v771 = vmax.f32 %v654, 0.0
        %v772 = vmax.f32 %v656, 0.0
        %v773 = vmax.f32 %v659, 0.0
        %v774 = vmax.f32 %v661, 0.0
        %v775 = vmax.f32 %v664, 0.0
        %v776 = vmax.f32 %v666, 0.0
        %v777 = vmax.f32 %v669, 0.0
        %v778 = vmax.f32 %v671, 0.0
        %v779 = vmax.f32 %v674, 0.0
        %v780 = vmax.f32 %v676, 0.0
        %v781 = vmax.f32 %v679, 0.0
        %v782 = vmax.f32 %v681, 0.0
        %v783 = vmax.f32 %v684, 0.0
        %v784 = vmax.f32 %v686, 0.0
        %v785 = vmax.f32 %v689, 0.0
        %v786 = vmax.f32 %v691, 0.0
        %v787 = vmax.f32 %v694, 0.0
        %v788 = vmax.f32 %v696, 0.0
        %v789 = vmax.f32 %v699, 0.0
        %v790 = vmax.f32 %v701, 0.0
        %v791 = vmax.f32 %v704, 0.0
        %v792 = vmax.f32 %v706, 0.0
        %v793 = vmax.f32 %v709, 0.0
        %v794 = vmax.f32 %v711, 0.0
        %v795 = vmax.f32 %v714, 0.0
        %v796 = vmax.f32 %v716, 0.0
        %v797 = vmax.f32 %v719, 0.0
        %v798 = vmax.f32 %v721, 0.0
        %v799 = vmax.f32 %v724, 0.0
        %v800 = vmax.f32 %v726, 0.0
        %v801 = vmax.f32 %v729, 0.0
        %v802 = vmax.f32 %v731, 0.0
        %v803 = vmax.f32 %v734, 0.0
        %v804 = vmax.f32 %v736, 0.0
        %v805 = vmax.f32 %v739, 0.0
        %v806 = vmax.f32 %v741, 0.0
        %v807 = vpack.c.bf16 %v743, %v743
        %v808 = vpack.c.bf16 %v744, %v744
        %v809 = vpack.c.bf16 %v745, %v745
        %v810 = vpack.c.bf16 %v746, %v746
        %v811 = vpack.c.bf16 %v747, %v747
        %v812 = vpack.c.bf16 %v748, %v748
        %v813 = vpack.c.bf16 %v749, %v749
        %v814 = vpack.c.bf16 %v750, %v750
        %v815 = vpack.c.bf16 %v751, %v751
        %v816 = vpack.c.bf16 %v752, %v752
        %v817 = vpack.c.bf16 %v753, %v753
        %v818 = vpack.c.bf16 %v754, %v754
        %v819 = vpack.c.bf16 %v755, %v755
        %v820 = vpack.c.bf16 %v756, %v756
        %v821 = vpack.c.bf16 %v757, %v757
        %v822 = vpack.c.bf16 %v758, %v758
        %v823 = vpack.c.bf16 %v759, %v759
        %v824 = vpack.c.bf16 %v760, %v760
        %v825 = vpack.c.bf16 %v761, %v761
        %v826 = vpack.c.bf16 %v762, %v762
        %v827 = vpack.c.bf16 %v763, %v763
        %v828 = vpack.c.bf16 %v764, %v764
        %v829 = vpack.c.bf16 %v765, %v765
        %v830 = vpack.c.bf16 %v766, %v766
        %v831 = vpack.c.bf16 %v767, %v767
        %v832 = vpack.c.bf16 %v768, %v768
        %v833 = vpack.c.bf16 %v769, %v769
        %v834 = vpack.c.bf16 %v770, %v770
        %v835 = vpack.c.bf16 %v771, %v771
        %v836 = vpack.c.bf16 %v772, %v772
        %v837 = vpack.c.bf16 %v773, %v773
        %v838 = vpack.c.bf16 %v774, %v774
        %v839 = vpack.c.bf16 %v775, %v775
        %v840 = vpack.c.bf16 %v776, %v776
        %v841 = vpack.c.bf16 %v777, %v777
        %v842 = vpack.c.bf16 %v778, %v778
        %v843 = vpack.c.bf16 %v779, %v779
        %v844 = vpack.c.bf16 %v780, %v780
        %v845 = vpack.c.bf16 %v781, %v781
        %v846 = vpack.c.bf16 %v782, %v782
        %v847 = vpack.c.bf16 %v783, %v783
        %v848 = vpack.c.bf16 %v784, %v784
        %v849 = vpack.c.bf16 %v785, %v785
        %v850 = vpack.c.bf16 %v786, %v786
        %v851 = vpack.c.bf16 %v787, %v787
        %v852 = vpack.c.bf16 %v788, %v788
        %v853 = vpack.c.bf16 %v789, %v789
        %v854 = vpack.c.bf16 %v790, %v790
        %v855 = vpack.c.bf16 %v791, %v791
        %v856 = vpack.c.bf16 %v792, %v792
        %v857 = vpack.c.bf16 %v793, %v793
        %v858 = vpack.c.bf16 %v794, %v794
        %v859 = vpack.c.bf16 %v795, %v795
        %v860 = vpack.c.bf16 %v796, %v796
        %v861 = vpack.c.bf16 %v797, %v797
        %v862 = vpack.c.bf16 %v798, %v798
        %v863 = vpack.c.bf16 %v799, %v799
        %v864 = vpack.c.bf16 %v800, %v800
        %v865 = vpack.c.bf16 %v801, %v801
        %v866 = vpack.c.bf16 %v802, %v802
        %v867 = vpack.c.bf16 %v803, %v803
        %v868 = vpack.c.bf16 %v804, %v804
        %v869 = vpack.c.bf16 %v805, %v805
        %v870 = vpack.c.bf16 %v806, %v806
        %871 = vst [vmem:[%s172] sm:$0xf] %v807
        %872 = vst [vmem:[%s172 + $0x4] sm:$0xf] %v808
        %873 = vst [vmem:[%s172 + $0x8] sm:$0xf] %v809
        %874 = vst [vmem:[%s172 + $0xc] sm:$0xf] %v810
        %875 = vst [vmem:[%s172 + $0x10] sm:$0xf] %v811
        %876 = vst [vmem:[%s172 + $0x14] sm:$0xf] %v812
        %877 = vst [vmem:[%s172 + $0x18] sm:$0xf] %v813
        %878 = vst [vmem:[%s172 + $0x1c] sm:$0xf] %v814
        %879 = vst [vmem:[%s172 + $0x20] sm:$0xf] %v815
        %880 = vst [vmem:[%s172 + $0x24] sm:$0xf] %v816
        %881 = vst [vmem:[%s172 + $0x28] sm:$0xf] %v817
        %882 = vst [vmem:[%s172 + $0x2c] sm:$0xf] %v818
        %883 = vst [vmem:[%s172 + $0x30] sm:$0xf] %v819
        %884 = vst [vmem:[%s172 + $0x34] sm:$0xf] %v820
        %885 = vst [vmem:[%s172 + $0x38] sm:$0xf] %v821
        %886 = vst [vmem:[%s172 + $0x3c] sm:$0xf] %v822
        %887 = vst [vmem:[%s172 + $0x40] sm:$0xf] %v823
        %888 = vst [vmem:[%s172 + $0x44] sm:$0xf] %v824
        %889 = vst [vmem:[%s172 + $0x48] sm:$0xf] %v825
        %890 = vst [vmem:[%s172 + $0x4c] sm:$0xf] %v826
        %891 = vst [vmem:[%s172 + $0x50] sm:$0xf] %v827
        %892 = vst [vmem:[%s172 + $0x54] sm:$0xf] %v828
        %893 = vst [vmem:[%s172 + $0x58] sm:$0xf] %v829
        %894 = vst [vmem:[%s172 + $0x5c] sm:$0xf] %v830
        %895 = vst [vmem:[%s172 + $0x60] sm:$0xf] %v831
        %896 = vst [vmem:[%s172 + $0x64] sm:$0xf] %v832
        %897 = vst [vmem:[%s172 + $0x68] sm:$0xf] %v833
        %898 = vst [vmem:[%s172 + $0x6c] sm:$0xf] %v834
        %899 = vst [vmem:[%s172 + $0x70] sm:$0xf] %v835
        %900 = vst [vmem:[%s172 + $0x74] sm:$0xf] %v836
        %901 = vst [vmem:[%s172 + $0x78] sm:$0xf] %v837
        %902 = vst [vmem:[%s172 + $0x7c] sm:$0xf] %v838
        %903 = vst [vmem:[%s172 + $0x80] sm:$0xf] %v839
        %904 = vst [vmem:[%s172 + $0x84] sm:$0xf] %v840
        %905 = vst [vmem:[%s172 + $0x88] sm:$0xf] %v841
        %906 = vst [vmem:[%s172 + $0x8c] sm:$0xf] %v842
        %907 = vst [vmem:[%s172 + $0x90] sm:$0xf] %v843
        %908 = vst [vmem:[%s172 + $0x94] sm:$0xf] %v844
        %909 = vst [vmem:[%s172 + $0x98] sm:$0xf] %v845
        %910 = vst [vmem:[%s172 + $0x9c] sm:$0xf] %v846
        %911 = vst [vmem:[%s172 + $0xa0] sm:$0xf] %v847
        %912 = vst [vmem:[%s172 + $0xa4] sm:$0xf] %v848
        %913 = vst [vmem:[%s172 + $0xa8] sm:$0xf] %v849
        %914 = vst [vmem:[%s172 + $0xac] sm:$0xf] %v850
        %915 = vst [vmem:[%s172 + $0xb0] sm:$0xf] %v851
        %916 = vst [vmem:[%s172 + $0xb4] sm:$0xf] %v852
        %917 = vst [vmem:[%s172 + $0xb8] sm:$0xf] %v853
        %918 = vst [vmem:[%s172 + $0xbc] sm:$0xf] %v854
        %919 = vst [vmem:[%s172 + $0xc0] sm:$0xf] %v855
        %920 = vst [vmem:[%s172 + $0xc4] sm:$0xf] %v856
        %921 = vst [vmem:[%s172 + $0xc8] sm:$0xf] %v857
        %922 = vst [vmem:[%s172 + $0xcc] sm:$0xf] %v858
        %923 = vst [vmem:[%s172 + $0xd0] sm:$0xf] %v859
        %924 = vst [vmem:[%s172 + $0xd4] sm:$0xf] %v860
        %925 = vst [vmem:[%s172 + $0xd8] sm:$0xf] %v861
        %926 = vst [vmem:[%s172 + $0xdc] sm:$0xf] %v862
        %927 = vst [vmem:[%s172 + $0xe0] sm:$0xf] %v863
        %928 = vst [vmem:[%s172 + $0xe4] sm:$0xf] %v864
        %929 = vst [vmem:[%s172 + $0xe8] sm:$0xf] %v865
        %930 = vst [vmem:[%s172 + $0xec] sm:$0xf] %v866
        %931 = vst [vmem:[%s172 + $0xf0] sm:$0xf] %v867
        %932 = vst [vmem:[%s172 + $0xf4] sm:$0xf] %v868
        %933 = vst [vmem:[%s172 + $0xf8] sm:$0xf] %v869
        %934 = vst [vmem:[%s172 + $0xfc] sm:$0xf] %v870
        %s935 = sand.u32 %s90, 1
        %s936 = sand.u32 %s90, 1
        %s937 = smul.addr %s936, 256
        %s938 = scalar_lea.vmem [#allocation2], %s937
        // Predicated region
        $region33: #{my_network_forward.5} parent=31 // pred_check
          %p939 = pneg %p100
        $region34: #{my_network_forward.5} parent=31 // pred_check_branch
          %941 = sbr.rel (%p939) target = $region36
        $region35: #{my_network_forward.5} parent=31 // pred_region
          %s942 = smul.u32 64, %s14
          %s943 = ssub.s32 133, %s942
          %p944 = scmp.lt.s32.totalorder %s943, 64
          %s945 = scalar_select %p944, %s943, 64
          %s946 = smul.u32 4, %s945
          %p947 = scmp.ne.s32.totalorder 0, %s946
          %s948 = smul.addr %s942, 4
          %s949 = scalar_lea.vmem %s3, %s948
          // Predicated region
          $region37: #{my_network_forward.5} parent=35 // pred_check
            %p950 = pneg %p947
          $region38: #{my_network_forward.5} parent=35 // pred_check_branch
            %952 = sbr.rel (%p950) target = $region40
          $region39: #{my_network_forward.5} parent=35 // pred_region
            // Predicated region
            $region41: #{my_network_forward.5} parent=39 // pred_check
              _
            $region42: #{my_network_forward.5} parent=39 // pred_check_branch
              %954 = sbr.rel target = $region44
            $region43: #{my_network_forward.5} parent=39 // pred_region
              // Predicated region
              $region63: #{my_network_forward.5} parent=43 // pred_check
                _
              $region64: #{my_network_forward.5} parent=43 // pred_check_branch
                %1066 = sbr.rel (0) target = $region66
              $region65: #{my_network_forward.5} parent=43 // pred_region
                %s1068 = ssub.s32 16, 1
                %s1069 = sshrl.u32 %s945, 5
                // While loop
                $region67: #{my_network_forward.5} parent=65 // loop_pre_header
                  _
                $region68: #{my_network_forward.5} parent=65 // loop_header
                  %s1071 = sphi 0, %s1073
                  %p1072 = scmp.ge.s32.totalorder %s1071, %s1069
                  %s1076 = sphi 0, %s1145
                  %s1077 = sphi %s938, %s1148
                  %s1078 = sphi %s949, %s1149
                $region69: #{my_network_forward.5} parent=65 // loop_header_branch
                  %1075 = sbr.rel (%p1072) target = $region73
                $region70: #{my_network_forward.5} parent=65 // loop_body
                  %v1079 = vld [vmem:[%s1077] sm:%s1068]
                  %1080 = vst [vmem:[%s1078] sm:%s1068] %v1079
                  %v1081 = vld [vmem:[%s1077 + $0x4] sm:%s1068]
                  %1082 = vst [vmem:[%s1078 + $0x4] sm:%s1068] %v1081
                  %v1083 = vld [vmem:[%s1077 + $0x8] sm:%s1068]
                  %1084 = vst [vmem:[%s1078 + $0x8] sm:%s1068] %v1083
                  %v1085 = vld [vmem:[%s1077 + $0xc] sm:%s1068]
                  %1086 = vst [vmem:[%s1078 + $0xc] sm:%s1068] %v1085
                  %v1087 = vld [vmem:[%s1077 + $0x10] sm:%s1068]
                  %1088 = vst [vmem:[%s1078 + $0x10] sm:%s1068] %v1087
                  %v1089 = vld [vmem:[%s1077 + $0x14] sm:%s1068]
                  %1090 = vst [vmem:[%s1078 + $0x14] sm:%s1068] %v1089
                  %v1091 = vld [vmem:[%s1077 + $0x18] sm:%s1068]
                  %1092 = vst [vmem:[%s1078 + $0x18] sm:%s1068] %v1091
                  %v1093 = vld [vmem:[%s1077 + $0x1c] sm:%s1068]
                  %1094 = vst [vmem:[%s1078 + $0x1c] sm:%s1068] %v1093
                  %v1095 = vld [vmem:[%s1077 + $0x20] sm:%s1068]
                  %1096 = vst [vmem:[%s1078 + $0x20] sm:%s1068] %v1095
                  %v1097 = vld [vmem:[%s1077 + $0x24] sm:%s1068]
                  %1098 = vst [vmem:[%s1078 + $0x24] sm:%s1068] %v1097
                  %v1099 = vld [vmem:[%s1077 + $0x28] sm:%s1068]
                  %1100 = vst [vmem:[%s1078 + $0x28] sm:%s1068] %v1099
                  %v1101 = vld [vmem:[%s1077 + $0x2c] sm:%s1068]
                  %1102 = vst [vmem:[%s1078 + $0x2c] sm:%s1068] %v1101
                  %v1103 = vld [vmem:[%s1077 + $0x30] sm:%s1068]
                  %1104 = vst [vmem:[%s1078 + $0x30] sm:%s1068] %v1103
                  %v1105 = vld [vmem:[%s1077 + $0x34] sm:%s1068]
                  %1106 = vst [vmem:[%s1078 + $0x34] sm:%s1068] %v1105
                  %v1107 = vld [vmem:[%s1077 + $0x38] sm:%s1068]
                  %1108 = vst [vmem:[%s1078 + $0x38] sm:%s1068] %v1107
                  %v1109 = vld [vmem:[%s1077 + $0x3c] sm:%s1068]
                  %1110 = vst [vmem:[%s1078 + $0x3c] sm:%s1068] %v1109
                  %v1111 = vld [vmem:[%s1077 + $0x40] sm:%s1068]
                  %1112 = vst [vmem:[%s1078 + $0x40] sm:%s1068] %v1111
                  %v1113 = vld [vmem:[%s1077 + $0x44] sm:%s1068]
                  %1114 = vst [vmem:[%s1078 + $0x44] sm:%s1068] %v1113
                  %v1115 = vld [vmem:[%s1077 + $0x48] sm:%s1068]
                  %1116 = vst [vmem:[%s1078 + $0x48] sm:%s1068] %v1115
                  %v1117 = vld [vmem:[%s1077 + $0x4c] sm:%s1068]
                  %1118 = vst [vmem:[%s1078 + $0x4c] sm:%s1068] %v1117
                  %v1119 = vld [vmem:[%s1077 + $0x50] sm:%s1068]
                  %1120 = vst [vmem:[%s1078 + $0x50] sm:%s1068] %v1119
                  %v1121 = vld [vmem:[%s1077 + $0x54] sm:%s1068]
                  %1122 = vst [vmem:[%s1078 + $0x54] sm:%s1068] %v1121
                  %v1123 = vld [vmem:[%s1077 + $0x58] sm:%s1068]
                  %1124 = vst [vmem:[%s1078 + $0x58] sm:%s1068] %v1123
                  %v1125 = vld [vmem:[%s1077 + $0x5c] sm:%s1068]
                  %1126 = vst [vmem:[%s1078 + $0x5c] sm:%s1068] %v1125
                  %v1127 = vld [vmem:[%s1077 + $0x60] sm:%s1068]
                  %1128 = vst [vmem:[%s1078 + $0x60] sm:%s1068] %v1127
                  %v1129 = vld [vmem:[%s1077 + $0x64] sm:%s1068]
                  %1130 = vst [vmem:[%s1078 + $0x64] sm:%s1068] %v1129
                  %v1131 = vld [vmem:[%s1077 + $0x68] sm:%s1068]
                  %1132 = vst [vmem:[%s1078 + $0x68] sm:%s1068] %v1131
                  %v1133 = vld [vmem:[%s1077 + $0x6c] sm:%s1068]
                  %1134 = vst [vmem:[%s1078 + $0x6c] sm:%s1068] %v1133
                  %v1135 = vld [vmem:[%s1077 + $0x70] sm:%s1068]
                  %1136 = vst [vmem:[%s1078 + $0x70] sm:%s1068] %v1135
                  %v1137 = vld [vmem:[%s1077 + $0x74] sm:%s1068]
                  %1138 = vst [vmem:[%s1078 + $0x74] sm:%s1068] %v1137
                  %v1139 = vld [vmem:[%s1077 + $0x78] sm:%s1068]
                  %1140 = vst [vmem:[%s1078 + $0x78] sm:%s1068] %v1139
                  %v1141 = vld [vmem:[%s1077 + $0x7c] sm:%s1068]
                  %1142 = vst [vmem:[%s1078 + $0x7c] sm:%s1068] %v1141
                  %s1143 = sadd.s32 1, %s1076
                  %p1144 = scmp.ge.s32.totalorder %s1143, %s1069
                  %s1145 = scalar_select %p1144, 0, %s1143
                  %s1146 = smul.u32 %s1145, 128
                  %s1147 = smul.u32 %s1145, 128
                  %s1148 = scalar_lea.vmem %s938, %s1146 [#allocation2]
                  %s1149 = scalar_lea.vmem %s949, %s1147
                $region71: #{my_network_forward.5} parent=65 // loop_footer
                  %s1073 = sadd.s32 %s1071, 1
                $region72: #{my_network_forward.5} parent=65 // loop_footer_branch
                  %1070 = sbr.rel target = $region68
                $region73: #{my_network_forward.5} parent=65 // loop_exit
                  _
                %s1150 = sshrl.u32 %s945, 5
                %s1151 = sand.u32 %s945, 31
                %s1152 = smul.u32 %s1150, 32
                %s1153 = smul.u32 4, %s1152
                %s1154 = scalar_lea.vmem %s938, %s1153 [#allocation2]
                %s1155 = smul.u32 4, %s1152
                %s1156 = scalar_lea.vmem %s949, %s1155
                // While loop
                $region74: #{my_network_forward.5} parent=65 // loop_pre_header
                  _
                $region75: #{my_network_forward.5} parent=65 // loop_header
                  %s1158 = sphi 0, %s1160
                  %p1159 = scmp.ge.s32.totalorder %s1158, %s1151
                  %s1163 = sphi 0, %s1170
                  %s1164 = sphi %s1154, %s1173
                  %s1165 = sphi %s1156, %s1174
                $region76: #{my_network_forward.5} parent=65 // loop_header_branch
                  %1162 = sbr.rel (%p1159) target = $region80
                $region77: #{my_network_forward.5} parent=65 // loop_body
                  %v1166 = vld [vmem:[%s1164] sm:%s1068]
                  %1167 = vst [vmem:[%s1165] sm:%s1068] %v1166
                  %s1168 = sadd.s32 1, %s1163
                  %p1169 = scmp.ge.s32.totalorder %s1168, %s1151
                  %s1170 = scalar_select %p1169, 0, %s1168
                  %s1171 = smul.u32 %s1170, 4
                  %s1172 = smul.u32 %s1170, 4
                  %s1173 = scalar_lea.vmem %s1154, %s1171 [#allocation2]
                  %s1174 = scalar_lea.vmem %s1156, %s1172
                $region78: #{my_network_forward.5} parent=65 // loop_footer
                  %s1160 = sadd.s32 %s1158, 1
                $region79: #{my_network_forward.5} parent=65 // loop_footer_branch
                  %1157 = sbr.rel target = $region75
                $region80: #{my_network_forward.5} parent=65 // loop_exit
                  _
              $region66: #{my_network_forward.5} parent=43 // pred_fallthru
                _
            $region44: #{my_network_forward.5} parent=39 // pred_fallthru
              _
            // Predicated region
            $region45: #{my_network_forward.5} parent=39 // pred_check
              _
            $region46: #{my_network_forward.5} parent=39 // pred_check_branch
              %956 = sbr.rel (0) target = $region48
            $region47: #{my_network_forward.5} parent=39 // pred_region
              %s958 = ssub.s32 16, 1
              %s959 = sshrl.u32 %s945, 5
              // While loop
              $region49: #{my_network_forward.5} parent=47 // loop_pre_header
                _
              $region50: #{my_network_forward.5} parent=47 // loop_header
                %s961 = sphi 0, %s963
                %p962 = scmp.ge.s32.totalorder %s961, %s959
                %s966 = sphi 0, %s1035
                %s967 = sphi %s938, %s1038
                %s968 = sphi %s949, %s1039
              $region51: #{my_network_forward.5} parent=47 // loop_header_branch
                %965 = sbr.rel (%p962) target = $region55
              $region52: #{my_network_forward.5} parent=47 // loop_body
                %v969 = vld [vmem:[%s967] sm:%s958]
                %970 = vst [vmem:[%s968] sm:%s958] %v969
                %v971 = vld [vmem:[%s967 + $0x4] sm:%s958]
                %972 = vst [vmem:[%s968 + $0x4] sm:%s958] %v971
                %v973 = vld [vmem:[%s967 + $0x8] sm:%s958]
                %974 = vst [vmem:[%s968 + $0x8] sm:%s958] %v973
                %v975 = vld [vmem:[%s967 + $0xc] sm:%s958]
                %976 = vst [vmem:[%s968 + $0xc] sm:%s958] %v975
                %v977 = vld [vmem:[%s967 + $0x10] sm:%s958]
                %978 = vst [vmem:[%s968 + $0x10] sm:%s958] %v977
                %v979 = vld [vmem:[%s967 + $0x14] sm:%s958]
                %980 = vst [vmem:[%s968 + $0x14] sm:%s958] %v979
                %v981 = vld [vmem:[%s967 + $0x18] sm:%s958]
                %982 = vst [vmem:[%s968 + $0x18] sm:%s958] %v981
                %v983 = vld [vmem:[%s967 + $0x1c] sm:%s958]
                %984 = vst [vmem:[%s968 + $0x1c] sm:%s958] %v983
                %v985 = vld [vmem:[%s967 + $0x20] sm:%s958]
                %986 = vst [vmem:[%s968 + $0x20] sm:%s958] %v985
                %v987 = vld [vmem:[%s967 + $0x24] sm:%s958]
                %988 = vst [vmem:[%s968 + $0x24] sm:%s958] %v987
                %v989 = vld [vmem:[%s967 + $0x28] sm:%s958]
                %990 = vst [vmem:[%s968 + $0x28] sm:%s958] %v989
                %v991 = vld [vmem:[%s967 + $0x2c] sm:%s958]
                %992 = vst [vmem:[%s968 + $0x2c] sm:%s958] %v991
                %v993 = vld [vmem:[%s967 + $0x30] sm:%s958]
                %994 = vst [vmem:[%s968 + $0x30] sm:%s958] %v993
                %v995 = vld [vmem:[%s967 + $0x34] sm:%s958]
                %996 = vst [vmem:[%s968 + $0x34] sm:%s958] %v995
                %v997 = vld [vmem:[%s967 + $0x38] sm:%s958]
                %998 = vst [vmem:[%s968 + $0x38] sm:%s958] %v997
                %v999 = vld [vmem:[%s967 + $0x3c] sm:%s958]
                %1000 = vst [vmem:[%s968 + $0x3c] sm:%s958] %v999
                %v1001 = vld [vmem:[%s967 + $0x40] sm:%s958]
                %1002 = vst [vmem:[%s968 + $0x40] sm:%s958] %v1001
                %v1003 = vld [vmem:[%s967 + $0x44] sm:%s958]
                %1004 = vst [vmem:[%s968 + $0x44] sm:%s958] %v1003
                %v1005 = vld [vmem:[%s967 + $0x48] sm:%s958]
                %1006 = vst [vmem:[%s968 + $0x48] sm:%s958] %v1005
                %v1007 = vld [vmem:[%s967 + $0x4c] sm:%s958]
                %1008 = vst [vmem:[%s968 + $0x4c] sm:%s958] %v1007
                %v1009 = vld [vmem:[%s967 + $0x50] sm:%s958]
                %1010 = vst [vmem:[%s968 + $0x50] sm:%s958] %v1009
                %v1011 = vld [vmem:[%s967 + $0x54] sm:%s958]
                %1012 = vst [vmem:[%s968 + $0x54] sm:%s958] %v1011
                %v1013 = vld [vmem:[%s967 + $0x58] sm:%s958]
                %1014 = vst [vmem:[%s968 + $0x58] sm:%s958] %v1013
                %v1015 = vld [vmem:[%s967 + $0x5c] sm:%s958]
                %1016 = vst [vmem:[%s968 + $0x5c] sm:%s958] %v1015
                %v1017 = vld [vmem:[%s967 + $0x60] sm:%s958]
                %1018 = vst [vmem:[%s968 + $0x60] sm:%s958] %v1017
                %v1019 = vld [vmem:[%s967 + $0x64] sm:%s958]
                %1020 = vst [vmem:[%s968 + $0x64] sm:%s958] %v1019
                %v1021 = vld [vmem:[%s967 + $0x68] sm:%s958]
                %1022 = vst [vmem:[%s968 + $0x68] sm:%s958] %v1021
                %v1023 = vld [vmem:[%s967 + $0x6c] sm:%s958]
                %1024 = vst [vmem:[%s968 + $0x6c] sm:%s958] %v1023
                %v1025 = vld [vmem:[%s967 + $0x70] sm:%s958]
                %1026 = vst [vmem:[%s968 + $0x70] sm:%s958] %v1025
                %v1027 = vld [vmem:[%s967 + $0x74] sm:%s958]
                %1028 = vst [vmem:[%s968 + $0x74] sm:%s958] %v1027
                %v1029 = vld [vmem:[%s967 + $0x78] sm:%s958]
                %1030 = vst [vmem:[%s968 + $0x78] sm:%s958] %v1029
                %v1031 = vld [vmem:[%s967 + $0x7c] sm:%s958]
                %1032 = vst [vmem:[%s968 + $0x7c] sm:%s958] %v1031
                %s1033 = sadd.s32 1, %s966
                %p1034 = scmp.ge.s32.totalorder %s1033, %s959
                %s1035 = scalar_select %p1034, 0, %s1033
                %s1036 = smul.u32 %s1035, 128
                %s1037 = smul.u32 %s1035, 128
                %s1038 = scalar_lea.vmem %s938, %s1036 [#allocation2]
                %s1039 = scalar_lea.vmem %s949, %s1037
              $region53: #{my_network_forward.5} parent=47 // loop_footer
                %s963 = sadd.s32 %s961, 1
              $region54: #{my_network_forward.5} parent=47 // loop_footer_branch
                %960 = sbr.rel target = $region50
              $region55: #{my_network_forward.5} parent=47 // loop_exit
                _
              %s1040 = sshrl.u32 %s945, 5
              %s1041 = sand.u32 %s945, 31
              %s1042 = smul.u32 %s1040, 32
              %s1043 = smul.u32 4, %s1042
              %s1044 = scalar_lea.vmem %s938, %s1043 [#allocation2]
              %s1045 = smul.u32 4, %s1042
              %s1046 = scalar_lea.vmem %s949, %s1045
              // While loop
              $region56: #{my_network_forward.5} parent=47 // loop_pre_header
                _
              $region57: #{my_network_forward.5} parent=47 // loop_header
                %s1048 = sphi 0, %s1050
                %p1049 = scmp.ge.s32.totalorder %s1048, %s1041
                %s1053 = sphi 0, %s1060
                %s1054 = sphi %s1044, %s1063
                %s1055 = sphi %s1046, %s1064
              $region58: #{my_network_forward.5} parent=47 // loop_header_branch
                %1052 = sbr.rel (%p1049) target = $region62
              $region59: #{my_network_forward.5} parent=47 // loop_body
                %v1056 = vld [vmem:[%s1054] sm:%s958]
                %1057 = vst [vmem:[%s1055] sm:%s958] %v1056
                %s1058 = sadd.s32 1, %s1053
                %p1059 = scmp.ge.s32.totalorder %s1058, %s1041
                %s1060 = scalar_select %p1059, 0, %s1058
                %s1061 = smul.u32 %s1060, 4
                %s1062 = smul.u32 %s1060, 4
                %s1063 = scalar_lea.vmem %s1044, %s1061 [#allocation2]
                %s1064 = scalar_lea.vmem %s1046, %s1062
              $region60: #{my_network_forward.5} parent=47 // loop_footer
                %s1050 = sadd.s32 %s1048, 1
              $region61: #{my_network_forward.5} parent=47 // loop_footer_branch
                %1047 = sbr.rel target = $region57
              $region62: #{my_network_forward.5} parent=47 // loop_exit
                _
            $region48: #{my_network_forward.5} parent=39 // pred_fallthru
              _
          $region40: #{my_network_forward.5} parent=35 // pred_fallthru
            _
          %1175 = vnop
        $region36: #{my_network_forward.5} parent=31 // pred_fallthru
          _
      $region32: #{my_network_forward.5} parent=5 // pred_fallthru
        _
      %p1176 = scmp.le.s32.totalorder 2, %s9
      // Predicated region
      $region81: #{my_network_forward.5} parent=5 // pred_check
        %p1177 = pneg %p1176
      $region82: #{my_network_forward.5} parent=5 // pred_check_branch
        %1179 = sbr.rel (%p1177) target = $region84
      $region83: #{my_network_forward.5} parent=5 // pred_region
        %s1180 = ssub.s32 %s9, 2
        // Predicated region
        $region85: #{my_network_forward.5} parent=83 // pred_check
          %p1181 = pneg %p106
        $region86: #{my_network_forward.5} parent=83 // pred_check_branch
          %1183 = sbr.rel (%p1181) target = $region88
        $region87: #{my_network_forward.5} parent=83 // pred_region
          %s1184 = sand.u32 %s91, 1
          %s1185 = sand.u32 %s91, 1
          %s1186 = smul.addr %s1185, 256
          %s1187 = scalar_lea.vmem [#allocation2], %s1186
        $region88: #{my_network_forward.5} parent=83 // pred_fallthru
          _
      $region84: #{my_network_forward.5} parent=5 // pred_fallthru
        _
    $region6: #{my_network_forward.5} parent=1 // loop_footer
      %s13 = sadd.s32 1, %s9
    $region7: #{my_network_forward.5} parent=1 // loop_footer_branch
      %8 = sbr.rel target = $region3
    $region8: #{my_network_forward.5} parent=1 // loop_exit
      _

// kernel: my_network_forward.6
$region0: #{my_network_forward.6}
  #allocation0 [shape = 'u32[]', space=smem, size = 0x4, offset = 0x4, fixed_abs, tag = 'smem constant byte address 0x4 - core index']
  #allocation1 [shape = 'u32[72,128]{1,0:T(1,128)}', space=vmem, size = 0x9000, scoped, tag = 'internal scratch']
  %s0 = inlined_call_operand.vmem [shape: bf16[242,224], index: 0, kind: input, shape index: {}]
  %s1 = inlined_call_operand.vmem [shape: bf16[224,128], index: 1, kind: input, shape index: {}]
  %s2 = inlined_call_operand.vmem [shape: f32[1,128], index: 2, kind: input, shape index: {}]
  %s3 = inlined_call_operand.vmem [shape: bf16[242,128], index: 3, kind: output, shape index: {}]
  %s4 = sld [smem:[#allocation0]]
  $region89: #{my_network_forward.6} parent=0
    _
  %s6 = ssub.s32 1, %s4
  %s7 = scalar_select 0, %s6, %s4
  $region1: #{my_network_forward.6} parent=0
    #allocation2 [shape = 'u8[65536]{0}', space=vmem, size = 0x10000, scoped, tag = 'output window, operand 0']
    loop: start=0, step=1, limit=4
    $region2: #{my_network_forward.6} parent=1 // loop_pre_header
      _
    $region3: #{my_network_forward.6} parent=1 // loop_header
      %s9 = sphi 0, %s13
      %p10 = scmp.ge.s32.totalorder %s9, 4
      %s19 = sphi 0, %s21
      %s22 = sphi 0, %s19
      %s23 = sphi 0, %s22
      %s39 = sphi 0, %s23
      %s43 = sphi 0, %s43
      %s45 = sphi 0, %s43
      %s46 = sphi 0, %s45
      %s60 = sphi 0, %s46
      %s64 = sphi 0, %s64
      %s66 = sphi 0, %s64
      %s67 = sphi 0, %s66
      %s81 = sphi 0, %s67
      %s87 = sphi 0, %s89
      %s90 = sphi 0, %s87
      %s91 = sphi 0, %s90
      %s107 = sphi 0, %s91
    $region4: #{my_network_forward.6} parent=1 // loop_header_branch
      %12 = sbr.rel (%p10) target = $region8
    $region5: #{my_network_forward.6} parent=1 // loop_body
      %s14 = ssub.s32 %s9, 1
      %s15 = ssub.s32 %s9, 2
      %s16 = sadd.s32 %s9, 1
      %s17 = ssub.s32 %s9, %s16
      %p18 = scmp.eq.s32.totalorder %s17, 0
      %s20 = sadd.s32 %s19, 1
      %s21 = scalar_select %p18, %s19, %s20
      %p24 = pneg %p18
      %p25 = scmp.eq.s32.totalorder %s9, 1
      %p26 = por %p24, %p25
      %p27 = scmp.ne.s32.totalorder %s19, %s22
      %p28 = scmp.eq.s32.totalorder %s9, 0
      %p29 = por %p27, %p28
      %p30 = scmp.ne.s32.totalorder %s19, %s22
      %p31 = scmp.eq.s32.totalorder %s14, 1
      %p32 = por %p30, %p31
      %p33 = scmp.ne.s32.totalorder %s22, %s23
      %p34 = scmp.eq.s32.totalorder %s14, 0
      %p35 = por %p33, %p34
      %p36 = scmp.ne.s32.totalorder %s22, %s23
      %p37 = scmp.eq.s32.totalorder %s15, 1
      %p38 = por %p36, %p37
      %p40 = scmp.ne.s32.totalorder %s23, %s39
      %p41 = scmp.eq.s32.totalorder %s15, 0
      %p42 = por %p40, %p41
      %s44 = sadd.s32 %s43, 1
      %p47 = scmp.eq.s32.totalorder %s9, 1
      %p48 = scmp.ne.s32.totalorder %s43, %s45
      %p49 = scmp.eq.s32.totalorder %s9, 0
      %p50 = por %p48, %p49
      %p51 = scmp.ne.s32.totalorder %s43, %s45
      %p52 = scmp.eq.s32.totalorder %s14, 1
      %p53 = por %p51, %p52
      %p54 = scmp.ne.s32.totalorder %s45, %s46
      %p55 = scmp.eq.s32.totalorder %s14, 0
      %p56 = por %p54, %p55
      %p57 = scmp.ne.s32.totalorder %s45, %s46
      %p58 = scmp.eq.s32.totalorder %s15, 1
      %p59 = por %p57, %p58
      %p61 = scmp.ne.s32.totalorder %s46, %s60
      %p62 = scmp.eq.s32.totalorder %s15, 0
      %p63 = por %p61, %p62
      %s65 = sadd.s32 %s64, 1
      %p68 = scmp.eq.s32.totalorder %s9, 1
      %p69 = scmp.ne.s32.totalorder %s64, %s66
      %p70 = scmp.eq.s32.totalorder %s9, 0
      %p71 = por %p69, %p70
      %p72 = scmp.ne.s32.totalorder %s64, %s66
      %p73 = scmp.eq.s32.totalorder %s14, 1
      %p74 = por %p72, %p73
      %p75 = scmp.ne.s32.totalorder %s66, %s67
      %p76 = scmp.eq.s32.totalorder %s14, 0
      %p77 = por %p75, %p76
      %p78 = scmp.ne.s32.totalorder %s66, %s67
      %p79 = scmp.eq.s32.totalorder %s15, 1
      %p80 = por %p78, %p79
      %p82 = scmp.ne.s32.totalorder %s67, %s81
      %p83 = scmp.eq.s32.totalorder %s15, 0
      %p84 = por %p82, %p83
      %s85 = ssub.s32 %s9, %s16
      %p86 = scmp.eq.s32.totalorder %s85, 0
      %s88 = sadd.s32 %s87, 1
      %s89 = scalar_select %p86, %s87, %s88
      %p92 = pneg %p86
      %p93 = scmp.eq.s32.totalorder %s9, 1
      %p94 = por %p92, %p93
      %p95 = scmp.ne.s32.totalorder %s87, %s90
      %p96 = scmp.eq.s32.totalorder %s9, 0
      %p97 = por %p95, %p96
      %p98 = scmp.ne.s32.totalorder %s87, %s90
      %p99 = scmp.eq.s32.totalorder %s14, 1
      %p100 = por %p98, %p99
      %p101 = scmp.ne.s32.totalorder %s90, %s91
      %p102 = scmp.eq.s32.totalorder %s14, 0
      %p103 = por %p101, %p102
      %p104 = scmp.ne.s32.totalorder %s90, %s91
      %p105 = scmp.eq.s32.totalorder %s15, 1
      %p106 = por %p104, %p105
      %p108 = scmp.ne.s32.totalorder %s91, %s107
      %p109 = scmp.eq.s32.totalorder %s15, 0
      %p110 = por %p108, %p109
      %p111 = scmp.le.s32.totalorder 1, %s9
      %p112 = scmp.lt.s32.totalorder %s9, 3
      %p113 = pnand %p111, %p112
      %p114 = pneg %p113
      // Predicated region
      $region9: #{my_network_forward.6} parent=5 // pred_check
        _
      $region10: #{my_network_forward.6} parent=5 // pred_check_branch
        %116 = sbr.rel (%p113) target = $region12
      $region11: #{my_network_forward.6} parent=5 // pred_region
        %s117 = ssub.s32 %s9, 1
        // Predicated region
        $region13: #{my_network_forward.6} parent=11 // pred_check
          %p118 = pneg %p56
        $region14: #{my_network_forward.6} parent=11 // pred_check_branch
          %120 = sbr.rel (%p118) target = $region16
        $region15: #{my_network_forward.6} parent=11 // pred_region
          _
        $region16: #{my_network_forward.6} parent=11 // pred_fallthru
          _
        // Predicated region
        $region17: #{my_network_forward.6} parent=11 // pred_check
          %p121 = pneg %p77
        $region18: #{my_network_forward.6} parent=11 // pred_check_branch
          %123 = sbr.rel (%p121) target = $region20
        $region19: #{my_network_forward.6} parent=11 // pred_region
          _
        $region20: #{my_network_forward.6} parent=11 // pred_fallthru
          _
      $region12: #{my_network_forward.6} parent=5 // pred_fallthru
        _
      %p124 = scmp.lt.s32.totalorder %s9, 2
      // Predicated region
      $region21: #{my_network_forward.6} parent=5 // pred_check
        %p125 = pneg %p124
      $region22: #{my_network_forward.6} parent=5 // pred_check_branch
        %127 = sbr.rel (%p125) target = $region24
      $region23: #{my_network_forward.6} parent=5 // pred_region
        // Predicated region
        $region25: #{my_network_forward.6} parent=23 // pred_check
          %p128 = pneg %p29
        $region26: #{my_network_forward.6} parent=23 // pred_check_branch
          %130 = sbr.rel (%p128) target = $region28
        $region27: #{my_network_forward.6} parent=23 // pred_region
          %s131 = smul.u32 16, %s9
          %s132 = ssub.s32 31, %s131
          %p133 = scmp.lt.s32.totalorder %s132, 16
          %s134 = scalar_select %p133, %s132, 16
          %s135 = smul.u32 4, %s134
          %s136 = smul.u32 %s135, 2
          %p137 = scmp.lt.s32.totalorder %s131, 30
          %s138 = scalar_select %p137, %s131, 30
          %s139 = smul.addr %s138, 2
          %s140 = smul.addr %s139, 4
          %s141 = scalar_lea.vmem %s0, %s140
          %s142 = smul.u32 16, %s9
          %s143 = ssub.s32 31, %s142
          %p144 = scmp.lt.s32.totalorder %s143, 16
          %s145 = scalar_select %p144, %s143, 16
          %s146 = smul.u32 4, %s145
          %s147 = smul.u32 %s146, 2
        $region28: #{my_network_forward.6} parent=23 // pred_fallthru
          _
      $region24: #{my_network_forward.6} parent=5 // pred_fallthru
        _
      %p148 = scmp.le.s32.totalorder 1, %s9
      %p149 = scmp.lt.s32.totalorder %s9, 3
      %p150 = pnand %p148, %p149
      %p151 = pneg %p150
      // Predicated region
      $region29: #{my_network_forward.6} parent=5 // pred_check
        _
      $region30: #{my_network_forward.6} parent=5 // pred_check_branch
        %153 = sbr.rel (%p150) target = $region32
      $region31: #{my_network_forward.6} parent=5 // pred_region
        %s154 = ssub.s32 %s9, 1
        %s155 = smul.u32 16, %s14
        %s156 = ssub.s32 31, %s155
        %p157 = scmp.lt.s32.totalorder %s156, 16
        %s158 = scalar_select %p157, %s156, 16
        %s159 = smul.u32 4, %s158
        %s160 = smul.u32 %s159, 2
        %p161 = scmp.lt.s32.totalorder %s155, 30
        %s162 = scalar_select %p161, %s155, 30
        %s163 = smul.addr %s162, 2
        %s164 = smul.addr %s163, 4
        %s165 = scalar_lea.vmem %s0, %s164
        %p166 = pneg %p35
        %p167 = pneg %p32
        %p168 = pneg %p56
        %p169 = pneg %p53
        %p170 = pneg %p77
        %p171 = pneg %p74
        %p172 = pneg %p103
        %p173 = pneg %p100
        %s174 = sand.u32 %s90, 1
        %s175 = sand.u32 %s90, 1
        %s176 = smul.addr %s175, 64
        %s177 = scalar_lea.vmem [#allocation2], %s176
        %s178 = smul.u32 16, %s14
        %s179 = ssub.s32 31, %s178
        %p180 = scmp.lt.s32.totalorder %s179, 16
        %s181 = scalar_select %p180, %s179, 16
        %s182 = smul.u32 4, %s181
        %s183 = smul.u32 %s182, 2
        %p184 = scmp.lt.s32.totalorder %s178, 30
        %s185 = scalar_select %p184, %s178, 30
        %s186 = smul.addr %s185, 2
        %s187 = smul.addr %s186, 4
        %s188 = scalar_lea.vmem %s0, %s187
        %s189 = smul.u32 16, %s14
        %s190 = ssub.s32 31, %s189
        %p191 = scmp.lt.s32.totalorder %s190, 16
        %s192 = scalar_select %p191, %s190, 16
        %s193 = smul.u32 4, %s192
        %s194 = smul.u32 %s193, 2
        %s195 = smul.u32 16, %s14
        %s196 = ssub.s32 31, %s195
        %p197 = scmp.lt.s32.totalorder %s196, 16
        %s198 = scalar_select %p197, %s196, 16
        %s199 = smul.u32 4, %s198
        %v201 = vld [vmem:[%s188] sm:$0xff]
        %v202 = vld [vmem:[%s188 + $0x8] sm:$0xff]
        %v203 = vld [vmem:[%s188 + $0x10] sm:$0xff]
        %v204 = vld [vmem:[%s188 + $0x18] sm:$0xff]
        %v205 = vld [vmem:[%s188 + $0x20] sm:$0xff]
        %v206 = vld [vmem:[%s188 + $0x28] sm:$0xff]
        %v207 = vld [vmem:[%s188 + $0x30] sm:$0xff]
        %v208 = vld [vmem:[%s188 + $0x38] sm:$0xff]
        %v209 = vld [vmem:[%s188 + $0x40] sm:$0xff]
        %v210 = vld [vmem:[%s188 + $0x48] sm:$0xff]
        %v211 = vld [vmem:[%s188 + $0x50] sm:$0xff]
        %v212 = vld [vmem:[%s188 + $0x58] sm:$0xff]
        %v213 = vld [vmem:[%s188 + $0x60] sm:$0xff]
        %v214 = vld [vmem:[%s188 + $0x68] sm:$0xff]
        %v215 = vld [vmem:[%s188 + $0x70] sm:$0xff]
        %v216 = vld [vmem:[%s188 + $0x78] sm:$0xff]
        %v217 = vld [vmem:[%s1] sm:$0xf]
        %v218 = vld [vmem:[%s1 + $0x4] sm:$0xf]
        %v219 = vld [vmem:[%s1 + $0x8] sm:$0xf]
        %v220 = vld [vmem:[%s1 + $0xc] sm:$0xf]
        %v221 = vld [vmem:[%s1 + $0x10] sm:$0xf]
        %v222 = vld [vmem:[%s1 + $0x14] sm:$0xf]
        %v223 = vld [vmem:[%s1 + $0x18] sm:$0xf]
        %v224 = vld [vmem:[%s1 + $0x1c] sm:$0xf]
        %v225 = vld [vmem:[%s1 + $0x20] sm:$0xf]
        %v226 = vld [vmem:[%s1 + $0x24] sm:$0xf]
        %v227 = vld [vmem:[%s1 + $0x28] sm:$0xf]
        %v228 = vld [vmem:[%s1 + $0x2c] sm:$0xf]
        %v229 = vld [vmem:[%s1 + $0x30] sm:$0xf]
        %v230 = vld [vmem:[%s1 + $0x34] sm:$0xf]
        %v231 = vld [vmem:[%s1 + $0x38] sm:$0xf]
        %v232 = vld [vmem:[%s1 + $0x3c] sm:$0xf]
        %v233 = vld [vmem:[%s1 + $0x40] sm:$0xf]
        %v234 = vld [vmem:[%s1 + $0x44] sm:$0xf]
        %v235 = vld [vmem:[%s1 + $0x48] sm:$0xf]
        %v236 = vld [vmem:[%s1 + $0x4c] sm:$0xf]
        %v237 = vld [vmem:[%s1 + $0x50] sm:$0xf]
        %v238 = vld [vmem:[%s1 + $0x54] sm:$0xf]
        %v239 = vld [vmem:[%s1 + $0x58] sm:$0xf]
        %v240 = vld [vmem:[%s1 + $0x5c] sm:$0xf]
        %v241 = vld [vmem:[%s1 + $0x60] sm:$0xf]
        %v242 = vld [vmem:[%s1 + $0x64] sm:$0xf]
        %v243 = vld [vmem:[%s1 + $0x68] sm:$0xf]
        %v244 = vld [vmem:[%s1 + $0x6c] sm:$0xf]
        %v245 = vld [vmem:[%s2] sm:$0x1]
        %v247 = vperm.slane %v245, 0
        %v265 = vunpack.c.l.b16 %v201
        %v266 = vunpack.c.h.b16 %v201
        %v267 = vunpack.c.l.b16 %v202
        %v268 = vunpack.c.h.b16 %v202
        %v269 = vunpack.c.l.b16 %v203
        %v270 = vunpack.c.h.b16 %v203
        %v271 = vunpack.c.l.b16 %v204
        %v272 = vunpack.c.h.b16 %v204
        %v273 = vunpack.c.l.b16 %v205
        %v274 = vunpack.c.h.b16 %v205
        %v275 = vunpack.c.l.b16 %v206
        %v276 = vunpack.c.h.b16 %v206
        %v277 = vunpack.c.l.b16 %v207
        %v278 = vunpack.c.h.b16 %v207
        %v279 = vunpack.c.l.b16 %v208
        %v280 = vunpack.c.h.b16 %v208
        %v281 = vunpack.c.l.b16 %v209
        %v282 = vunpack.c.h.b16 %v209
        %v283 = vunpack.c.l.b16 %v210
        %v284 = vunpack.c.h.b16 %v210
        %v285 = vunpack.c.l.b16 %v211
        %v286 = vunpack.c.h.b16 %v211
        %v287 = vunpack.c.l.b16 %v212
        %v288 = vunpack.c.h.b16 %v212
        %v289 = vunpack.c.l.b16 %v213
        %v290 = vunpack.c.h.b16 %v213
        %v291 = vunpack.c.l.b16 %v214
        %v292 = vunpack.c.h.b16 %v214
        %v293 = vunpack.c.l.b16 %v215
        %v294 = vunpack.c.h.b16 %v215
        %v295 = vunpack.c.l.b16 %v216
        %v296 = vunpack.c.h.b16 %v216
        %v297 = vpack.c.b16 %v267, %v265
        %v298 = vpack.c.b16 %v268, %v266
        %v299 = vpack.c.b16 %v271, %v269
        %v300 = vpack.c.b16 %v272, %v270
        %v301 = vpack.c.b16 %v275, %v273
        %v302 = vpack.c.b16 %v276, %v274
        %v303 = vpack.c.b16 %v279, %v277
        %v304 = vpack.c.b16 %v280, %v278
        %v305 = vpack.c.b16 %v283, %v281
        %v306 = vpack.c.b16 %v284, %v282
        %v307 = vpack.c.b16 %v287, %v285
        %v308 = vpack.c.b16 %v288, %v286
        %v309 = vpack.c.b16 %v291, %v289
        %v310 = vpack.c.b16 %v292, %v290
        %v311 = vpack.c.b16 %v295, %v293
        %v312 = vpack.c.b16 %v296, %v294
        %v349 = vunpack.c.l.b16 %v217
        %v350 = vunpack.c.l.b16 %v218
        %v351 = vunpack.c.l.b16 %v219
        %v352 = vunpack.c.l.b16 %v220
        %v353 = vunpack.c.l.b16 %v221
        %v354 = vunpack.c.l.b16 %v222
        %v355 = vunpack.c.l.b16 %v223
        %v356 = vunpack.c.l.b16 %v224
        %v357 = vunpack.c.l.b16 %v225
        %v358 = vunpack.c.l.b16 %v226
        %v359 = vunpack.c.l.b16 %v227
        %v360 = vunpack.c.l.b16 %v228
        %v361 = vunpack.c.l.b16 %v229
        %v362 = vunpack.c.l.b16 %v230
        %v363 = vunpack.c.l.b16 %v231
        %v364 = vunpack.c.l.b16 %v232
        %v365 = vunpack.c.l.b16 %v233
        %v366 = vunpack.c.l.b16 %v234
        %v367 = vunpack.c.l.b16 %v235
        %v368 = vunpack.c.l.b16 %v236
        %v369 = vunpack.c.l.b16 %v237
        %v370 = vunpack.c.l.b16 %v238
        %v371 = vunpack.c.l.b16 %v239
        %v372 = vunpack.c.l.b16 %v240
        %v373 = vunpack.c.l.b16 %v241
        %v374 = vunpack.c.l.b16 %v242
        %v375 = vunpack.c.l.b16 %v243
        %v376 = vunpack.c.l.b16 %v244
        %v377 = vpack.c.b16 %v350, %v349
        %v378 = vpack.c.b16 %v352, %v351
        %v379 = vpack.c.b16 %v354, %v353
        %v380 = vpack.c.b16 %v356, %v355
        %v381 = vpack.c.b16 %v358, %v357
        %v382 = vpack.c.b16 %v360, %v359
        %v383 = vpack.c.b16 %v362, %v361
        %v384 = vpack.c.b16 %v364, %v363
        %v385 = vpack.c.b16 %v366, %v365
        %v386 = vpack.c.b16 %v368, %v367
        %v387 = vpack.c.b16 %v370, %v369
        %v388 = vpack.c.b16 %v372, %v371
        %v389 = vpack.c.b16 %v374, %v373
        %v390 = vpack.c.b16 %v376, %v375
        %vm405 = vcmask 785408
        %v407 = vsel %vm405, %v298, 0
        %v410 = vsel %vm405, %v300, 0
        %v413 = vsel %vm405, %v302, 0
        %v416 = vsel %vm405, %v304, 0
        %v419 = vsel %vm405, %v306, 0
        %v422 = vsel %vm405, %v308, 0
        %v425 = vsel %vm405, %v310, 0
        %v428 = vsel %vm405, %v312, 0
        %430 = vmatpush.bf16.msra.mxu0 %v384
        %431 = vmatpush.bf16.msra.mxu0 %v383
        %432 = vmatpush.bf16.msra.mxu0 %v382
        %433 = vmatpush.bf16.msra.mxu0 %v381
        %434 = vmatpush.bf16.msra.mxu0 %v380
        %435 = vmatpush.bf16.msra.mxu0 %v379
        %436 = vmatpush.bf16.msra.mxu0 %v378
        %437 = vmatpush.bf16.msra.mxu0 %v377
        %438 = vmatmul.bf16.gmra.mxu0 %v297
        %v439 = vpop.f32.mrf.mxu0
        %v440 = vadd.f32 %v247, %v439
        %v441 = vpop.f32.mrf.mxu0
        %v442 = vadd.f32 %v247, %v441
        %443 = vmatmul.bf16.gmra.mxu0 %v299
        %v444 = vpop.f32.mrf.mxu0
        %v445 = vadd.f32 %v247, %v444
        %v446 = vpop.f32.mrf.mxu0
        %v447 = vadd.f32 %v247, %v446
        %448 = vmatmul.bf16.gmra.mxu0 %v301
        %v449 = vpop.f32.mrf.mxu0
        %v450 = vadd.f32 %v247, %v449
        %v451 = vpop.f32.mrf.mxu0
        %v452 = vadd.f32 %v247, %v451
        %453 = vmatmul.bf16.gmra.mxu0 %v303
        %v454 = vpop.f32.mrf.mxu0
        %v455 = vadd.f32 %v247, %v454
        %v456 = vpop.f32.mrf.mxu0
        %v457 = vadd.f32 %v247, %v456
        %458 = vmatmul.bf16.gmra.mxu0 %v305
        %v459 = vpop.f32.mrf.mxu0
        %v460 = vadd.f32 %v247, %v459
        %v461 = vpop.f32.mrf.mxu0
        %v462 = vadd.f32 %v247, %v461
        %463 = vmatmul.bf16.gmra.mxu0 %v307
        %v464 = vpop.f32.mrf.mxu0
        %v465 = vadd.f32 %v247, %v464
        %v466 = vpop.f32.mrf.mxu0
        %v467 = vadd.f32 %v247, %v466
        %468 = vmatmul.bf16.gmra.mxu0 %v309
        %v469 = vpop.f32.mrf.mxu0
        %v470 = vadd.f32 %v247, %v469
        %v471 = vpop.f32.mrf.mxu0
        %v472 = vadd.f32 %v247, %v471
        %473 = vmatmul.bf16.gmra.mxu0 %v311
        %v474 = vpop.f32.mrf.mxu0
        %v475 = vadd.f32 %v247, %v474
        %v476 = vpop.f32.mrf.mxu0
        %v477 = vadd.f32 %v247, %v476
        %478 = vdwg.mxu0
        %479 = vmatpush.bf16.msra.mxu0 0
        %480 = vmatpush.bf16.msra.mxu0 0
        %481 = vmatpush.bf16.msra.mxu0 %v390
        %482 = vmatpush.bf16.msra.mxu0 %v389
        %483 = vmatpush.bf16.msra.mxu0 %v388
        %484 = vmatpush.bf16.msra.mxu0 %v387
        %485 = vmatpush.bf16.msra.mxu0 %v386
        %486 = vmatpush.bf16.msra.mxu0 %v385
        %487 = vmatmul.bf16.gmra.mxu0 %v407
        %v488 = vpop.f32.mrf.mxu0
        %v489 = vadd.f32 %v440, %v488
        %v490 = vpop.f32.mrf.mxu0
        %v491 = vadd.f32 %v442, %v490
        %492 = vmatmul.bf16.gmra.mxu0 %v410
        %v493 = vpop.f32.mrf.mxu0
        %v494 = vadd.f32 %v445, %v493
        %v495 = vpop.f32.mrf.mxu0
        %v496 = vadd.f32 %v447, %v495
        %497 = vmatmul.bf16.gmra.mxu0 %v413
        %v498 = vpop.f32.mrf.mxu0
        %v499 = vadd.f32 %v450, %v498
        %v500 = vpop.f32.mrf.mxu0
        %v501 = vadd.f32 %v452, %v500
        %502 = vmatmul.bf16.gmra.mxu0 %v416
        %v503 = vpop.f32.mrf.mxu0
        %v504 = vadd.f32 %v455, %v503
        %v505 = vpop.f32.mrf.mxu0
        %v506 = vadd.f32 %v457, %v505
        %507 = vmatmul.bf16.gmra.mxu0 %v419
        %v508 = vpop.f32.mrf.mxu0
        %v509 = vadd.f32 %v460, %v508
        %v510 = vpop.f32.mrf.mxu0
        %v511 = vadd.f32 %v462, %v510
        %512 = vmatmul.bf16.gmra.mxu0 %v422
        %v513 = vpop.f32.mrf.mxu0
        %v514 = vadd.f32 %v465, %v513
        %v515 = vpop.f32.mrf.mxu0
        %v516 = vadd.f32 %v467, %v515
        %517 = vmatmul.bf16.gmra.mxu0 %v425
        %v518 = vpop.f32.mrf.mxu0
        %v519 = vadd.f32 %v470, %v518
        %v520 = vpop.f32.mrf.mxu0
        %v521 = vadd.f32 %v472, %v520
        %522 = vmatmul.bf16.gmra.mxu0 %v428
        %v523 = vpop.f32.mrf.mxu0
        %v524 = vadd.f32 %v475, %v523
        %v525 = vpop.f32.mrf.mxu0
        %v526 = vadd.f32 %v477, %v525
        %527 = vdwg.mxu0
        %v528 = vpack.c.bf16 %v489, %v489
        %v529 = vpack.c.bf16 %v491, %v491
        %v530 = vpack.c.bf16 %v494, %v494
        %v531 = vpack.c.bf16 %v496, %v496
        %v532 = vpack.c.bf16 %v499, %v499
        %v533 = vpack.c.bf16 %v501, %v501
        %v534 = vpack.c.bf16 %v504, %v504
        %v535 = vpack.c.bf16 %v506, %v506
        %v536 = vpack.c.bf16 %v509, %v509
        %v537 = vpack.c.bf16 %v511, %v511
        %v538 = vpack.c.bf16 %v514, %v514
        %v539 = vpack.c.bf16 %v516, %v516
        %v540 = vpack.c.bf16 %v519, %v519
        %v541 = vpack.c.bf16 %v521, %v521
        %v542 = vpack.c.bf16 %v524, %v524
        %v543 = vpack.c.bf16 %v526, %v526
        %544 = vst [vmem:[%s177] sm:$0xf] %v528
        %545 = vst [vmem:[%s177 + $0x4] sm:$0xf] %v529
        %546 = vst [vmem:[%s177 + $0x8] sm:$0xf] %v530
        %547 = vst [vmem:[%s177 + $0xc] sm:$0xf] %v531
        %548 = vst [vmem:[%s177 + $0x10] sm:$0xf] %v532
        %549 = vst [vmem:[%s177 + $0x14] sm:$0xf] %v533
        %550 = vst [vmem:[%s177 + $0x18] sm:$0xf] %v534
        %551 = vst [vmem:[%s177 + $0x1c] sm:$0xf] %v535
        %552 = vst [vmem:[%s177 + $0x20] sm:$0xf] %v536
        %553 = vst [vmem:[%s177 + $0x24] sm:$0xf] %v537
        %554 = vst [vmem:[%s177 + $0x28] sm:$0xf] %v538
        %555 = vst [vmem:[%s177 + $0x2c] sm:$0xf] %v539
        %556 = vst [vmem:[%s177 + $0x30] sm:$0xf] %v540
        %557 = vst [vmem:[%s177 + $0x34] sm:$0xf] %v541
        %558 = vst [vmem:[%s177 + $0x38] sm:$0xf] %v542
        %559 = vst [vmem:[%s177 + $0x3c] sm:$0xf] %v543
        %s560 = sand.u32 %s90, 1
        %s561 = sand.u32 %s90, 1
        %s562 = smul.addr %s561, 64
        %s563 = scalar_lea.vmem [#allocation2], %s562
        // Predicated region
        $region33: #{my_network_forward.6} parent=31 // pred_check
          %p564 = pneg %p100
        $region34: #{my_network_forward.6} parent=31 // pred_check_branch
          %566 = sbr.rel (%p564) target = $region36
        $region35: #{my_network_forward.6} parent=31 // pred_region
          %s567 = smul.u32 16, %s14
          %s568 = ssub.s32 31, %s567
          %p569 = scmp.lt.s32.totalorder %s568, 16
          %s570 = scalar_select %p569, %s568, 16
          %s571 = smul.u32 4, %s570
          %p572 = scmp.ne.s32.totalorder 0, %s571
          %s573 = smul.addr %s567, 4
          %s574 = scalar_lea.vmem %s3, %s573
          // Predicated region
          $region37: #{my_network_forward.6} parent=35 // pred_check
            %p575 = pneg %p572
          $region38: #{my_network_forward.6} parent=35 // pred_check_branch
            %577 = sbr.rel (%p575) target = $region40
          $region39: #{my_network_forward.6} parent=35 // pred_region
            // Predicated region
            $region41: #{my_network_forward.6} parent=39 // pred_check
              _
            $region42: #{my_network_forward.6} parent=39 // pred_check_branch
              %579 = sbr.rel target = $region44
            $region43: #{my_network_forward.6} parent=39 // pred_region
              // Predicated region
              $region63: #{my_network_forward.6} parent=43 // pred_check
                _
              $region64: #{my_network_forward.6} parent=43 // pred_check_branch
                %659 = sbr.rel (0) target = $region66
              $region65: #{my_network_forward.6} parent=43 // pred_region
                %s661 = ssub.s32 16, 1
                %s662 = sshrl.u32 %s570, 4
                // While loop
                $region67: #{my_network_forward.6} parent=65 // loop_pre_header
                  _
                $region68: #{my_network_forward.6} parent=65 // loop_header
                  %s664 = sphi 0, %s666
                  %p665 = scmp.ge.s32.totalorder %s664, %s662
                  %s669 = sphi 0, %s706
                  %s670 = sphi %s563, %s709
                  %s671 = sphi %s574, %s710
                $region69: #{my_network_forward.6} parent=65 // loop_header_branch
                  %668 = sbr.rel (%p665) target = $region73
                $region70: #{my_network_forward.6} parent=65 // loop_body
                  %v672 = vld [vmem:[%s670] sm:%s661]
                  %673 = vst [vmem:[%s671] sm:%s661] %v672
                  %v674 = vld [vmem:[%s670 + $0x4] sm:%s661]
                  %675 = vst [vmem:[%s671 + $0x4] sm:%s661] %v674
                  %v676 = vld [vmem:[%s670 + $0x8] sm:%s661]
                  %677 = vst [vmem:[%s671 + $0x8] sm:%s661] %v676
                  %v678 = vld [vmem:[%s670 + $0xc] sm:%s661]
                  %679 = vst [vmem:[%s671 + $0xc] sm:%s661] %v678
                  %v680 = vld [vmem:[%s670 + $0x10] sm:%s661]
                  %681 = vst [vmem:[%s671 + $0x10] sm:%s661] %v680
                  %v682 = vld [vmem:[%s670 + $0x14] sm:%s661]
                  %683 = vst [vmem:[%s671 + $0x14] sm:%s661] %v682
                  %v684 = vld [vmem:[%s670 + $0x18] sm:%s661]
                  %685 = vst [vmem:[%s671 + $0x18] sm:%s661] %v684
                  %v686 = vld [vmem:[%s670 + $0x1c] sm:%s661]
                  %687 = vst [vmem:[%s671 + $0x1c] sm:%s661] %v686
                  %v688 = vld [vmem:[%s670 + $0x20] sm:%s661]
                  %689 = vst [vmem:[%s671 + $0x20] sm:%s661] %v688
                  %v690 = vld [vmem:[%s670 + $0x24] sm:%s661]
                  %691 = vst [vmem:[%s671 + $0x24] sm:%s661] %v690
                  %v692 = vld [vmem:[%s670 + $0x28] sm:%s661]
                  %693 = vst [vmem:[%s671 + $0x28] sm:%s661] %v692
                  %v694 = vld [vmem:[%s670 + $0x2c] sm:%s661]
                  %695 = vst [vmem:[%s671 + $0x2c] sm:%s661] %v694
                  %v696 = vld [vmem:[%s670 + $0x30] sm:%s661]
                  %697 = vst [vmem:[%s671 + $0x30] sm:%s661] %v696
                  %v698 = vld [vmem:[%s670 + $0x34] sm:%s661]
                  %699 = vst [vmem:[%s671 + $0x34] sm:%s661] %v698
                  %v700 = vld [vmem:[%s670 + $0x38] sm:%s661]
                  %701 = vst [vmem:[%s671 + $0x38] sm:%s661] %v700
                  %v702 = vld [vmem:[%s670 + $0x3c] sm:%s661]
                  %703 = vst [vmem:[%s671 + $0x3c] sm:%s661] %v702
                  %s704 = sadd.s32 1, %s669
                  %p705 = scmp.ge.s32.totalorder %s704, %s662
                  %s706 = scalar_select %p705, 0, %s704
                  %s707 = smul.u32 %s706, 64
                  %s708 = smul.u32 %s706, 64
                  %s709 = scalar_lea.vmem %s563, %s707 [#allocation2]
                  %s710 = scalar_lea.vmem %s574, %s708
                $region71: #{my_network_forward.6} parent=65 // loop_footer
                  %s666 = sadd.s32 %s664, 1
                $region72: #{my_network_forward.6} parent=65 // loop_footer_branch
                  %663 = sbr.rel target = $region68
                $region73: #{my_network_forward.6} parent=65 // loop_exit
                  _
                %s711 = sshrl.u32 %s570, 4
                %s712 = sand.u32 %s570, 15
                %s713 = smul.u32 %s711, 16
                %s714 = smul.u32 4, %s713
                %s715 = scalar_lea.vmem %s563, %s714 [#allocation2]
                %s716 = smul.u32 4, %s713
                %s717 = scalar_lea.vmem %s574, %s716
                // While loop
                $region74: #{my_network_forward.6} parent=65 // loop_pre_header
                  _
                $region75: #{my_network_forward.6} parent=65 // loop_header
                  %s719 = sphi 0, %s721
                  %p720 = scmp.ge.s32.totalorder %s719, %s712
                  %s724 = sphi 0, %s731
                  %s725 = sphi %s715, %s734
                  %s726 = sphi %s717, %s735
                $region76: #{my_network_forward.6} parent=65 // loop_header_branch
                  %723 = sbr.rel (%p720) target = $region80
                $region77: #{my_network_forward.6} parent=65 // loop_body
                  %v727 = vld [vmem:[%s725] sm:%s661]
                  %728 = vst [vmem:[%s726] sm:%s661] %v727
                  %s729 = sadd.s32 1, %s724
                  %p730 = scmp.ge.s32.totalorder %s729, %s712
                  %s731 = scalar_select %p730, 0, %s729
                  %s732 = smul.u32 %s731, 4
                  %s733 = smul.u32 %s731, 4
                  %s734 = scalar_lea.vmem %s715, %s732 [#allocation2]
                  %s735 = scalar_lea.vmem %s717, %s733
                $region78: #{my_network_forward.6} parent=65 // loop_footer
                  %s721 = sadd.s32 %s719, 1
                $region79: #{my_network_forward.6} parent=65 // loop_footer_branch
                  %718 = sbr.rel target = $region75
                $region80: #{my_network_forward.6} parent=65 // loop_exit
                  _
              $region66: #{my_network_forward.6} parent=43 // pred_fallthru
                _
            $region44: #{my_network_forward.6} parent=39 // pred_fallthru
              _
            // Predicated region
            $region45: #{my_network_forward.6} parent=39 // pred_check
              _
            $region46: #{my_network_forward.6} parent=39 // pred_check_branch
              %581 = sbr.rel (0) target = $region48
            $region47: #{my_network_forward.6} parent=39 // pred_region
              %s583 = ssub.s32 16, 1
              %s584 = sshrl.u32 %s570, 4
              // While loop
              $region49: #{my_network_forward.6} parent=47 // loop_pre_header
                _
              $region50: #{my_network_forward.6} parent=47 // loop_header
                %s586 = sphi 0, %s588
                %p587 = scmp.ge.s32.totalorder %s586, %s584
                %s591 = sphi 0, %s628
                %s592 = sphi %s563, %s631
                %s593 = sphi %s574, %s632
              $region51: #{my_network_forward.6} parent=47 // loop_header_branch
                %590 = sbr.rel (%p587) target = $region55
              $region52: #{my_network_forward.6} parent=47 // loop_body
                %v594 = vld [vmem:[%s592] sm:%s583]
                %595 = vst [vmem:[%s593] sm:%s583] %v594
                %v596 = vld [vmem:[%s592 + $0x4] sm:%s583]
                %597 = vst [vmem:[%s593 + $0x4] sm:%s583] %v596
                %v598 = vld [vmem:[%s592 + $0x8] sm:%s583]
                %599 = vst [vmem:[%s593 + $0x8] sm:%s583] %v598
                %v600 = vld [vmem:[%s592 + $0xc] sm:%s583]
                %601 = vst [vmem:[%s593 + $0xc] sm:%s583] %v600
                %v602 = vld [vmem:[%s592 + $0x10] sm:%s583]
                %603 = vst [vmem:[%s593 + $0x10] sm:%s583] %v602
                %v604 = vld [vmem:[%s592 + $0x14] sm:%s583]
                %605 = vst [vmem:[%s593 + $0x14] sm:%s583] %v604
                %v606 = vld [vmem:[%s592 + $0x18] sm:%s583]
                %607 = vst [vmem:[%s593 + $0x18] sm:%s583] %v606
                %v608 = vld [vmem:[%s592 + $0x1c] sm:%s583]
                %609 = vst [vmem:[%s593 + $0x1c] sm:%s583] %v608
                %v610 = vld [vmem:[%s592 + $0x20] sm:%s583]
                %611 = vst [vmem:[%s593 + $0x20] sm:%s583] %v610
                %v612 = vld [vmem:[%s592 + $0x24] sm:%s583]
                %613 = vst [vmem:[%s593 + $0x24] sm:%s583] %v612
                %v614 = vld [vmem:[%s592 + $0x28] sm:%s583]
                %615 = vst [vmem:[%s593 + $0x28] sm:%s583] %v614
                %v616 = vld [vmem:[%s592 + $0x2c] sm:%s583]
                %617 = vst [vmem:[%s593 + $0x2c] sm:%s583] %v616
                %v618 = vld [vmem:[%s592 + $0x30] sm:%s583]
                %619 = vst [vmem:[%s593 + $0x30] sm:%s583] %v618
                %v620 = vld [vmem:[%s592 + $0x34] sm:%s583]
                %621 = vst [vmem:[%s593 + $0x34] sm:%s583] %v620
                %v622 = vld [vmem:[%s592 + $0x38] sm:%s583]
                %623 = vst [vmem:[%s593 + $0x38] sm:%s583] %v622
                %v624 = vld [vmem:[%s592 + $0x3c] sm:%s583]
                %625 = vst [vmem:[%s593 + $0x3c] sm:%s583] %v624
                %s626 = sadd.s32 1, %s591
                %p627 = scmp.ge.s32.totalorder %s626, %s584
                %s628 = scalar_select %p627, 0, %s626
                %s629 = smul.u32 %s628, 64
                %s630 = smul.u32 %s628, 64
                %s631 = scalar_lea.vmem %s563, %s629 [#allocation2]
                %s632 = scalar_lea.vmem %s574, %s630
              $region53: #{my_network_forward.6} parent=47 // loop_footer
                %s588 = sadd.s32 %s586, 1
              $region54: #{my_network_forward.6} parent=47 // loop_footer_branch
                %585 = sbr.rel target = $region50
              $region55: #{my_network_forward.6} parent=47 // loop_exit
                _
              %s633 = sshrl.u32 %s570, 4
              %s634 = sand.u32 %s570, 15
              %s635 = smul.u32 %s633, 16
              %s636 = smul.u32 4, %s635
              %s637 = scalar_lea.vmem %s563, %s636 [#allocation2]
              %s638 = smul.u32 4, %s635
              %s639 = scalar_lea.vmem %s574, %s638
              // While loop
              $region56: #{my_network_forward.6} parent=47 // loop_pre_header
                _
              $region57: #{my_network_forward.6} parent=47 // loop_header
                %s641 = sphi 0, %s643
                %p642 = scmp.ge.s32.totalorder %s641, %s634
                %s646 = sphi 0, %s653
                %s647 = sphi %s637, %s656
                %s648 = sphi %s639, %s657
              $region58: #{my_network_forward.6} parent=47 // loop_header_branch
                %645 = sbr.rel (%p642) target = $region62
              $region59: #{my_network_forward.6} parent=47 // loop_body
                %v649 = vld [vmem:[%s647] sm:%s583]
                %650 = vst [vmem:[%s648] sm:%s583] %v649
                %s651 = sadd.s32 1, %s646
                %p652 = scmp.ge.s32.totalorder %s651, %s634
                %s653 = scalar_select %p652, 0, %s651
                %s654 = smul.u32 %s653, 4
                %s655 = smul.u32 %s653, 4
                %s656 = scalar_lea.vmem %s637, %s654 [#allocation2]
                %s657 = scalar_lea.vmem %s639, %s655
              $region60: #{my_network_forward.6} parent=47 // loop_footer
                %s643 = sadd.s32 %s641, 1
              $region61: #{my_network_forward.6} parent=47 // loop_footer_branch
                %640 = sbr.rel target = $region57
              $region62: #{my_network_forward.6} parent=47 // loop_exit
                _
            $region48: #{my_network_forward.6} parent=39 // pred_fallthru
              _
          $region40: #{my_network_forward.6} parent=35 // pred_fallthru
            _
          %736 = vnop
        $region36: #{my_network_forward.6} parent=31 // pred_fallthru
          _
      $region32: #{my_network_forward.6} parent=5 // pred_fallthru
        _
      %p737 = scmp.le.s32.totalorder 2, %s9
      // Predicated region
      $region81: #{my_network_forward.6} parent=5 // pred_check
        %p738 = pneg %p737
      $region82: #{my_network_forward.6} parent=5 // pred_check_branch
        %740 = sbr.rel (%p738) target = $region84
      $region83: #{my_network_forward.6} parent=5 // pred_region
        %s741 = ssub.s32 %s9, 2
        // Predicated region
        $region85: #{my_network_forward.6} parent=83 // pred_check
          %p742 = pneg %p106
        $region86: #{my_network_forward.6} parent=83 // pred_check_branch
          %744 = sbr.rel (%p742) target = $region88
        $region87: #{my_network_forward.6} parent=83 // pred_region
          %s745 = sand.u32 %s91, 1
          %s746 = sand.u32 %s91, 1
          %s747 = smul.addr %s746, 64
          %s748 = scalar_lea.vmem [#allocation2], %s747
        $region88: #{my_network_forward.6} parent=83 // pred_fallthru
          _
      $region84: #{my_network_forward.6} parent=5 // pred_fallthru
        _
    $region6: #{my_network_forward.6} parent=1 // loop_footer
      %s13 = sadd.s32 1, %s9
    $region7: #{my_network_forward.6} parent=1 // loop_footer_branch
      %8 = sbr.rel target = $region3
    $region8: #{my_network_forward.6} parent=1 // loop_exit
      _

// kernel: my_network_forward.7
$region0: #{my_network_forward.7}
  #allocation0 [shape = 'u32[]', space=smem, size = 0x4, offset = 0x4, fixed_abs, tag = 'smem constant byte address 0x4 - core index']
  #allocation1 [shape = 'u32[72,128]{1,0:T(1,128)}', space=vmem, size = 0x9000, scoped, tag = 'internal scratch']
  %s0 = inlined_call_operand.vmem [shape: bf16[8,5808], index: 0, kind: input, shape index: {}]
  %s1 = inlined_call_operand.vmem [shape: bf16[5808,128], index: 1, kind: input, shape index: {}]
  %s2 = inlined_call_operand.vmem [shape: bf16[128,128], index: 2, kind: input, shape index: {}]
  %s3 = inlined_call_operand.vmem [shape: bf16[128,128], index: 3, kind: input, shape index: {}]
  %s4 = inlined_call_operand.vmem [shape: bf16[128,128], index: 4, kind: input, shape index: {}]
  %s5 = inlined_call_operand.vmem [shape: f32[1,128], index: 5, kind: input, shape index: {}]
  %s6 = inlined_call_operand.vmem [shape: f32[1,128], index: 6, kind: input, shape index: {}]
  %s7 = inlined_call_operand.vmem [shape: f32[1,128], index: 7, kind: input, shape index: {}]
  %s8 = inlined_call_operand.vmem [shape: f32[1,128], index: 8, kind: input, shape index: {}]
  %s9 = inlined_call_operand.vmem [shape: f32[8,128], index: 9, kind: output, shape index: {}]
  %s10 = sld [smem:[#allocation0]]
  $region46: #{my_network_forward.7} parent=0
    _
  %s12 = ssub.s32 1, %s10
  %s13 = scalar_select 0, %s12, %s10
  // Predicated region
  $region2: #{my_network_forward.7} parent=0 // pred_check
    _
  $region3: #{my_network_forward.7} parent=0 // pred_check_branch
    %15 = sbr.rel (0) target = $region5
  $region4: #{my_network_forward.7} parent=0 // pred_region
    _
  $region5: #{my_network_forward.7} parent=0 // pred_fallthru
    _
  // Predicated region
  $region6: #{my_network_forward.7} parent=0 // pred_check
    _
  $region7: #{my_network_forward.7} parent=0 // pred_check_branch
    %17 = sbr.rel (0) target = $region9
  $region8: #{my_network_forward.7} parent=0 // pred_region
    _
  $region9: #{my_network_forward.7} parent=0 // pred_fallthru
    _
  // Predicated region
  $region10: #{my_network_forward.7} parent=0 // pred_check
    _
  $region11: #{my_network_forward.7} parent=0 // pred_check_branch
    %19 = sbr.rel (0) target = $region13
  $region12: #{my_network_forward.7} parent=0 // pred_region
    _
  $region13: #{my_network_forward.7} parent=0 // pred_fallthru
    _
  // Predicated region
  $region14: #{my_network_forward.7} parent=0 // pred_check
    _
  $region15: #{my_network_forward.7} parent=0 // pred_check_branch
    %21 = sbr.rel (0) target = $region17
  $region16: #{my_network_forward.7} parent=0 // pred_region
    _
  $region17: #{my_network_forward.7} parent=0 // pred_fallthru
    _
  // Predicated region
  $region18: #{my_network_forward.7} parent=0 // pred_check
    _
  $region19: #{my_network_forward.7} parent=0 // pred_check_branch
    %23 = sbr.rel (0) target = $region21
  $region20: #{my_network_forward.7} parent=0 // pred_region
    _
  $region21: #{my_network_forward.7} parent=0 // pred_fallthru
    _
  // Predicated region
  $region22: #{my_network_forward.7} parent=0 // pred_check
    _
  $region23: #{my_network_forward.7} parent=0 // pred_check_branch
    %25 = sbr.rel (0) target = $region25
  $region24: #{my_network_forward.7} parent=0 // pred_region
    _
  $region25: #{my_network_forward.7} parent=0 // pred_fallthru
    _
  // Predicated region
  $region26: #{my_network_forward.7} parent=0 // pred_check
    _
  $region27: #{my_network_forward.7} parent=0 // pred_check_branch
    %27 = sbr.rel (0) target = $region29
  $region28: #{my_network_forward.7} parent=0 // pred_region
    _
  $region29: #{my_network_forward.7} parent=0 // pred_fallthru
    _
  // Predicated region
  $region30: #{my_network_forward.7} parent=0 // pred_check
    _
  $region31: #{my_network_forward.7} parent=0 // pred_check_branch
    %29 = sbr.rel (0) target = $region33
  $region32: #{my_network_forward.7} parent=0 // pred_region
    _
  $region33: #{my_network_forward.7} parent=0 // pred_fallthru
    _
  // Predicated region
  $region34: #{my_network_forward.7} parent=0 // pred_check
    _
  $region35: #{my_network_forward.7} parent=0 // pred_check_branch
    %31 = sbr.rel (0) target = $region37
  $region36: #{my_network_forward.7} parent=0 // pred_region
    _
  $region37: #{my_network_forward.7} parent=0 // pred_fallthru
    _
  %v33 = vld [vmem:[%s0] sm:$0xff]
  %v34 = vld [vmem:[%s0 + $0x8] sm:$0xff]
  %v35 = vld [vmem:[%s0 + $0x10] sm:$0xff]
  %v36 = vld [vmem:[%s0 + $0x18] sm:$0xff]
  %v37 = vld [vmem:[%s0 + $0x20] sm:$0xff]
  %v38 = vld [vmem:[%s0 + $0x28] sm:$0xff]
  %v39 = vld [vmem:[%s0 + $0x30] sm:$0xff]
  %v40 = vld [vmem:[%s0 + $0x38] sm:$0xff]
  %v41 = vld [vmem:[%s0 + $0x40] sm:$0xff]
  %v42 = vld [vmem:[%s0 + $0x48] sm:$0xff]
  %v43 = vld [vmem:[%s0 + $0x50] sm:$0xff]
  %v44 = vld [vmem:[%s0 + $0x58] sm:$0xff]
  %v45 = vld [vmem:[%s0 + $0x60] sm:$0xff]
  %v46 = vld [vmem:[%s0 + $0x68] sm:$0xff]
  %v47 = vld [vmem:[%s0 + $0x70] sm:$0xff]
  %v48 = vld [vmem:[%s0 + $0x78] sm:$0xff]
  %v49 = vld [vmem:[%s0 + $0x80] sm:$0xff]
  %v50 = vld [vmem:[%s0 + $0x88] sm:$0xff]
  %v51 = vld [vmem:[%s0 + $0x90] sm:$0xff]
  %v52 = vld [vmem:[%s0 + $0x98] sm:$0xff]
  %v53 = vld [vmem:[%s0 + $0xa0] sm:$0xff]
  %v54 = vld [vmem:[%s0 + $0xa8] sm:$0xff]
  %v55 = vld [vmem:[%s0 + $0xb0] sm:$0xff]
  %v56 = vld [vmem:[%s1] sm:$0xf]
  %v57 = vld [vmem:[%s1 + $0x4] sm:$0xf]
  %v58 = vld [vmem:[%s1 + $0x8] sm:$0xf]
  %v59 = vld [vmem:[%s1 + $0xc] sm:$0xf]
  %v60 = vld [vmem:[%s1 + $0x10] sm:$0xf]
  %v61 = vld [vmem:[%s1 + $0x14] sm:$0xf]
  %v62 = vld [vmem:[%s1 + $0x18] sm:$0xf]
  %v63 = vld [vmem:[%s1 + $0x1c] sm:$0xf]
  %v64 = vld [vmem:[%s1 + $0x20] sm:$0xf]
  %v65 = vld [vmem:[%s1 + $0x24] sm:$0xf]
  %v66 = vld [vmem:[%s1 + $0x28] sm:$0xf]
  %v67 = vld [vmem:[%s1 + $0x2c] sm:$0xf]
  %v68 = vld [vmem:[%s1 + $0x30] sm:$0xf]
  %v69 = vld [vmem:[%s1 + $0x34] sm:$0xf]
  %v70 = vld [vmem:[%s1 + $0x38] sm:$0xf]
  %v71 = vld [vmem:[%s1 + $0x3c] sm:$0xf]
  %v72 = vld [vmem:[%s1 + $0x40] sm:$0xf]
  %v73 = vld [vmem:[%s1 + $0x44] sm:$0xf]
  %v74 = vld [vmem:[%s1 + $0x48] sm:$0xf]
  %v75 = vld [vmem:[%s1 + $0x4c] sm:$0xf]
  %v76 = vld [vmem:[%s1 + $0x50] sm:$0xf]
  %v77 = vld [vmem:[%s1 + $0x54] sm:$0xf]
  %v78 = vld [vmem:[%s1 + $0x58] sm:$0xf]
  %v79 = vld [vmem:[%s1 + $0x5c] sm:$0xf]
  %v80 = vld [vmem:[%s1 + $0x60] sm:$0xf]
  %v81 = vld [vmem:[%s1 + $0x64] sm:$0xf]
  %v82 = vld [vmem:[%s1 + $0x68] sm:$0xf]
  %v83 = vld [vmem:[%s1 + $0x6c] sm:$0xf]
  %v84 = vld [vmem:[%s1 + $0x70] sm:$0xf]
  %v85 = vld [vmem:[%s1 + $0x74] sm:$0xf]
  %v86 = vld [vmem:[%s1 + $0x78] sm:$0xf]
  %v87 = vld [vmem:[%s1 + $0x7c] sm:$0xf]
  %v88 = vld [vmem:[%s1 + $0x80] sm:$0xf]
  %v89 = vld [vmem:[%s1 + $0x84] sm:$0xf]
  %v90 = vld [vmem:[%s1 + $0x88] sm:$0xf]
  %v91 = vld [vmem:[%s1 + $0x8c] sm:$0xf]
  %v92 = vld [vmem:[%s1 + $0x90] sm:$0xf]
  %v93 = vld [vmem:[%s1 + $0x94] sm:$0xf]
  %v94 = vld [vmem:[%s1 + $0x98] sm:$0xf]
  %v95 = vld [vmem:[%s1 + $0x9c] sm:$0xf]
  %v96 = vld [vmem:[%s1 + $0xa0] sm:$0xf]
  %v97 = vld [vmem:[%s1 + $0xa4] sm:$0xf]
  %v98 = vld [vmem:[%s1 + $0xa8] sm:$0xf]
  %v99 = vld [vmem:[%s1 + $0xac] sm:$0xf]
  %v100 = vld [vmem:[%s1 + $0xb0] sm:$0xf]
  %v101 = vld [vmem:[%s1 + $0xb4] sm:$0xf]
  %v102 = vld [vmem:[%s1 + $0xb8] sm:$0xf]
  %v103 = vld [vmem:[%s1 + $0xbc] sm:$0xf]
  %v104 = vld [vmem:[%s1 + $0xc0] sm:$0xf]
  %v105 = vld [vmem:[%s1 + $0xc4] sm:$0xf]
  %v106 = vld [vmem:[%s1 + $0xc8] sm:$0xf]
  %v107 = vld [vmem:[%s1 + $0xcc] sm:$0xf]
  %v108 = vld [vmem:[%s1 + $0xd0] sm:$0xf]
  %v109 = vld [vmem:[%s1 + $0xd4] sm:$0xf]
  %v110 = vld [vmem:[%s1 + $0xd8] sm:$0xf]
  %v111 = vld [vmem:[%s1 + $0xdc] sm:$0xf]
  %v112 = vld [vmem:[%s1 + $0xe0] sm:$0xf]
  %v113 = vld [vmem:[%s1 + $0xe4] sm:$0xf]
  %v114 = vld [vmem:[%s1 + $0xe8] sm:$0xf]
  %v115 = vld [vmem:[%s1 + $0xec] sm:$0xf]
  %v116 = vld [vmem:[%s1 + $0xf0] sm:$0xf]
  %v117 = vld [vmem:[%s1 + $0xf4] sm:$0xf]
  %v118 = vld [vmem:[%s1 + $0xf8] sm:$0xf]
  %v119 = vld [vmem:[%s1 + $0xfc] sm:$0xf]
  %v120 = vld [vmem:[%s1 + $0x100] sm:$0xf]
  %v121 = vld [vmem:[%s1 + $0x104] sm:$0xf]
  %v122 = vld [vmem:[%s1 + $0x108] sm:$0xf]
  %v123 = vld [vmem:[%s1 + $0x10c] sm:$0xf]
  %v124 = vld [vmem:[%s1 + $0x110] sm:$0xf]
  %v125 = vld [vmem:[%s1 + $0x114] sm:$0xf]
  %v126 = vld [vmem:[%s1 + $0x118] sm:$0xf]
  %v127 = vld [vmem:[%s1 + $0x11c] sm:$0xf]
  %v128 = vld [vmem:[%s1 + $0x120] sm:$0xf]
  %v129 = vld [vmem:[%s1 + $0x124] sm:$0xf]
  %v130 = vld [vmem:[%s1 + $0x128] sm:$0xf]
  %v131 = vld [vmem:[%s1 + $0x12c] sm:$0xf]
  %v132 = vld [vmem:[%s1 + $0x130] sm:$0xf]
  %v133 = vld [vmem:[%s1 + $0x134] sm:$0xf]
  %v134 = vld [vmem:[%s1 + $0x138] sm:$0xf]
  %v135 = vld [vmem:[%s1 + $0x13c] sm:$0xf]
  %v136 = vld [vmem:[%s1 + $0x140] sm:$0xf]
  %v137 = vld [vmem:[%s1 + $0x144] sm:$0xf]
  %v138 = vld [vmem:[%s1 + $0x148] sm:$0xf]
  %v139 = vld [vmem:[%s1 + $0x14c] sm:$0xf]
  %v140 = vld [vmem:[%s1 + $0x150] sm:$0xf]
  %v141 = vld [vmem:[%s1 + $0x154] sm:$0xf]
  %v142 = vld [vmem:[%s1 + $0x158] sm:$0xf]
  %v143 = vld [vmem:[%s1 + $0x15c] sm:$0xf]
  %v144 = vld [vmem:[%s1 + $0x160] sm:$0xf]
  %v145 = vld [vmem:[%s1 + $0x164] sm:$0xf]
  %v146 = vld [vmem:[%s1 + $0x168] sm:$0xf]
  %v147 = vld [vmem:[%s1 + $0x16c] sm:$0xf]
  %v148 = vld [vmem:[%s1 + $0x170] sm:$0xf]
  %v149 = vld [vmem:[%s1 + $0x174] sm:$0xf]
  %v150 = vld [vmem:[%s1 + $0x178] sm:$0xf]
  %v151 = vld [vmem:[%s1 + $0x17c] sm:$0xf]
  %v152 = vld [vmem:[%s1 + $0x180] sm:$0xf]
  %v153 = vld [vmem:[%s1 + $0x184] sm:$0xf]
  %v154 = vld [vmem:[%s1 + $0x188] sm:$0xf]
  %v155 = vld [vmem:[%s1 + $0x18c] sm:$0xf]
  %v156 = vld [vmem:[%s1 + $0x190] sm:$0xf]
  %v157 = vld [vmem:[%s1 + $0x194] sm:$0xf]
  %v158 = vld [vmem:[%s1 + $0x198] sm:$0xf]
  %v159 = vld [vmem:[%s1 + $0x19c] sm:$0xf]
  %v160 = vld [vmem:[%s1 + $0x1a0] sm:$0xf]
  %v161 = vld [vmem:[%s1 + $0x1a4] sm:$0xf]
  %v162 = vld [vmem:[%s1 + $0x1a8] sm:$0xf]
  %v163 = vld [vmem:[%s1 + $0x1ac] sm:$0xf]
  %v164 = vld [vmem:[%s1 + $0x1b0] sm:$0xf]
  %v165 = vld [vmem:[%s1 + $0x1b4] sm:$0xf]
  %v166 = vld [vmem:[%s1 + $0x1b8] sm:$0xf]
  %v167 = vld [vmem:[%s1 + $0x1bc] sm:$0xf]
  %v168 = vld [vmem:[%s1 + $0x1c0] sm:$0xf]
  %v169 = vld [vmem:[%s1 + $0x1c4] sm:$0xf]
  %v170 = vld [vmem:[%s1 + $0x1c8] sm:$0xf]
  %v171 = vld [vmem:[%s1 + $0x1cc] sm:$0xf]
  %v172 = vld [vmem:[%s1 + $0x1d0] sm:$0xf]
  %v173 = vld [vmem:[%s1 + $0x1d4] sm:$0xf]
  %v174 = vld [vmem:[%s1 + $0x1d8] sm:$0xf]
  %v175 = vld [vmem:[%s1 + $0x1dc] sm:$0xf]
  %v176 = vld [vmem:[%s1 + $0x1e0] sm:$0xf]
  %v177 = vld [vmem:[%s1 + $0x1e4] sm:$0xf]
  %v178 = vld [vmem:[%s1 + $0x1e8] sm:$0xf]
  %v179 = vld [vmem:[%s1 + $0x1ec] sm:$0xf]
  %v180 = vld [vmem:[%s1 + $0x1f0] sm:$0xf]
  %v181 = vld [vmem:[%s1 + $0x1f4] sm:$0xf]
  %v182 = vld [vmem:[%s1 + $0x1f8] sm:$0xf]
  %v183 = vld [vmem:[%s1 + $0x1fc] sm:$0xf]
  %v184 = vld [vmem:[%s1 + $0x200] sm:$0xf]
  %v185 = vld [vmem:[%s1 + $0x204] sm:$0xf]
  %v186 = vld [vmem:[%s1 + $0x208] sm:$0xf]
  %v187 = vld [vmem:[%s1 + $0x20c] sm:$0xf]
  %v188 = vld [vmem:[%s1 + $0x210] sm:$0xf]
  %v189 = vld [vmem:[%s1 + $0x214] sm:$0xf]
  %v190 = vld [vmem:[%s1 + $0x218] sm:$0xf]
  %v191 = vld [vmem:[%s1 + $0x21c] sm:$0xf]
  %v192 = vld [vmem:[%s1 + $0x220] sm:$0xf]
  %v193 = vld [vmem:[%s1 + $0x224] sm:$0xf]
  %v194 = vld [vmem:[%s1 + $0x228] sm:$0xf]
  %v195 = vld [vmem:[%s1 + $0x22c] sm:$0xf]
  %v196 = vld [vmem:[%s1 + $0x230] sm:$0xf]
  %v197 = vld [vmem:[%s1 + $0x234] sm:$0xf]
  %v198 = vld [vmem:[%s1 + $0x238] sm:$0xf]
  %v199 = vld [vmem:[%s1 + $0x23c] sm:$0xf]
  %v200 = vld [vmem:[%s1 + $0x240] sm:$0xf]
  %v201 = vld [vmem:[%s1 + $0x244] sm:$0xf]
  %v202 = vld [vmem:[%s1 + $0x248] sm:$0xf]
  %v203 = vld [vmem:[%s1 + $0x24c] sm:$0xf]
  %v204 = vld [vmem:[%s1 + $0x250] sm:$0xf]
  %v205 = vld [vmem:[%s1 + $0x254] sm:$0xf]
  %v206 = vld [vmem:[%s1 + $0x258] sm:$0xf]
  %v207 = vld [vmem:[%s1 + $0x25c] sm:$0xf]
  %v208 = vld [vmem:[%s1 + $0x260] sm:$0xf]
  %v209 = vld [vmem:[%s1 + $0x264] sm:$0xf]
  %v210 = vld [vmem:[%s1 + $0x268] sm:$0xf]
  %v211 = vld [vmem:[%s1 + $0x26c] sm:$0xf]
  %v212 = vld [vmem:[%s1 + $0x270] sm:$0xf]
  %v213 = vld [vmem:[%s1 + $0x274] sm:$0xf]
  %v214 = vld [vmem:[%s1 + $0x278] sm:$0xf]
  %v215 = vld [vmem:[%s1 + $0x27c] sm:$0xf]
  %v216 = vld [vmem:[%s1 + $0x280] sm:$0xf]
  %v217 = vld [vmem:[%s1 + $0x284] sm:$0xf]
  %v218 = vld [vmem:[%s1 + $0x288] sm:$0xf]
  %v219 = vld [vmem:[%s1 + $0x28c] sm:$0xf]
  %v220 = vld [vmem:[%s1 + $0x290] sm:$0xf]
  %v221 = vld [vmem:[%s1 + $0x294] sm:$0xf]
  %v222 = vld [vmem:[%s1 + $0x298] sm:$0xf]
  %v223 = vld [vmem:[%s1 + $0x29c] sm:$0xf]
  %v224 = vld [vmem:[%s1 + $0x2a0] sm:$0xf]
  %v225 = vld [vmem:[%s1 + $0x2a4] sm:$0xf]
  %v226 = vld [vmem:[%s1 + $0x2a8] sm:$0xf]
  %v227 = vld [vmem:[%s1 + $0x2ac] sm:$0xf]
  %v228 = vld [vmem:[%s1 + $0x2b0] sm:$0xf]
  %v229 = vld [vmem:[%s1 + $0x2b4] sm:$0xf]
  %v230 = vld [vmem:[%s1 + $0x2b8] sm:$0xf]
  %v231 = vld [vmem:[%s1 + $0x2bc] sm:$0xf]
  %v232 = vld [vmem:[%s1 + $0x2c0] sm:$0xf]
  %v233 = vld [vmem:[%s1 + $0x2c4] sm:$0xf]
  %v234 = vld [vmem:[%s1 + $0x2c8] sm:$0xf]
  %v235 = vld [vmem:[%s1 + $0x2cc] sm:$0xf]
  %v236 = vld [vmem:[%s1 + $0x2d0] sm:$0xf]
  %v237 = vld [vmem:[%s1 + $0x2d4] sm:$0xf]
  %v238 = vld [vmem:[%s1 + $0x2d8] sm:$0xf]
  %v239 = vld [vmem:[%s1 + $0x2dc] sm:$0xf]
  %v240 = vld [vmem:[%s1 + $0x2e0] sm:$0xf]
  %v241 = vld [vmem:[%s1 + $0x2e4] sm:$0xf]
  %v242 = vld [vmem:[%s1 + $0x2e8] sm:$0xf]
  %v243 = vld [vmem:[%s1 + $0x2ec] sm:$0xf]
  %v244 = vld [vmem:[%s1 + $0x2f0] sm:$0xf]
  %v245 = vld [vmem:[%s1 + $0x2f4] sm:$0xf]
  %v246 = vld [vmem:[%s1 + $0x2f8] sm:$0xf]
  %v247 = vld [vmem:[%s1 + $0x2fc] sm:$0xf]
  %v248 = vld [vmem:[%s1 + $0x300] sm:$0xf]
  %v249 = vld [vmem:[%s1 + $0x304] sm:$0xf]
  %v250 = vld [vmem:[%s1 + $0x308] sm:$0xf]
  %v251 = vld [vmem:[%s1 + $0x30c] sm:$0xf]
  %v252 = vld [vmem:[%s1 + $0x310] sm:$0xf]
  %v253 = vld [vmem:[%s1 + $0x314] sm:$0xf]
  %v254 = vld [vmem:[%s1 + $0x318] sm:$0xf]
  %v255 = vld [vmem:[%s1 + $0x31c] sm:$0xf]
  %v256 = vld [vmem:[%s1 + $0x320] sm:$0xf]
  %v257 = vld [vmem:[%s1 + $0x324] sm:$0xf]
  %v258 = vld [vmem:[%s1 + $0x328] sm:$0xf]
  %v259 = vld [vmem:[%s1 + $0x32c] sm:$0xf]
  %v260 = vld [vmem:[%s1 + $0x330] sm:$0xf]
  %v261 = vld [vmem:[%s1 + $0x334] sm:$0xf]
  %v262 = vld [vmem:[%s1 + $0x338] sm:$0xf]
  %v263 = vld [vmem:[%s1 + $0x33c] sm:$0xf]
  %v264 = vld [vmem:[%s1 + $0x340] sm:$0xf]
  %v265 = vld [vmem:[%s1 + $0x344] sm:$0xf]
  %v266 = vld [vmem:[%s1 + $0x348] sm:$0xf]
  %v267 = vld [vmem:[%s1 + $0x34c] sm:$0xf]
  %v268 = vld [vmem:[%s1 + $0x350] sm:$0xf]
  %v269 = vld [vmem:[%s1 + $0x354] sm:$0xf]
  %v270 = vld [vmem:[%s1 + $0x358] sm:$0xf]
  %v271 = vld [vmem:[%s1 + $0x35c] sm:$0xf]
  %v272 = vld [vmem:[%s1 + $0x360] sm:$0xf]
  %v273 = vld [vmem:[%s1 + $0x364] sm:$0xf]
  %v274 = vld [vmem:[%s1 + $0x368] sm:$0xf]
  %v275 = vld [vmem:[%s1 + $0x36c] sm:$0xf]
  %v276 = vld [vmem:[%s1 + $0x370] sm:$0xf]
  %v277 = vld [vmem:[%s1 + $0x374] sm:$0xf]
  %v278 = vld [vmem:[%s1 + $0x378] sm:$0xf]
  %v279 = vld [vmem:[%s1 + $0x37c] sm:$0xf]
  %v280 = vld [vmem:[%s1 + $0x380] sm:$0xf]
  %v281 = vld [vmem:[%s1 + $0x384] sm:$0xf]
  %v282 = vld [vmem:[%s1 + $0x388] sm:$0xf]
  %v283 = vld [vmem:[%s1 + $0x38c] sm:$0xf]
  %v284 = vld [vmem:[%s1 + $0x390] sm:$0xf]
  %v285 = vld [vmem:[%s1 + $0x394] sm:$0xf]
  %v286 = vld [vmem:[%s1 + $0x398] sm:$0xf]
  %v287 = vld [vmem:[%s1 + $0x39c] sm:$0xf]
  %v288 = vld [vmem:[%s1 + $0x3a0] sm:$0xf]
  %v289 = vld [vmem:[%s1 + $0x3a4] sm:$0xf]
  %v290 = vld [vmem:[%s1 + $0x3a8] sm:$0xf]
  %v291 = vld [vmem:[%s1 + $0x3ac] sm:$0xf]
  %v292 = vld [vmem:[%s1 + $0x3b0] sm:$0xf]
  %v293 = vld [vmem:[%s1 + $0x3b4] sm:$0xf]
  %v294 = vld [vmem:[%s1 + $0x3b8] sm:$0xf]
  %v295 = vld [vmem:[%s1 + $0x3bc] sm:$0xf]
  %v296 = vld [vmem:[%s1 + $0x3c0] sm:$0xf]
  %v297 = vld [vmem:[%s1 + $0x3c4] sm:$0xf]
  %v298 = vld [vmem:[%s1 + $0x3c8] sm:$0xf]
  %v299 = vld [vmem:[%s1 + $0x3cc] sm:$0xf]
  %v300 = vld [vmem:[%s1 + $0x3d0] sm:$0xf]
  %v301 = vld [vmem:[%s1 + $0x3d4] sm:$0xf]
  %v302 = vld [vmem:[%s1 + $0x3d8] sm:$0xf]
  %v303 = vld [vmem:[%s1 + $0x3dc] sm:$0xf]
  %v304 = vld [vmem:[%s1 + $0x3e0] sm:$0xf]
  %v305 = vld [vmem:[%s1 + $0x3e4] sm:$0xf]
  %v306 = vld [vmem:[%s1 + $0x3e8] sm:$0xf]
  %v307 = vld [vmem:[%s1 + $0x3ec] sm:$0xf]
  %v308 = vld [vmem:[%s1 + $0x3f0] sm:$0xf]
  %v309 = vld [vmem:[%s1 + $0x3f4] sm:$0xf]
  %v310 = vld [vmem:[%s1 + $0x3f8] sm:$0xf]
  %v311 = vld [vmem:[%s1 + $0x3fc] sm:$0xf]
  %v312 = vld [vmem:[%s1 + $0x400] sm:$0xf]
  %v313 = vld [vmem:[%s1 + $0x404] sm:$0xf]
  %v314 = vld [vmem:[%s1 + $0x408] sm:$0xf]
  %v315 = vld [vmem:[%s1 + $0x40c] sm:$0xf]
  %v316 = vld [vmem:[%s1 + $0x410] sm:$0xf]
  %v317 = vld [vmem:[%s1 + $0x414] sm:$0xf]
  %v318 = vld [vmem:[%s1 + $0x418] sm:$0xf]
  %v319 = vld [vmem:[%s1 + $0x41c] sm:$0xf]
  %v320 = vld [vmem:[%s1 + $0x420] sm:$0xf]
  %v321 = vld [vmem:[%s1 + $0x424] sm:$0xf]
  %v322 = vld [vmem:[%s1 + $0x428] sm:$0xf]
  %v323 = vld [vmem:[%s1 + $0x42c] sm:$0xf]
  %v324 = vld [vmem:[%s1 + $0x430] sm:$0xf]
  %v325 = vld [vmem:[%s1 + $0x434] sm:$0xf]
  %v326 = vld [vmem:[%s1 + $0x438] sm:$0xf]
  %v327 = vld [vmem:[%s1 + $0x43c] sm:$0xf]
  %v328 = vld [vmem:[%s1 + $0x440] sm:$0xf]
  %v329 = vld [vmem:[%s1 + $0x444] sm:$0xf]
  %v330 = vld [vmem:[%s1 + $0x448] sm:$0xf]
  %v331 = vld [vmem:[%s1 + $0x44c] sm:$0xf]
  %v332 = vld [vmem:[%s1 + $0x450] sm:$0xf]
  %v333 = vld [vmem:[%s1 + $0x454] sm:$0xf]
  %v334 = vld [vmem:[%s1 + $0x458] sm:$0xf]
  %v335 = vld [vmem:[%s1 + $0x45c] sm:$0xf]
  %v336 = vld [vmem:[%s1 + $0x460] sm:$0xf]
  %v337 = vld [vmem:[%s1 + $0x464] sm:$0xf]
  %v338 = vld [vmem:[%s1 + $0x468] sm:$0xf]
  %v339 = vld [vmem:[%s1 + $0x46c] sm:$0xf]
  %v340 = vld [vmem:[%s1 + $0x470] sm:$0xf]
  %v341 = vld [vmem:[%s1 + $0x474] sm:$0xf]
  %v342 = vld [vmem:[%s1 + $0x478] sm:$0xf]
  %v343 = vld [vmem:[%s1 + $0x47c] sm:$0xf]
  %v344 = vld [vmem:[%s1 + $0x480] sm:$0xf]
  %v345 = vld [vmem:[%s1 + $0x484] sm:$0xf]
  %v346 = vld [vmem:[%s1 + $0x488] sm:$0xf]
  %v347 = vld [vmem:[%s1 + $0x48c] sm:$0xf]
  %v348 = vld [vmem:[%s1 + $0x490] sm:$0xf]
  %v349 = vld [vmem:[%s1 + $0x494] sm:$0xf]
  %v350 = vld [vmem:[%s1 + $0x498] sm:$0xf]
  %v351 = vld [vmem:[%s1 + $0x49c] sm:$0xf]
  %v352 = vld [vmem:[%s1 + $0x4a0] sm:$0xf]
  %v353 = vld [vmem:[%s1 + $0x4a4] sm:$0xf]
  %v354 = vld [vmem:[%s1 + $0x4a8] sm:$0xf]
  %v355 = vld [vmem:[%s1 + $0x4ac] sm:$0xf]
  %v356 = vld [vmem:[%s1 + $0x4b0] sm:$0xf]
  %v357 = vld [vmem:[%s1 + $0x4b4] sm:$0xf]
  %v358 = vld [vmem:[%s1 + $0x4b8] sm:$0xf]
  %v359 = vld [vmem:[%s1 + $0x4bc] sm:$0xf]
  %v360 = vld [vmem:[%s1 + $0x4c0] sm:$0xf]
  %v361 = vld [vmem:[%s1 + $0x4c4] sm:$0xf]
  %v362 = vld [vmem:[%s1 + $0x4c8] sm:$0xf]
  %v363 = vld [vmem:[%s1 + $0x4cc] sm:$0xf]
  %v364 = vld [vmem:[%s1 + $0x4d0] sm:$0xf]
  %v365 = vld [vmem:[%s1 + $0x4d4] sm:$0xf]
  %v366 = vld [vmem:[%s1 + $0x4d8] sm:$0xf]
  %v367 = vld [vmem:[%s1 + $0x4dc] sm:$0xf]
  %v368 = vld [vmem:[%s1 + $0x4e0] sm:$0xf]
  %v369 = vld [vmem:[%s1 + $0x4e4] sm:$0xf]
  %v370 = vld [vmem:[%s1 + $0x4e8] sm:$0xf]
  %v371 = vld [vmem:[%s1 + $0x4ec] sm:$0xf]
  %v372 = vld [vmem:[%s1 + $0x4f0] sm:$0xf]
  %v373 = vld [vmem:[%s1 + $0x4f4] sm:$0xf]
  %v374 = vld [vmem:[%s1 + $0x4f8] sm:$0xf]
  %v375 = vld [vmem:[%s1 + $0x4fc] sm:$0xf]
  %v376 = vld [vmem:[%s1 + $0x500] sm:$0xf]
  %v377 = vld [vmem:[%s1 + $0x504] sm:$0xf]
  %v378 = vld [vmem:[%s1 + $0x508] sm:$0xf]
  %v379 = vld [vmem:[%s1 + $0x50c] sm:$0xf]
  %v380 = vld [vmem:[%s1 + $0x510] sm:$0xf]
  %v381 = vld [vmem:[%s1 + $0x514] sm:$0xf]
  %v382 = vld [vmem:[%s1 + $0x518] sm:$0xf]
  %v383 = vld [vmem:[%s1 + $0x51c] sm:$0xf]
  %v384 = vld [vmem:[%s1 + $0x520] sm:$0xf]
  %v385 = vld [vmem:[%s1 + $0x524] sm:$0xf]
  %v386 = vld [vmem:[%s1 + $0x528] sm:$0xf]
  %v387 = vld [vmem:[%s1 + $0x52c] sm:$0xf]
  %v388 = vld [vmem:[%s1 + $0x530] sm:$0xf]
  %v389 = vld [vmem:[%s1 + $0x534] sm:$0xf]
  %v390 = vld [vmem:[%s1 + $0x538] sm:$0xf]
  %v391 = vld [vmem:[%s1 + $0x53c] sm:$0xf]
  %v392 = vld [vmem:[%s1 + $0x540] sm:$0xf]
  %v393 = vld [vmem:[%s1 + $0x544] sm:$0xf]
  %v394 = vld [vmem:[%s1 + $0x548] sm:$0xf]
  %v395 = vld [vmem:[%s1 + $0x54c] sm:$0xf]
  %v396 = vld [vmem:[%s1 + $0x550] sm:$0xf]
  %v397 = vld [vmem:[%s1 + $0x554] sm:$0xf]
  %v398 = vld [vmem:[%s1 + $0x558] sm:$0xf]
  %v399 = vld [vmem:[%s1 + $0x55c] sm:$0xf]
  %v400 = vld [vmem:[%s1 + $0x560] sm:$0xf]
  %v401 = vld [vmem:[%s1 + $0x564] sm:$0xf]
  %v402 = vld [vmem:[%s1 + $0x568] sm:$0xf]
  %v403 = vld [vmem:[%s1 + $0x56c] sm:$0xf]
  %v404 = vld [vmem:[%s1 + $0x570] sm:$0xf]
  %v405 = vld [vmem:[%s1 + $0x574] sm:$0xf]
  %v406 = vld [vmem:[%s1 + $0x578] sm:$0xf]
  %v407 = vld [vmem:[%s1 + $0x57c] sm:$0xf]
  %v408 = vld [vmem:[%s1 + $0x580] sm:$0xf]
  %v409 = vld [vmem:[%s1 + $0x584] sm:$0xf]
  %v410 = vld [vmem:[%s1 + $0x588] sm:$0xf]
  %v411 = vld [vmem:[%s1 + $0x58c] sm:$0xf]
  %v412 = vld [vmem:[%s1 + $0x590] sm:$0xf]
  %v413 = vld [vmem:[%s1 + $0x594] sm:$0xf]
  %v414 = vld [vmem:[%s1 + $0x598] sm:$0xf]
  %v415 = vld [vmem:[%s1 + $0x59c] sm:$0xf]
  %v416 = vld [vmem:[%s1 + $0x5a0] sm:$0xf]
  %v417 = vld [vmem:[%s1 + $0x5a4] sm:$0xf]
  %v418 = vld [vmem:[%s1 + $0x5a8] sm:$0xf]
  %v419 = vld [vmem:[%s1 + $0x5ac] sm:$0xf]
  %v420 = vld [vmem:[%s1 + $0x5b0] sm:$0xf]
  %v421 = vld [vmem:[%s1 + $0x5b4] sm:$0xf]
  %v422 = vld [vmem:[%s1 + $0x5b8] sm:$0xf]
  %v423 = vld [vmem:[%s1 + $0x5bc] sm:$0xf]
  %v424 = vld [vmem:[%s1 + $0x5c0] sm:$0xf]
  %v425 = vld [vmem:[%s1 + $0x5c4] sm:$0xf]
  %v426 = vld [vmem:[%s1 + $0x5c8] sm:$0xf]
  %v427 = vld [vmem:[%s1 + $0x5cc] sm:$0xf]
  %v428 = vld [vmem:[%s1 + $0x5d0] sm:$0xf]
  %v429 = vld [vmem:[%s1 + $0x5d4] sm:$0xf]
  %v430 = vld [vmem:[%s1 + $0x5d8] sm:$0xf]
  %v431 = vld [vmem:[%s1 + $0x5dc] sm:$0xf]
  %v432 = vld [vmem:[%s1 + $0x5e0] sm:$0xf]
  %v433 = vld [vmem:[%s1 + $0x5e4] sm:$0xf]
  %v434 = vld [vmem:[%s1 + $0x5e8] sm:$0xf]
  %v435 = vld [vmem:[%s1 + $0x5ec] sm:$0xf]
  %v436 = vld [vmem:[%s1 + $0x5f0] sm:$0xf]
  %v437 = vld [vmem:[%s1 + $0x5f4] sm:$0xf]
  %v438 = vld [vmem:[%s1 + $0x5f8] sm:$0xf]
  %v439 = vld [vmem:[%s1 + $0x5fc] sm:$0xf]
  %v440 = vld [vmem:[%s1 + $0x600] sm:$0xf]
  %v441 = vld [vmem:[%s1 + $0x604] sm:$0xf]
  %v442 = vld [vmem:[%s1 + $0x608] sm:$0xf]
  %v443 = vld [vmem:[%s1 + $0x60c] sm:$0xf]
  %v444 = vld [vmem:[%s1 + $0x610] sm:$0xf]
  %v445 = vld [vmem:[%s1 + $0x614] sm:$0xf]
  %v446 = vld [vmem:[%s1 + $0x618] sm:$0xf]
  %v447 = vld [vmem:[%s1 + $0x61c] sm:$0xf]
  %v448 = vld [vmem:[%s1 + $0x620] sm:$0xf]
  %v449 = vld [vmem:[%s1 + $0x624] sm:$0xf]
  %v450 = vld [vmem:[%s1 + $0x628] sm:$0xf]
  %v451 = vld [vmem:[%s1 + $0x62c] sm:$0xf]
  %v452 = vld [vmem:[%s1 + $0x630] sm:$0xf]
  %v453 = vld [vmem:[%s1 + $0x634] sm:$0xf]
  %v454 = vld [vmem:[%s1 + $0x638] sm:$0xf]
  %v455 = vld [vmem:[%s1 + $0x63c] sm:$0xf]
  %v456 = vld [vmem:[%s1 + $0x640] sm:$0xf]
  %v457 = vld [vmem:[%s1 + $0x644] sm:$0xf]
  %v458 = vld [vmem:[%s1 + $0x648] sm:$0xf]
  %v459 = vld [vmem:[%s1 + $0x64c] sm:$0xf]
  %v460 = vld [vmem:[%s1 + $0x650] sm:$0xf]
  %v461 = vld [vmem:[%s1 + $0x654] sm:$0xf]
  %v462 = vld [vmem:[%s1 + $0x658] sm:$0xf]
  %v463 = vld [vmem:[%s1 + $0x65c] sm:$0xf]
  %v464 = vld [vmem:[%s1 + $0x660] sm:$0xf]
  %v465 = vld [vmem:[%s1 + $0x664] sm:$0xf]
  %v466 = vld [vmem:[%s1 + $0x668] sm:$0xf]
  %v467 = vld [vmem:[%s1 + $0x66c] sm:$0xf]
  %v468 = vld [vmem:[%s1 + $0x670] sm:$0xf]
  %v469 = vld [vmem:[%s1 + $0x674] sm:$0xf]
  %v470 = vld [vmem:[%s1 + $0x678] sm:$0xf]
  %v471 = vld [vmem:[%s1 + $0x67c] sm:$0xf]
  %v472 = vld [vmem:[%s1 + $0x680] sm:$0xf]
  %v473 = vld [vmem:[%s1 + $0x684] sm:$0xf]
  %v474 = vld [vmem:[%s1 + $0x688] sm:$0xf]
  %v475 = vld [vmem:[%s1 + $0x68c] sm:$0xf]
  %v476 = vld [vmem:[%s1 + $0x690] sm:$0xf]
  %v477 = vld [vmem:[%s1 + $0x694] sm:$0xf]
  %v478 = vld [vmem:[%s1 + $0x698] sm:$0xf]
  %v479 = vld [vmem:[%s1 + $0x69c] sm:$0xf]
  %v480 = vld [vmem:[%s1 + $0x6a0] sm:$0xf]
  %v481 = vld [vmem:[%s1 + $0x6a4] sm:$0xf]
  %v482 = vld [vmem:[%s1 + $0x6a8] sm:$0xf]
  %v483 = vld [vmem:[%s1 + $0x6ac] sm:$0xf]
  %v484 = vld [vmem:[%s1 + $0x6b0] sm:$0xf]
  %v485 = vld [vmem:[%s1 + $0x6b4] sm:$0xf]
  %v486 = vld [vmem:[%s1 + $0x6b8] sm:$0xf]
  %v487 = vld [vmem:[%s1 + $0x6bc] sm:$0xf]
  %v488 = vld [vmem:[%s1 + $0x6c0] sm:$0xf]
  %v489 = vld [vmem:[%s1 + $0x6c4] sm:$0xf]
  %v490 = vld [vmem:[%s1 + $0x6c8] sm:$0xf]
  %v491 = vld [vmem:[%s1 + $0x6cc] sm:$0xf]
  %v492 = vld [vmem:[%s1 + $0x6d0] sm:$0xf]
  %v493 = vld [vmem:[%s1 + $0x6d4] sm:$0xf]
  %v494 = vld [vmem:[%s1 + $0x6d8] sm:$0xf]
  %v495 = vld [vmem:[%s1 + $0x6dc] sm:$0xf]
  %v496 = vld [vmem:[%s1 + $0x6e0] sm:$0xf]
  %v497 = vld [vmem:[%s1 + $0x6e4] sm:$0xf]
  %v498 = vld [vmem:[%s1 + $0x6e8] sm:$0xf]
  %v499 = vld [vmem:[%s1 + $0x6ec] sm:$0xf]
  %v500 = vld [vmem:[%s1 + $0x6f0] sm:$0xf]
  %v501 = vld [vmem:[%s1 + $0x6f4] sm:$0xf]
  %v502 = vld [vmem:[%s1 + $0x6f8] sm:$0xf]
  %v503 = vld [vmem:[%s1 + $0x6fc] sm:$0xf]
  %v504 = vld [vmem:[%s1 + $0x700] sm:$0xf]
  %v505 = vld [vmem:[%s1 + $0x704] sm:$0xf]
  %v506 = vld [vmem:[%s1 + $0x708] sm:$0xf]
  %v507 = vld [vmem:[%s1 + $0x70c] sm:$0xf]
  %v508 = vld [vmem:[%s1 + $0x710] sm:$0xf]
  %v509 = vld [vmem:[%s1 + $0x714] sm:$0xf]
  %v510 = vld [vmem:[%s1 + $0x718] sm:$0xf]
  %v511 = vld [vmem:[%s1 + $0x71c] sm:$0xf]
  %v512 = vld [vmem:[%s1 + $0x720] sm:$0xf]
  %v513 = vld [vmem:[%s1 + $0x724] sm:$0xf]
  %v514 = vld [vmem:[%s1 + $0x728] sm:$0xf]
  %v515 = vld [vmem:[%s1 + $0x72c] sm:$0xf]
  %v516 = vld [vmem:[%s1 + $0x730] sm:$0xf]
  %v517 = vld [vmem:[%s1 + $0x734] sm:$0xf]
  %v518 = vld [vmem:[%s1 + $0x738] sm:$0xf]
  %v519 = vld [vmem:[%s1 + $0x73c] sm:$0xf]
  %v520 = vld [vmem:[%s1 + $0x740] sm:$0xf]
  %v521 = vld [vmem:[%s1 + $0x744] sm:$0xf]
  %v522 = vld [vmem:[%s1 + $0x748] sm:$0xf]
  %v523 = vld [vmem:[%s1 + $0x74c] sm:$0xf]
  %v524 = vld [vmem:[%s1 + $0x750] sm:$0xf]
  %v525 = vld [vmem:[%s1 + $0x754] sm:$0xf]
  %v526 = vld [vmem:[%s1 + $0x758] sm:$0xf]
  %v527 = vld [vmem:[%s1 + $0x75c] sm:$0xf]
  %v528 = vld [vmem:[%s1 + $0x760] sm:$0xf]
  %v529 = vld [vmem:[%s1 + $0x764] sm:$0xf]
  %v530 = vld [vmem:[%s1 + $0x768] sm:$0xf]
  %v531 = vld [vmem:[%s1 + $0x76c] sm:$0xf]
  %v532 = vld [vmem:[%s1 + $0x770] sm:$0xf]
  %v533 = vld [vmem:[%s1 + $0x774] sm:$0xf]
  %v534 = vld [vmem:[%s1 + $0x778] sm:$0xf]
  %v535 = vld [vmem:[%s1 + $0x77c] sm:$0xf]
  %v536 = vld [vmem:[%s1 + $0x780] sm:$0xf]
  %v537 = vld [vmem:[%s1 + $0x784] sm:$0xf]
  %v538 = vld [vmem:[%s1 + $0x788] sm:$0xf]
  %v539 = vld [vmem:[%s1 + $0x78c] sm:$0xf]
  %v540 = vld [vmem:[%s1 + $0x790] sm:$0xf]
  %v541 = vld [vmem:[%s1 + $0x794] sm:$0xf]
  %v542 = vld [vmem:[%s1 + $0x798] sm:$0xf]
  %v543 = vld [vmem:[%s1 + $0x79c] sm:$0xf]
  %v544 = vld [vmem:[%s1 + $0x7a0] sm:$0xf]
  %v545 = vld [vmem:[%s1 + $0x7a4] sm:$0xf]
  %v546 = vld [vmem:[%s1 + $0x7a8] sm:$0xf]
  %v547 = vld [vmem:[%s1 + $0x7ac] sm:$0xf]
  %v548 = vld [vmem:[%s1 + $0x7b0] sm:$0xf]
  %v549 = vld [vmem:[%s1 + $0x7b4] sm:$0xf]
  %v550 = vld [vmem:[%s1 + $0x7b8] sm:$0xf]
  %v551 = vld [vmem:[%s1 + $0x7bc] sm:$0xf]
  %v552 = vld [vmem:[%s1 + $0x7c0] sm:$0xf]
  %v553 = vld [vmem:[%s1 + $0x7c4] sm:$0xf]
  %v554 = vld [vmem:[%s1 + $0x7c8] sm:$0xf]
  %v555 = vld [vmem:[%s1 + $0x7cc] sm:$0xf]
  %v556 = vld [vmem:[%s1 + $0x7d0] sm:$0xf]
  %v557 = vld [vmem:[%s1 + $0x7d4] sm:$0xf]
  %v558 = vld [vmem:[%s1 + $0x7d8] sm:$0xf]
  %v559 = vld [vmem:[%s1 + $0x7dc] sm:$0xf]
  %v560 = vld [vmem:[%s1 + $0x7e0] sm:$0xf]
  %v561 = vld [vmem:[%s1 + $0x7e4] sm:$0xf]
  %v562 = vld [vmem:[%s1 + $0x7e8] sm:$0xf]
  %v563 = vld [vmem:[%s1 + $0x7ec] sm:$0xf]
  %v564 = vld [vmem:[%s1 + $0x7f0] sm:$0xf]
  %v565 = vld [vmem:[%s1 + $0x7f4] sm:$0xf]
  %v566 = vld [vmem:[%s1 + $0x7f8] sm:$0xf]
  %v567 = vld [vmem:[%s1 + $0x7fc] sm:$0xf]
  %v568 = vld [vmem:[%s1 + $0x800] sm:$0xf]
  %v569 = vld [vmem:[%s1 + $0x804] sm:$0xf]
  %v570 = vld [vmem:[%s1 + $0x808] sm:$0xf]
  %v571 = vld [vmem:[%s1 + $0x80c] sm:$0xf]
  %v572 = vld [vmem:[%s1 + $0x810] sm:$0xf]
  %v573 = vld [vmem:[%s1 + $0x814] sm:$0xf]
  %v574 = vld [vmem:[%s1 + $0x818] sm:$0xf]
  %v575 = vld [vmem:[%s1 + $0x81c] sm:$0xf]
  %v576 = vld [vmem:[%s1 + $0x820] sm:$0xf]
  %v577 = vld [vmem:[%s1 + $0x824] sm:$0xf]
  %v578 = vld [vmem:[%s1 + $0x828] sm:$0xf]
  %v579 = vld [vmem:[%s1 + $0x82c] sm:$0xf]
  %v580 = vld [vmem:[%s1 + $0x830] sm:$0xf]
  %v581 = vld [vmem:[%s1 + $0x834] sm:$0xf]
  %v582 = vld [vmem:[%s1 + $0x838] sm:$0xf]
  %v583 = vld [vmem:[%s1 + $0x83c] sm:$0xf]
  %v584 = vld [vmem:[%s1 + $0x840] sm:$0xf]
  %v585 = vld [vmem:[%s1 + $0x844] sm:$0xf]
  %v586 = vld [vmem:[%s1 + $0x848] sm:$0xf]
  %v587 = vld [vmem:[%s1 + $0x84c] sm:$0xf]
  %v588 = vld [vmem:[%s1 + $0x850] sm:$0xf]
  %v589 = vld [vmem:[%s1 + $0x854] sm:$0xf]
  %v590 = vld [vmem:[%s1 + $0x858] sm:$0xf]
  %v591 = vld [vmem:[%s1 + $0x85c] sm:$0xf]
  %v592 = vld [vmem:[%s1 + $0x860] sm:$0xf]
  %v593 = vld [vmem:[%s1 + $0x864] sm:$0xf]
  %v594 = vld [vmem:[%s1 + $0x868] sm:$0xf]
  %v595 = vld [vmem:[%s1 + $0x86c] sm:$0xf]
  %v596 = vld [vmem:[%s1 + $0x870] sm:$0xf]
  %v597 = vld [vmem:[%s1 + $0x874] sm:$0xf]
  %v598 = vld [vmem:[%s1 + $0x878] sm:$0xf]
  %v599 = vld [vmem:[%s1 + $0x87c] sm:$0xf]
  %v600 = vld [vmem:[%s1 + $0x880] sm:$0xf]
  %v601 = vld [vmem:[%s1 + $0x884] sm:$0xf]
  %v602 = vld [vmem:[%s1 + $0x888] sm:$0xf]
  %v603 = vld [vmem:[%s1 + $0x88c] sm:$0xf]
  %v604 = vld [vmem:[%s1 + $0x890] sm:$0xf]
  %v605 = vld [vmem:[%s1 + $0x894] sm:$0xf]
  %v606 = vld [vmem:[%s1 + $0x898] sm:$0xf]
  %v607 = vld [vmem:[%s1 + $0x89c] sm:$0xf]
  %v608 = vld [vmem:[%s1 + $0x8a0] sm:$0xf]
  %v609 = vld [vmem:[%s1 + $0x8a4] sm:$0xf]
  %v610 = vld [vmem:[%s1 + $0x8a8] sm:$0xf]
  %v611 = vld [vmem:[%s1 + $0x8ac] sm:$0xf]
  %v612 = vld [vmem:[%s1 + $0x8b0] sm:$0xf]
  %v613 = vld [vmem:[%s1 + $0x8b4] sm:$0xf]
  %v614 = vld [vmem:[%s1 + $0x8b8] sm:$0xf]
  %v615 = vld [vmem:[%s1 + $0x8bc] sm:$0xf]
  %v616 = vld [vmem:[%s1 + $0x8c0] sm:$0xf]
  %v617 = vld [vmem:[%s1 + $0x8c4] sm:$0xf]
  %v618 = vld [vmem:[%s1 + $0x8c8] sm:$0xf]
  %v619 = vld [vmem:[%s1 + $0x8cc] sm:$0xf]
  %v620 = vld [vmem:[%s1 + $0x8d0] sm:$0xf]
  %v621 = vld [vmem:[%s1 + $0x8d4] sm:$0xf]
  %v622 = vld [vmem:[%s1 + $0x8d8] sm:$0xf]
  %v623 = vld [vmem:[%s1 + $0x8dc] sm:$0xf]
  %v624 = vld [vmem:[%s1 + $0x8e0] sm:$0xf]
  %v625 = vld [vmem:[%s1 + $0x8e4] sm:$0xf]
  %v626 = vld [vmem:[%s1 + $0x8e8] sm:$0xf]
  %v627 = vld [vmem:[%s1 + $0x8ec] sm:$0xf]
  %v628 = vld [vmem:[%s1 + $0x8f0] sm:$0xf]
  %v629 = vld [vmem:[%s1 + $0x8f4] sm:$0xf]
  %v630 = vld [vmem:[%s1 + $0x8f8] sm:$0xf]
  %v631 = vld [vmem:[%s1 + $0x8fc] sm:$0xf]
  %v632 = vld [vmem:[%s1 + $0x900] sm:$0xf]
  %v633 = vld [vmem:[%s1 + $0x904] sm:$0xf]
  %v634 = vld [vmem:[%s1 + $0x908] sm:$0xf]
  %v635 = vld [vmem:[%s1 + $0x90c] sm:$0xf]
  %v636 = vld [vmem:[%s1 + $0x910] sm:$0xf]
  %v637 = vld [vmem:[%s1 + $0x914] sm:$0xf]
  %v638 = vld [vmem:[%s1 + $0x918] sm:$0xf]
  %v639 = vld [vmem:[%s1 + $0x91c] sm:$0xf]
  %v640 = vld [vmem:[%s1 + $0x920] sm:$0xf]
  %v641 = vld [vmem:[%s1 + $0x924] sm:$0xf]
  %v642 = vld [vmem:[%s1 + $0x928] sm:$0xf]
  %v643 = vld [vmem:[%s1 + $0x92c] sm:$0xf]
  %v644 = vld [vmem:[%s1 + $0x930] sm:$0xf]
  %v645 = vld [vmem:[%s1 + $0x934] sm:$0xf]
  %v646 = vld [vmem:[%s1 + $0x938] sm:$0xf]
  %v647 = vld [vmem:[%s1 + $0x93c] sm:$0xf]
  %v648 = vld [vmem:[%s1 + $0x940] sm:$0xf]
  %v649 = vld [vmem:[%s1 + $0x944] sm:$0xf]
  %v650 = vld [vmem:[%s1 + $0x948] sm:$0xf]
  %v651 = vld [vmem:[%s1 + $0x94c] sm:$0xf]
  %v652 = vld [vmem:[%s1 + $0x950] sm:$0xf]
  %v653 = vld [vmem:[%s1 + $0x954] sm:$0xf]
  %v654 = vld [vmem:[%s1 + $0x958] sm:$0xf]
  %v655 = vld [vmem:[%s1 + $0x95c] sm:$0xf]
  %v656 = vld [vmem:[%s1 + $0x960] sm:$0xf]
  %v657 = vld [vmem:[%s1 + $0x964] sm:$0xf]
  %v658 = vld [vmem:[%s1 + $0x968] sm:$0xf]
  %v659 = vld [vmem:[%s1 + $0x96c] sm:$0xf]
  %v660 = vld [vmem:[%s1 + $0x970] sm:$0xf]
  %v661 = vld [vmem:[%s1 + $0x974] sm:$0xf]
  %v662 = vld [vmem:[%s1 + $0x978] sm:$0xf]
  %v663 = vld [vmem:[%s1 + $0x97c] sm:$0xf]
  %v664 = vld [vmem:[%s1 + $0x980] sm:$0xf]
  %v665 = vld [vmem:[%s1 + $0x984] sm:$0xf]
  %v666 = vld [vmem:[%s1 + $0x988] sm:$0xf]
  %v667 = vld [vmem:[%s1 + $0x98c] sm:$0xf]
  %v668 = vld [vmem:[%s1 + $0x990] sm:$0xf]
  %v669 = vld [vmem:[%s1 + $0x994] sm:$0xf]
  %v670 = vld [vmem:[%s1 + $0x998] sm:$0xf]
  %v671 = vld [vmem:[%s1 + $0x99c] sm:$0xf]
  %v672 = vld [vmem:[%s1 + $0x9a0] sm:$0xf]
  %v673 = vld [vmem:[%s1 + $0x9a4] sm:$0xf]
  %v674 = vld [vmem:[%s1 + $0x9a8] sm:$0xf]
  %v675 = vld [vmem:[%s1 + $0x9ac] sm:$0xf]
  %v676 = vld [vmem:[%s1 + $0x9b0] sm:$0xf]
  %v677 = vld [vmem:[%s1 + $0x9b4] sm:$0xf]
  %v678 = vld [vmem:[%s1 + $0x9b8] sm:$0xf]
  %v679 = vld [vmem:[%s1 + $0x9bc] sm:$0xf]
  %v680 = vld [vmem:[%s1 + $0x9c0] sm:$0xf]
  %v681 = vld [vmem:[%s1 + $0x9c4] sm:$0xf]
  %v682 = vld [vmem:[%s1 + $0x9c8] sm:$0xf]
  %v683 = vld [vmem:[%s1 + $0x9cc] sm:$0xf]
  %v684 = vld [vmem:[%s1 + $0x9d0] sm:$0xf]
  %v685 = vld [vmem:[%s1 + $0x9d4] sm:$0xf]
  %v686 = vld [vmem:[%s1 + $0x9d8] sm:$0xf]
  %v687 = vld [vmem:[%s1 + $0x9dc] sm:$0xf]
  %v688 = vld [vmem:[%s1 + $0x9e0] sm:$0xf]
  %v689 = vld [vmem:[%s1 + $0x9e4] sm:$0xf]
  %v690 = vld [vmem:[%s1 + $0x9e8] sm:$0xf]
  %v691 = vld [vmem:[%s1 + $0x9ec] sm:$0xf]
  %v692 = vld [vmem:[%s1 + $0x9f0] sm:$0xf]
  %v693 = vld [vmem:[%s1 + $0x9f4] sm:$0xf]
  %v694 = vld [vmem:[%s1 + $0x9f8] sm:$0xf]
  %v695 = vld [vmem:[%s1 + $0x9fc] sm:$0xf]
  %v696 = vld [vmem:[%s1 + $0xa00] sm:$0xf]
  %v697 = vld [vmem:[%s1 + $0xa04] sm:$0xf]
  %v698 = vld [vmem:[%s1 + $0xa08] sm:$0xf]
  %v699 = vld [vmem:[%s1 + $0xa0c] sm:$0xf]
  %v700 = vld [vmem:[%s1 + $0xa10] sm:$0xf]
  %v701 = vld [vmem:[%s1 + $0xa14] sm:$0xf]
  %v702 = vld [vmem:[%s1 + $0xa18] sm:$0xf]
  %v703 = vld [vmem:[%s1 + $0xa1c] sm:$0xf]
  %v704 = vld [vmem:[%s1 + $0xa20] sm:$0xf]
  %v705 = vld [vmem:[%s1 + $0xa24] sm:$0xf]
  %v706 = vld [vmem:[%s1 + $0xa28] sm:$0xf]
  %v707 = vld [vmem:[%s1 + $0xa2c] sm:$0xf]
  %v708 = vld [vmem:[%s1 + $0xa30] sm:$0xf]
  %v709 = vld [vmem:[%s1 + $0xa34] sm:$0xf]
  %v710 = vld [vmem:[%s1 + $0xa38] sm:$0xf]
  %v711 = vld [vmem:[%s1 + $0xa3c] sm:$0xf]
  %v712 = vld [vmem:[%s1 + $0xa40] sm:$0xf]
  %v713 = vld [vmem:[%s1 + $0xa44] sm:$0xf]
  %v714 = vld [vmem:[%s1 + $0xa48] sm:$0xf]
  %v715 = vld [vmem:[%s1 + $0xa4c] sm:$0xf]
  %v716 = vld [vmem:[%s1 + $0xa50] sm:$0xf]
  %v717 = vld [vmem:[%s1 + $0xa54] sm:$0xf]
  %v718 = vld [vmem:[%s1 + $0xa58] sm:$0xf]
  %v719 = vld [vmem:[%s1 + $0xa5c] sm:$0xf]
  %v720 = vld [vmem:[%s1 + $0xa60] sm:$0xf]
  %v721 = vld [vmem:[%s1 + $0xa64] sm:$0xf]
  %v722 = vld [vmem:[%s1 + $0xa68] sm:$0xf]
  %v723 = vld [vmem:[%s1 + $0xa6c] sm:$0xf]
  %v724 = vld [vmem:[%s1 + $0xa70] sm:$0xf]
  %v725 = vld [vmem:[%s1 + $0xa74] sm:$0xf]
  %v726 = vld [vmem:[%s1 + $0xa78] sm:$0xf]
  %v727 = vld [vmem:[%s1 + $0xa7c] sm:$0xf]
  %v728 = vld [vmem:[%s1 + $0xa80] sm:$0xf]
  %v729 = vld [vmem:[%s1 + $0xa84] sm:$0xf]
  %v730 = vld [vmem:[%s1 + $0xa88] sm:$0xf]
  %v731 = vld [vmem:[%s1 + $0xa8c] sm:$0xf]
  %v732 = vld [vmem:[%s1 + $0xa90] sm:$0xf]
  %v733 = vld [vmem:[%s1 + $0xa94] sm:$0xf]
  %v734 = vld [vmem:[%s1 + $0xa98] sm:$0xf]
  %v735 = vld [vmem:[%s1 + $0xa9c] sm:$0xf]
  %v736 = vld [vmem:[%s1 + $0xaa0] sm:$0xf]
  %v737 = vld [vmem:[%s1 + $0xaa4] sm:$0xf]
  %v738 = vld [vmem:[%s1 + $0xaa8] sm:$0xf]
  %v739 = vld [vmem:[%s1 + $0xaac] sm:$0xf]
  %v740 = vld [vmem:[%s1 + $0xab0] sm:$0xf]
  %v741 = vld [vmem:[%s1 + $0xab4] sm:$0xf]
  %v742 = vld [vmem:[%s1 + $0xab8] sm:$0xf]
  %v743 = vld [vmem:[%s1 + $0xabc] sm:$0xf]
  %v744 = vld [vmem:[%s1 + $0xac0] sm:$0xf]
  %v745 = vld [vmem:[%s1 + $0xac4] sm:$0xf]
  %v746 = vld [vmem:[%s1 + $0xac8] sm:$0xf]
  %v747 = vld [vmem:[%s1 + $0xacc] sm:$0xf]
  %v748 = vld [vmem:[%s1 + $0xad0] sm:$0xf]
  %v749 = vld [vmem:[%s1 + $0xad4] sm:$0xf]
  %v750 = vld [vmem:[%s1 + $0xad8] sm:$0xf]
  %v751 = vld [vmem:[%s1 + $0xadc] sm:$0xf]
  %v752 = vld [vmem:[%s1 + $0xae0] sm:$0xf]
  %v753 = vld [vmem:[%s1 + $0xae4] sm:$0xf]
  %v754 = vld [vmem:[%s1 + $0xae8] sm:$0xf]
  %v755 = vld [vmem:[%s1 + $0xaec] sm:$0xf]
  %v756 = vld [vmem:[%s1 + $0xaf0] sm:$0xf]
  %v757 = vld [vmem:[%s1 + $0xaf4] sm:$0xf]
  %v758 = vld [vmem:[%s1 + $0xaf8] sm:$0xf]
  %v759 = vld [vmem:[%s1 + $0xafc] sm:$0xf]
  %v760 = vld [vmem:[%s1 + $0xb00] sm:$0xf]
  %v761 = vld [vmem:[%s1 + $0xb04] sm:$0xf]
  %v762 = vld [vmem:[%s1 + $0xb08] sm:$0xf]
  %v763 = vld [vmem:[%s1 + $0xb0c] sm:$0xf]
  %v764 = vld [vmem:[%s1 + $0xb10] sm:$0xf]
  %v765 = vld [vmem:[%s1 + $0xb14] sm:$0xf]
  %v766 = vld [vmem:[%s1 + $0xb18] sm:$0xf]
  %v767 = vld [vmem:[%s1 + $0xb1c] sm:$0xf]
  %v768 = vld [vmem:[%s1 + $0xb20] sm:$0xf]
  %v769 = vld [vmem:[%s1 + $0xb24] sm:$0xf]
  %v770 = vld [vmem:[%s1 + $0xb28] sm:$0xf]
  %v771 = vld [vmem:[%s1 + $0xb2c] sm:$0xf]
  %v772 = vld [vmem:[%s1 + $0xb30] sm:$0xf]
  %v773 = vld [vmem:[%s1 + $0xb34] sm:$0xf]
  %v774 = vld [vmem:[%s1 + $0xb38] sm:$0xf]
  %v775 = vld [vmem:[%s1 + $0xb3c] sm:$0xf]
  %v776 = vld [vmem:[%s1 + $0xb40] sm:$0xf]
  %v777 = vld [vmem:[%s1 + $0xb44] sm:$0xf]
  %v778 = vld [vmem:[%s1 + $0xb48] sm:$0xf]
  %v779 = vld [vmem:[%s1 + $0xb4c] sm:$0xf]
  %v780 = vld [vmem:[%s1 + $0xb50] sm:$0xf]
  %v781 = vld [vmem:[%s1 + $0xb54] sm:$0xf]
  %v782 = vld [vmem:[%s5] sm:$0x1]
  %v784 = vperm.slane %v782, 0
  %v809 = vunpack.c.l.b16 %v33
  %v810 = vunpack.c.h.b16 %v33
  %v811 = vunpack.c.l.b16 %v34
  %v812 = vunpack.c.h.b16 %v34
  %v813 = vunpack.c.l.b16 %v35
  %v814 = vunpack.c.h.b16 %v35
  %v815 = vunpack.c.l.b16 %v36
  %v816 = vunpack.c.h.b16 %v36
  %v817 = vunpack.c.l.b16 %v37
  %v818 = vunpack.c.h.b16 %v37
  %v819 = vunpack.c.l.b16 %v38
  %v820 = vunpack.c.h.b16 %v38
  %v821 = vunpack.c.l.b16 %v39
  %v822 = vunpack.c.h.b16 %v39
  %v823 = vunpack.c.l.b16 %v40
  %v824 = vunpack.c.h.b16 %v40
  %v825 = vunpack.c.l.b16 %v41
  %v826 = vunpack.c.h.b16 %v41
  %v827 = vunpack.c.l.b16 %v42
  %v828 = vunpack.c.h.b16 %v42
  %v829 = vunpack.c.l.b16 %v43
  %v830 = vunpack.c.h.b16 %v43
  %v831 = vunpack.c.l.b16 %v44
  %v832 = vunpack.c.h.b16 %v44
  %v833 = vunpack.c.l.b16 %v45
  %v834 = vunpack.c.h.b16 %v45
  %v835 = vunpack.c.l.b16 %v46
  %v836 = vunpack.c.h.b16 %v46
  %v837 = vunpack.c.l.b16 %v47
  %v838 = vunpack.c.h.b16 %v47
  %v839 = vunpack.c.l.b16 %v48
  %v840 = vunpack.c.h.b16 %v48
  %v841 = vunpack.c.l.b16 %v49
  %v842 = vunpack.c.h.b16 %v49
  %v843 = vunpack.c.l.b16 %v50
  %v844 = vunpack.c.h.b16 %v50
  %v845 = vunpack.c.l.b16 %v51
  %v846 = vunpack.c.h.b16 %v51
  %v847 = vunpack.c.l.b16 %v52
  %v848 = vunpack.c.h.b16 %v52
  %v849 = vunpack.c.l.b16 %v53
  %v850 = vunpack.c.h.b16 %v53
  %v851 = vunpack.c.l.b16 %v54
  %v852 = vunpack.c.h.b16 %v54
  %v853 = vunpack.c.l.b16 %v55
  %v854 = vunpack.c.h.b16 %v55
  %v855 = vpack.c.b16 %v809, %v809
  %v856 = vpack.c.b16 %v810, %v810
  %v857 = vpack.c.b16 %v811, %v811
  %v858 = vpack.c.b16 %v812, %v812
  %v859 = vpack.c.b16 %v813, %v813
  %v860 = vpack.c.b16 %v814, %v814
  %v861 = vpack.c.b16 %v815, %v815
  %v862 = vpack.c.b16 %v816, %v816
  %v863 = vpack.c.b16 %v817, %v817
  %v864 = vpack.c.b16 %v818, %v818
  %v865 = vpack.c.b16 %v819, %v819
  %v866 = vpack.c.b16 %v820, %v820
  %v867 = vpack.c.b16 %v821, %v821
  %v868 = vpack.c.b16 %v822, %v822
  %v869 = vpack.c.b16 %v823, %v823
  %v870 = vpack.c.b16 %v824, %v824
  %v871 = vpack.c.b16 %v825, %v825
  %v872 = vpack.c.b16 %v826, %v826
  %v873 = vpack.c.b16 %v827, %v827
  %v874 = vpack.c.b16 %v828, %v828
  %v875 = vpack.c.b16 %v829, %v829
  %v876 = vpack.c.b16 %v830, %v830
  %v877 = vpack.c.b16 %v831, %v831
  %v878 = vpack.c.b16 %v832, %v832
  %v879 = vpack.c.b16 %v833, %v833
  %v880 = vpack.c.b16 %v834, %v834
  %v881 = vpack.c.b16 %v835, %v835
  %v882 = vpack.c.b16 %v836, %v836
  %v883 = vpack.c.b16 %v837, %v837
  %v884 = vpack.c.b16 %v838, %v838
  %v885 = vpack.c.b16 %v839, %v839
  %v886 = vpack.c.b16 %v840, %v840
  %v887 = vpack.c.b16 %v841, %v841
  %v888 = vpack.c.b16 %v842, %v842
  %v889 = vpack.c.b16 %v843, %v843
  %v890 = vpack.c.b16 %v844, %v844
  %v891 = vpack.c.b16 %v845, %v845
  %v892 = vpack.c.b16 %v846, %v846
  %v893 = vpack.c.b16 %v847, %v847
  %v894 = vpack.c.b16 %v848, %v848
  %v895 = vpack.c.b16 %v849, %v849
  %v896 = vpack.c.b16 %v850, %v850
  %v897 = vpack.c.b16 %v851, %v851
  %v898 = vpack.c.b16 %v852, %v852
  %v899 = vpack.c.b16 %v853, %v853
  %v900 = vpack.c.b16 %v854, %v854
  %v1672 = vunpack.c.l.b16 %v56
  %v1673 = vunpack.c.l.b16 %v57
  %v1674 = vunpack.c.l.b16 %v58
  %v1675 = vunpack.c.l.b16 %v59
  %v1676 = vunpack.c.l.b16 %v60
  %v1677 = vunpack.c.l.b16 %v61
  %v1678 = vunpack.c.l.b16 %v62
  %v1679 = vunpack.c.l.b16 %v63
  %v1680 = vunpack.c.l.b16 %v64
  %v1681 = vunpack.c.l.b16 %v65
  %v1682 = vunpack.c.l.b16 %v66
  %v1683 = vunpack.c.l.b16 %v67
  %v1684 = vunpack.c.l.b16 %v68
  %v1685 = vunpack.c.l.b16 %v69
  %v1686 = vunpack.c.l.b16 %v70
  %v1687 = vunpack.c.l.b16 %v71
  %v1688 = vunpack.c.l.b16 %v72
  %v1689 = vunpack.c.l.b16 %v73
  %v1690 = vunpack.c.l.b16 %v74
  %v1691 = vunpack.c.l.b16 %v75
  %v1692 = vunpack.c.l.b16 %v76
  %v1693 = vunpack.c.l.b16 %v77
  %v1694 = vunpack.c.l.b16 %v78
  %v1695 = vunpack.c.l.b16 %v79
  %v1696 = vunpack.c.l.b16 %v80
  %v1697 = vunpack.c.l.b16 %v81
  %v1698 = vunpack.c.l.b16 %v82
  %v1699 = vunpack.c.l.b16 %v83
  %v1700 = vunpack.c.l.b16 %v84
  %v1701 = vunpack.c.l.b16 %v85
  %v1702 = vunpack.c.l.b16 %v86
  %v1703 = vunpack.c.l.b16 %v87
  %v1704 = vunpack.c.l.b16 %v88
  %v1705 = vunpack.c.l.b16 %v89
  %v1706 = vunpack.c.l.b16 %v90
  %v1707 = vunpack.c.l.b16 %v91
  %v1708 = vunpack.c.l.b16 %v92
  %v1709 = vunpack.c.l.b16 %v93
  %v1710 = vunpack.c.l.b16 %v94
  %v1711 = vunpack.c.l.b16 %v95
  %v1712 = vunpack.c.l.b16 %v96
  %v1713 = vunpack.c.l.b16 %v97
  %v1714 = vunpack.c.l.b16 %v98
  %v1715 = vunpack.c.l.b16 %v99
  %v1716 = vunpack.c.l.b16 %v100
  %v1717 = vunpack.c.l.b16 %v101
  %v1718 = vunpack.c.l.b16 %v102
  %v1719 = vunpack.c.l.b16 %v103
  %v1720 = vunpack.c.l.b16 %v104
  %v1721 = vunpack.c.l.b16 %v105
  %v1722 = vunpack.c.l.b16 %v106
  %v1723 = vunpack.c.l.b16 %v107
  %v1724 = vunpack.c.l.b16 %v108
  %v1725 = vunpack.c.l.b16 %v109
  %v1726 = vunpack.c.l.b16 %v110
  %v1727 = vunpack.c.l.b16 %v111
  %v1728 = vunpack.c.l.b16 %v112
  %v1729 = vunpack.c.l.b16 %v113
  %v1730 = vunpack.c.l.b16 %v114
  %v1731 = vunpack.c.l.b16 %v115
  %v1732 = vunpack.c.l.b16 %v116
  %v1733 = vunpack.c.l.b16 %v117
  %v1734 = vunpack.c.l.b16 %v118
  %v1735 = vunpack.c.l.b16 %v119
  %v1736 = vunpack.c.l.b16 %v120
  %v1737 = vunpack.c.l.b16 %v121
  %v1738 = vunpack.c.l.b16 %v122
  %v1739 = vunpack.c.l.b16 %v123
  %v1740 = vunpack.c.l.b16 %v124
  %v1741 = vunpack.c.l.b16 %v125
  %v1742 = vunpack.c.l.b16 %v126
  %v1743 = vunpack.c.l.b16 %v127
  %v1744 = vunpack.c.l.b16 %v128
  %v1745 = vunpack.c.l.b16 %v129
  %v1746 = vunpack.c.l.b16 %v130
  %v1747 = vunpack.c.l.b16 %v131
  %v1748 = vunpack.c.l.b16 %v132
  %v1749 = vunpack.c.l.b16 %v133
  %v1750 = vunpack.c.l.b16 %v134
  %v1751 = vunpack.c.l.b16 %v135
  %v1752 = vunpack.c.l.b16 %v136
  %v1753 = vunpack.c.l.b16 %v137
  %v1754 = vunpack.c.l.b16 %v138
  %v1755 = vunpack.c.l.b16 %v139
  %v1756 = vunpack.c.l.b16 %v140
  %v1757 = vunpack.c.l.b16 %v141
  %v1758 = vunpack.c.l.b16 %v142
  %v1759 = vunpack.c.l.b16 %v143
  %v1760 = vunpack.c.l.b16 %v144
  %v1761 = vunpack.c.l.b16 %v145
  %v1762 = vunpack.c.l.b16 %v146
  %v1763 = vunpack.c.l.b16 %v147
  %v1764 = vunpack.c.l.b16 %v148
  %v1765 = vunpack.c.l.b16 %v149
  %v1766 = vunpack.c.l.b16 %v150
  %v1767 = vunpack.c.l.b16 %v151
  %v1768 = vunpack.c.l.b16 %v152
  %v1769 = vunpack.c.l.b16 %v153
  %v1770 = vunpack.c.l.b16 %v154
  %v1771 = vunpack.c.l.b16 %v155
  %v1772 = vunpack.c.l.b16 %v156
  %v1773 = vunpack.c.l.b16 %v157
  %v1774 = vunpack.c.l.b16 %v158
  %v1775 = vunpack.c.l.b16 %v159
  %v1776 = vunpack.c.l.b16 %v160
  %v1777 = vunpack.c.l.b16 %v161
  %v1778 = vunpack.c.l.b16 %v162
  %v1779 = vunpack.c.l.b16 %v163
  %v1780 = vunpack.c.l.b16 %v164
  %v1781 = vunpack.c.l.b16 %v165
  %v1782 = vunpack.c.l.b16 %v166
  %v1783 = vunpack.c.l.b16 %v167
  %v1784 = vunpack.c.l.b16 %v168
  %v1785 = vunpack.c.l.b16 %v169
  %v1786 = vunpack.c.l.b16 %v170
  %v1787 = vunpack.c.l.b16 %v171
  %v1788 = vunpack.c.l.b16 %v172
  %v1789 = vunpack.c.l.b16 %v173
  %v1790 = vunpack.c.l.b16 %v174
  %v1791 = vunpack.c.l.b16 %v175
  %v1792 = vunpack.c.l.b16 %v176
  %v1793 = vunpack.c.l.b16 %v177
  %v1794 = vunpack.c.l.b16 %v178
  %v1795 = vunpack.c.l.b16 %v179
  %v1796 = vunpack.c.l.b16 %v180
  %v1797 = vunpack.c.l.b16 %v181
  %v1798 = vunpack.c.l.b16 %v182
  %v1799 = vunpack.c.l.b16 %v183
  %v1800 = vunpack.c.l.b16 %v184
  %v1801 = vunpack.c.l.b16 %v185
  %v1802 = vunpack.c.l.b16 %v186
  %v1803 = vunpack.c.l.b16 %v187
  %v1804 = vunpack.c.l.b16 %v188
  %v1805 = vunpack.c.l.b16 %v189
  %v1806 = vunpack.c.l.b16 %v190
  %v1807 = vunpack.c.l.b16 %v191
  %v1808 = vunpack.c.l.b16 %v192
  %v1809 = vunpack.c.l.b16 %v193
  %v1810 = vunpack.c.l.b16 %v194
  %v1811 = vunpack.c.l.b16 %v195
  %v1812 = vunpack.c.l.b16 %v196
  %v1813 = vunpack.c.l.b16 %v197
  %v1814 = vunpack.c.l.b16 %v198
  %v1815 = vunpack.c.l.b16 %v199
  %v1816 = vunpack.c.l.b16 %v200
  %v1817 = vunpack.c.l.b16 %v201
  %v1818 = vunpack.c.l.b16 %v202
  %v1819 = vunpack.c.l.b16 %v203
  %v1820 = vunpack.c.l.b16 %v204
  %v1821 = vunpack.c.l.b16 %v205
  %v1822 = vunpack.c.l.b16 %v206
  %v1823 = vunpack.c.l.b16 %v207
  %v1824 = vunpack.c.l.b16 %v208
  %v1825 = vunpack.c.l.b16 %v209
  %v1826 = vunpack.c.l.b16 %v210
  %v1827 = vunpack.c.l.b16 %v211
  %v1828 = vunpack.c.l.b16 %v212
  %v1829 = vunpack.c.l.b16 %v213
  %v1830 = vunpack.c.l.b16 %v214
  %v1831 = vunpack.c.l.b16 %v215
  %v1832 = vunpack.c.l.b16 %v216
  %v1833 = vunpack.c.l.b16 %v217
  %v1834 = vunpack.c.l.b16 %v218
  %v1835 = vunpack.c.l.b16 %v219
  %v1836 = vunpack.c.l.b16 %v220
  %v1837 = vunpack.c.l.b16 %v221
  %v1838 = vunpack.c.l.b16 %v222
  %v1839 = vunpack.c.l.b16 %v223
  %v1840 = vunpack.c.l.b16 %v224
  %v1841 = vunpack.c.l.b16 %v225
  %v1842 = vunpack.c.l.b16 %v226
  %v1843 = vunpack.c.l.b16 %v227
  %v1844 = vunpack.c.l.b16 %v228
  %v1845 = vunpack.c.l.b16 %v229
  %v1846 = vunpack.c.l.b16 %v230
  %v1847 = vunpack.c.l.b16 %v231
  %v1848 = vunpack.c.l.b16 %v232
  %v1849 = vunpack.c.l.b16 %v233
  %v1850 = vunpack.c.l.b16 %v234
  %v1851 = vunpack.c.l.b16 %v235
  %v1852 = vunpack.c.l.b16 %v236
  %v1853 = vunpack.c.l.b16 %v237
  %v1854 = vunpack.c.l.b16 %v238
  %v1855 = vunpack.c.l.b16 %v239
  %v1856 = vunpack.c.l.b16 %v240
  %v1857 = vunpack.c.l.b16 %v241
  %v1858 = vunpack.c.l.b16 %v242
  %v1859 = vunpack.c.l.b16 %v243
  %v1860 = vunpack.c.l.b16 %v244
  %v1861 = vunpack.c.l.b16 %v245
  %v1862 = vunpack.c.l.b16 %v246
  %v1863 = vunpack.c.l.b16 %v247
  %v1864 = vunpack.c.l.b16 %v248
  %v1865 = vunpack.c.l.b16 %v249
  %v1866 = vunpack.c.l.b16 %v250
  %v1867 = vunpack.c.l.b16 %v251
  %v1868 = vunpack.c.l.b16 %v252
  %v1869 = vunpack.c.l.b16 %v253
  %v1870 = vunpack.c.l.b16 %v254
  %v1871 = vunpack.c.l.b16 %v255
  %v1872 = vunpack.c.l.b16 %v256
  %v1873 = vunpack.c.l.b16 %v257
  %v1874 = vunpack.c.l.b16 %v258
  %v1875 = vunpack.c.l.b16 %v259
  %v1876 = vunpack.c.l.b16 %v260
  %v1877 = vunpack.c.l.b16 %v261
  %v1878 = vunpack.c.l.b16 %v262
  %v1879 = vunpack.c.l.b16 %v263
  %v1880 = vunpack.c.l.b16 %v264
  %v1881 = vunpack.c.l.b16 %v265
  %v1882 = vunpack.c.l.b16 %v266
  %v1883 = vunpack.c.l.b16 %v267
  %v1884 = vunpack.c.l.b16 %v268
  %v1885 = vunpack.c.l.b16 %v269
  %v1886 = vunpack.c.l.b16 %v270
  %v1887 = vunpack.c.l.b16 %v271
  %v1888 = vunpack.c.l.b16 %v272
  %v1889 = vunpack.c.l.b16 %v273
  %v1890 = vunpack.c.l.b16 %v274
  %v1891 = vunpack.c.l.b16 %v275
  %v1892 = vunpack.c.l.b16 %v276
  %v1893 = vunpack.c.l.b16 %v277
  %v1894 = vunpack.c.l.b16 %v278
  %v1895 = vunpack.c.l.b16 %v279
  %v1896 = vunpack.c.l.b16 %v280
  %v1897 = vunpack.c.l.b16 %v281
  %v1898 = vunpack.c.l.b16 %v282
  %v1899 = vunpack.c.l.b16 %v283
  %v1900 = vunpack.c.l.b16 %v284
  %v1901 = vunpack.c.l.b16 %v285
  %v1902 = vunpack.c.l.b16 %v286
  %v1903 = vunpack.c.l.b16 %v287
  %v1904 = vunpack.c.l.b16 %v288
  %v1905 = vunpack.c.l.b16 %v289
  %v1906 = vunpack.c.l.b16 %v290
  %v1907 = vunpack.c.l.b16 %v291
  %v1908 = vunpack.c.l.b16 %v292
  %v1909 = vunpack.c.l.b16 %v293
  %v1910 = vunpack.c.l.b16 %v294
  %v1911 = vunpack.c.l.b16 %v295
  %v1912 = vunpack.c.l.b16 %v296
  %v1913 = vunpack.c.l.b16 %v297
  %v1914 = vunpack.c.l.b16 %v298
  %v1915 = vunpack.c.l.b16 %v299
  %v1916 = vunpack.c.l.b16 %v300
  %v1917 = vunpack.c.l.b16 %v301
  %v1918 = vunpack.c.l.b16 %v302
  %v1919 = vunpack.c.l.b16 %v303
  %v1920 = vunpack.c.l.b16 %v304
  %v1921 = vunpack.c.l.b16 %v305
  %v1922 = vunpack.c.l.b16 %v306
  %v1923 = vunpack.c.l.b16 %v307
  %v1924 = vunpack.c.l.b16 %v308
  %v1925 = vunpack.c.l.b16 %v309
  %v1926 = vunpack.c.l.b16 %v310
  %v1927 = vunpack.c.l.b16 %v311
  %v1928 = vunpack.c.l.b16 %v312
  %v1929 = vunpack.c.l.b16 %v313
  %v1930 = vunpack.c.l.b16 %v314
  %v1931 = vunpack.c.l.b16 %v315
  %v1932 = vunpack.c.l.b16 %v316
  %v1933 = vunpack.c.l.b16 %v317
  %v1934 = vunpack.c.l.b16 %v318
  %v1935 = vunpack.c.l.b16 %v319
  %v1936 = vunpack.c.l.b16 %v320
  %v1937 = vunpack.c.l.b16 %v321
  %v1938 = vunpack.c.l.b16 %v322
  %v1939 = vunpack.c.l.b16 %v323
  %v1940 = vunpack.c.l.b16 %v324
  %v1941 = vunpack.c.l.b16 %v325
  %v1942 = vunpack.c.l.b16 %v326
  %v1943 = vunpack.c.l.b16 %v327
  %v1944 = vunpack.c.l.b16 %v328
  %v1945 = vunpack.c.l.b16 %v329
  %v1946 = vunpack.c.l.b16 %v330
  %v1947 = vunpack.c.l.b16 %v331
  %v1948 = vunpack.c.l.b16 %v332
  %v1949 = vunpack.c.l.b16 %v333
  %v1950 = vunpack.c.l.b16 %v334
  %v1951 = vunpack.c.l.b16 %v335
  %v1952 = vunpack.c.l.b16 %v336
  %v1953 = vunpack.c.l.b16 %v337
  %v1954 = vunpack.c.l.b16 %v338
  %v1955 = vunpack.c.l.b16 %v339
  %v1956 = vunpack.c.l.b16 %v340
  %v1957 = vunpack.c.l.b16 %v341
  %v1958 = vunpack.c.l.b16 %v342
  %v1959 = vunpack.c.l.b16 %v343
  %v1960 = vunpack.c.l.b16 %v344
  %v1961 = vunpack.c.l.b16 %v345
  %v1962 = vunpack.c.l.b16 %v346
  %v1963 = vunpack.c.l.b16 %v347
  %v1964 = vunpack.c.l.b16 %v348
  %v1965 = vunpack.c.l.b16 %v349
  %v1966 = vunpack.c.l.b16 %v350
  %v1967 = vunpack.c.l.b16 %v351
  %v1968 = vunpack.c.l.b16 %v352
  %v1969 = vunpack.c.l.b16 %v353
  %v1970 = vunpack.c.l.b16 %v354
  %v1971 = vunpack.c.l.b16 %v355
  %v1972 = vunpack.c.l.b16 %v356
  %v1973 = vunpack.c.l.b16 %v357
  %v1974 = vunpack.c.l.b16 %v358
  %v1975 = vunpack.c.l.b16 %v359
  %v1976 = vunpack.c.l.b16 %v360
  %v1977 = vunpack.c.l.b16 %v361
  %v1978 = vunpack.c.l.b16 %v362
  %v1979 = vunpack.c.l.b16 %v363
  %v1980 = vunpack.c.l.b16 %v364
  %v1981 = vunpack.c.l.b16 %v365
  %v1982 = vunpack.c.l.b16 %v366
  %v1983 = vunpack.c.l.b16 %v367
  %v1984 = vunpack.c.l.b16 %v368
  %v1985 = vunpack.c.l.b16 %v369
  %v1986 = vunpack.c.l.b16 %v370
  %v1987 = vunpack.c.l.b16 %v371
  %v1988 = vunpack.c.l.b16 %v372
  %v1989 = vunpack.c.l.b16 %v373
  %v1990 = vunpack.c.l.b16 %v374
  %v1991 = vunpack.c.l.b16 %v375
  %v1992 = vunpack.c.l.b16 %v376
  %v1993 = vunpack.c.l.b16 %v377
  %v1994 = vunpack.c.l.b16 %v378
  %v1995 = vunpack.c.l.b16 %v379
  %v1996 = vunpack.c.l.b16 %v380
  %v1997 = vunpack.c.l.b16 %v381
  %v1998 = vunpack.c.l.b16 %v382
  %v1999 = vunpack.c.l.b16 %v383
  %v2000 = vunpack.c.l.b16 %v384
  %v2001 = vunpack.c.l.b16 %v385
  %v2002 = vunpack.c.l.b16 %v386
  %v2003 = vunpack.c.l.b16 %v387
  %v2004 = vunpack.c.l.b16 %v388
  %v2005 = vunpack.c.l.b16 %v389
  %v2006 = vunpack.c.l.b16 %v390
  %v2007 = vunpack.c.l.b16 %v391
  %v2008 = vunpack.c.l.b16 %v392
  %v2009 = vunpack.c.l.b16 %v393
  %v2010 = vunpack.c.l.b16 %v394
  %v2011 = vunpack.c.l.b16 %v395
  %v2012 = vunpack.c.l.b16 %v396
  %v2013 = vunpack.c.l.b16 %v397
  %v2014 = vunpack.c.l.b16 %v398
  %v2015 = vunpack.c.l.b16 %v399
  %v2016 = vunpack.c.l.b16 %v400
  %v2017 = vunpack.c.l.b16 %v401
  %v2018 = vunpack.c.l.b16 %v402
  %v2019 = vunpack.c.l.b16 %v403
  %v2020 = vunpack.c.l.b16 %v404
  %v2021 = vunpack.c.l.b16 %v405
  %v2022 = vunpack.c.l.b16 %v406
  %v2023 = vunpack.c.l.b16 %v407
  %v2024 = vunpack.c.l.b16 %v408
  %v2025 = vunpack.c.l.b16 %v409
  %v2026 = vunpack.c.l.b16 %v410
  %v2027 = vunpack.c.l.b16 %v411
  %v2028 = vunpack.c.l.b16 %v412
  %v2029 = vunpack.c.l.b16 %v413
  %v2030 = vunpack.c.l.b16 %v414
  %v2031 = vunpack.c.l.b16 %v415
  %v2032 = vunpack.c.l.b16 %v416
  %v2033 = vunpack.c.l.b16 %v417
  %v2034 = vunpack.c.l.b16 %v418
  %v2035 = vunpack.c.l.b16 %v419
  %v2036 = vunpack.c.l.b16 %v420
  %v2037 = vunpack.c.l.b16 %v421
  %v2038 = vunpack.c.l.b16 %v422
  %v2039 = vunpack.c.l.b16 %v423
  %v2040 = vunpack.c.l.b16 %v424
  %v2041 = vunpack.c.l.b16 %v425
  %v2042 = vunpack.c.l.b16 %v426
  %v2043 = vunpack.c.l.b16 %v427
  %v2044 = vunpack.c.l.b16 %v428
  %v2045 = vunpack.c.l.b16 %v429
  %v2046 = vunpack.c.l.b16 %v430
  %v2047 = vunpack.c.l.b16 %v431
  %v2048 = vunpack.c.l.b16 %v432
  %v2049 = vunpack.c.l.b16 %v433
  %v2050 = vunpack.c.l.b16 %v434
  %v2051 = vunpack.c.l.b16 %v435
  %v2052 = vunpack.c.l.b16 %v436
  %v2053 = vunpack.c.l.b16 %v437
  %v2054 = vunpack.c.l.b16 %v438
  %v2055 = vunpack.c.l.b16 %v439
  %v2056 = vunpack.c.l.b16 %v440
  %v2057 = vunpack.c.l.b16 %v441
  %v2058 = vunpack.c.l.b16 %v442
  %v2059 = vunpack.c.l.b16 %v443
  %v2060 = vunpack.c.l.b16 %v444
  %v2061 = vunpack.c.l.b16 %v445
  %v2062 = vunpack.c.l.b16 %v446
  %v2063 = vunpack.c.l.b16 %v447
  %v2064 = vunpack.c.l.b16 %v448
  %v2065 = vunpack.c.l.b16 %v449
  %v2066 = vunpack.c.l.b16 %v450
  %v2067 = vunpack.c.l.b16 %v451
  %v2068 = vunpack.c.l.b16 %v452
  %v2069 = vunpack.c.l.b16 %v453
  %v2070 = vunpack.c.l.b16 %v454
  %v2071 = vunpack.c.l.b16 %v455
  %v2072 = vunpack.c.l.b16 %v456
  %v2073 = vunpack.c.l.b16 %v457
  %v2074 = vunpack.c.l.b16 %v458
  %v2075 = vunpack.c.l.b16 %v459
  %v2076 = vunpack.c.l.b16 %v460
  %v2077 = vunpack.c.l.b16 %v461
  %v2078 = vunpack.c.l.b16 %v462
  %v2079 = vunpack.c.l.b16 %v463
  %v2080 = vunpack.c.l.b16 %v464
  %v2081 = vunpack.c.l.b16 %v465
  %v2082 = vunpack.c.l.b16 %v466
  %v2083 = vunpack.c.l.b16 %v467
  %v2084 = vunpack.c.l.b16 %v468
  %v2085 = vunpack.c.l.b16 %v469
  %v2086 = vunpack.c.l.b16 %v470
  %v2087 = vunpack.c.l.b16 %v471
  %v2088 = vunpack.c.l.b16 %v472
  %v2089 = vunpack.c.l.b16 %v473
  %v2090 = vunpack.c.l.b16 %v474
  %v2091 = vunpack.c.l.b16 %v475
  %v2092 = vunpack.c.l.b16 %v476
  %v2093 = vunpack.c.l.b16 %v477
  %v2094 = vunpack.c.l.b16 %v478
  %v2095 = vunpack.c.l.b16 %v479
  %v2096 = vunpack.c.l.b16 %v480
  %v2097 = vunpack.c.l.b16 %v481
  %v2098 = vunpack.c.l.b16 %v482
  %v2099 = vunpack.c.l.b16 %v483
  %v2100 = vunpack.c.l.b16 %v484
  %v2101 = vunpack.c.l.b16 %v485
  %v2102 = vunpack.c.l.b16 %v486
  %v2103 = vunpack.c.l.b16 %v487
  %v2104 = vunpack.c.l.b16 %v488
  %v2105 = vunpack.c.l.b16 %v489
  %v2106 = vunpack.c.l.b16 %v490
  %v2107 = vunpack.c.l.b16 %v491
  %v2108 = vunpack.c.l.b16 %v492
  %v2109 = vunpack.c.l.b16 %v493
  %v2110 = vunpack.c.l.b16 %v494
  %v2111 = vunpack.c.l.b16 %v495
  %v2112 = vunpack.c.l.b16 %v496
  %v2113 = vunpack.c.l.b16 %v497
  %v2114 = vunpack.c.l.b16 %v498
  %v2115 = vunpack.c.l.b16 %v499
  %v2116 = vunpack.c.l.b16 %v500
  %v2117 = vunpack.c.l.b16 %v501
  %v2118 = vunpack.c.l.b16 %v502
  %v2119 = vunpack.c.l.b16 %v503
  %v2120 = vunpack.c.l.b16 %v504
  %v2121 = vunpack.c.l.b16 %v505
  %v2122 = vunpack.c.l.b16 %v506
  %v2123 = vunpack.c.l.b16 %v507
  %v2124 = vunpack.c.l.b16 %v508
  %v2125 = vunpack.c.l.b16 %v509
  %v2126 = vunpack.c.l.b16 %v510
  %v2127 = vunpack.c.l.b16 %v511
  %v2128 = vunpack.c.l.b16 %v512
  %v2129 = vunpack.c.l.b16 %v513
  %v2130 = vunpack.c.l.b16 %v514
  %v2131 = vunpack.c.l.b16 %v515
  %v2132 = vunpack.c.l.b16 %v516
  %v2133 = vunpack.c.l.b16 %v517
  %v2134 = vunpack.c.l.b16 %v518
  %v2135 = vunpack.c.l.b16 %v519
  %v2136 = vunpack.c.l.b16 %v520
  %v2137 = vunpack.c.l.b16 %v521
  %v2138 = vunpack.c.l.b16 %v522
  %v2139 = vunpack.c.l.b16 %v523
  %v2140 = vunpack.c.l.b16 %v524
  %v2141 = vunpack.c.l.b16 %v525
  %v2142 = vunpack.c.l.b16 %v526
  %v2143 = vunpack.c.l.b16 %v527
  %v2144 = vunpack.c.l.b16 %v528
  %v2145 = vunpack.c.l.b16 %v529
  %v2146 = vunpack.c.l.b16 %v530
  %v2147 = vunpack.c.l.b16 %v531
  %v2148 = vunpack.c.l.b16 %v532
  %v2149 = vunpack.c.l.b16 %v533
  %v2150 = vunpack.c.l.b16 %v534
  %v2151 = vunpack.c.l.b16 %v535
  %v2152 = vunpack.c.l.b16 %v536
  %v2153 = vunpack.c.l.b16 %v537
  %v2154 = vunpack.c.l.b16 %v538
  %v2155 = vunpack.c.l.b16 %v539
  %v2156 = vunpack.c.l.b16 %v540
  %v2157 = vunpack.c.l.b16 %v541
  %v2158 = vunpack.c.l.b16 %v542
  %v2159 = vunpack.c.l.b16 %v543
  %v2160 = vunpack.c.l.b16 %v544
  %v2161 = vunpack.c.l.b16 %v545
  %v2162 = vunpack.c.l.b16 %v546
  %v2163 = vunpack.c.l.b16 %v547
  %v2164 = vunpack.c.l.b16 %v548
  %v2165 = vunpack.c.l.b16 %v549
  %v2166 = vunpack.c.l.b16 %v550
  %v2167 = vunpack.c.l.b16 %v551
  %v2168 = vunpack.c.l.b16 %v552
  %v2169 = vunpack.c.l.b16 %v553
  %v2170 = vunpack.c.l.b16 %v554
  %v2171 = vunpack.c.l.b16 %v555
  %v2172 = vunpack.c.l.b16 %v556
  %v2173 = vunpack.c.l.b16 %v557
  %v2174 = vunpack.c.l.b16 %v558
  %v2175 = vunpack.c.l.b16 %v559
  %v2176 = vunpack.c.l.b16 %v560
  %v2177 = vunpack.c.l.b16 %v561
  %v2178 = vunpack.c.l.b16 %v562
  %v2179 = vunpack.c.l.b16 %v563
  %v2180 = vunpack.c.l.b16 %v564
  %v2181 = vunpack.c.l.b16 %v565
  %v2182 = vunpack.c.l.b16 %v566
  %v2183 = vunpack.c.l.b16 %v567
  %v2184 = vunpack.c.l.b16 %v568
  %v2185 = vunpack.c.l.b16 %v569
  %v2186 = vunpack.c.l.b16 %v570
  %v2187 = vunpack.c.l.b16 %v571
  %v2188 = vunpack.c.l.b16 %v572
  %v2189 = vunpack.c.l.b16 %v573
  %v2190 = vunpack.c.l.b16 %v574
  %v2191 = vunpack.c.l.b16 %v575
  %v2192 = vunpack.c.l.b16 %v576
  %v2193 = vunpack.c.l.b16 %v577
  %v2194 = vunpack.c.l.b16 %v578
  %v2195 = vunpack.c.l.b16 %v579
  %v2196 = vunpack.c.l.b16 %v580
  %v2197 = vunpack.c.l.b16 %v581
  %v2198 = vunpack.c.l.b16 %v582
  %v2199 = vunpack.c.l.b16 %v583
  %v2200 = vunpack.c.l.b16 %v584
  %v2201 = vunpack.c.l.b16 %v585
  %v2202 = vunpack.c.l.b16 %v586
  %v2203 = vunpack.c.l.b16 %v587
  %v2204 = vunpack.c.l.b16 %v588
  %v2205 = vunpack.c.l.b16 %v589
  %v2206 = vunpack.c.l.b16 %v590
  %v2207 = vunpack.c.l.b16 %v591
  %v2208 = vunpack.c.l.b16 %v592
  %v2209 = vunpack.c.l.b16 %v593
  %v2210 = vunpack.c.l.b16 %v594
  %v2211 = vunpack.c.l.b16 %v595
  %v2212 = vunpack.c.l.b16 %v596
  %v2213 = vunpack.c.l.b16 %v597
  %v2214 = vunpack.c.l.b16 %v598
  %v2215 = vunpack.c.l.b16 %v599
  %v2216 = vunpack.c.l.b16 %v600
  %v2217 = vunpack.c.l.b16 %v601
  %v2218 = vunpack.c.l.b16 %v602
  %v2219 = vunpack.c.l.b16 %v603
  %v2220 = vunpack.c.l.b16 %v604
  %v2221 = vunpack.c.l.b16 %v605
  %v2222 = vunpack.c.l.b16 %v606
  %v2223 = vunpack.c.l.b16 %v607
  %v2224 = vunpack.c.l.b16 %v608
  %v2225 = vunpack.c.l.b16 %v609
  %v2226 = vunpack.c.l.b16 %v610
  %v2227 = vunpack.c.l.b16 %v611
  %v2228 = vunpack.c.l.b16 %v612
  %v2229 = vunpack.c.l.b16 %v613
  %v2230 = vunpack.c.l.b16 %v614
  %v2231 = vunpack.c.l.b16 %v615
  %v2232 = vunpack.c.l.b16 %v616
  %v2233 = vunpack.c.l.b16 %v617
  %v2234 = vunpack.c.l.b16 %v618
  %v2235 = vunpack.c.l.b16 %v619
  %v2236 = vunpack.c.l.b16 %v620
  %v2237 = vunpack.c.l.b16 %v621
  %v2238 = vunpack.c.l.b16 %v622
  %v2239 = vunpack.c.l.b16 %v623
  %v2240 = vunpack.c.l.b16 %v624
  %v2241 = vunpack.c.l.b16 %v625
  %v2242 = vunpack.c.l.b16 %v626
  %v2243 = vunpack.c.l.b16 %v627
  %v2244 = vunpack.c.l.b16 %v628
  %v2245 = vunpack.c.l.b16 %v629
  %v2246 = vunpack.c.l.b16 %v630
  %v2247 = vunpack.c.l.b16 %v631
  %v2248 = vunpack.c.l.b16 %v632
  %v2249 = vunpack.c.l.b16 %v633
  %v2250 = vunpack.c.l.b16 %v634
  %v2251 = vunpack.c.l.b16 %v635
  %v2252 = vunpack.c.l.b16 %v636
  %v2253 = vunpack.c.l.b16 %v637
  %v2254 = vunpack.c.l.b16 %v638
  %v2255 = vunpack.c.l.b16 %v639
  %v2256 = vunpack.c.l.b16 %v640
  %v2257 = vunpack.c.l.b16 %v641
  %v2258 = vunpack.c.l.b16 %v642
  %v2259 = vunpack.c.l.b16 %v643
  %v2260 = vunpack.c.l.b16 %v644
  %v2261 = vunpack.c.l.b16 %v645
  %v2262 = vunpack.c.l.b16 %v646
  %v2263 = vunpack.c.l.b16 %v647
  %v2264 = vunpack.c.l.b16 %v648
  %v2265 = vunpack.c.l.b16 %v649
  %v2266 = vunpack.c.l.b16 %v650
  %v2267 = vunpack.c.l.b16 %v651
  %v2268 = vunpack.c.l.b16 %v652
  %v2269 = vunpack.c.l.b16 %v653
  %v2270 = vunpack.c.l.b16 %v654
  %v2271 = vunpack.c.l.b16 %v655
  %v2272 = vunpack.c.l.b16 %v656
  %v2273 = vunpack.c.l.b16 %v657
  %v2274 = vunpack.c.l.b16 %v658
  %v2275 = vunpack.c.l.b16 %v659
  %v2276 = vunpack.c.l.b16 %v660
  %v2277 = vunpack.c.l.b16 %v661
  %v2278 = vunpack.c.l.b16 %v662
  %v2279 = vunpack.c.l.b16 %v663
  %v2280 = vunpack.c.l.b16 %v664
  %v2281 = vunpack.c.l.b16 %v665
  %v2282 = vunpack.c.l.b16 %v666
  %v2283 = vunpack.c.l.b16 %v667
  %v2284 = vunpack.c.l.b16 %v668
  %v2285 = vunpack.c.l.b16 %v669
  %v2286 = vunpack.c.l.b16 %v670
  %v2287 = vunpack.c.l.b16 %v671
  %v2288 = vunpack.c.l.b16 %v672
  %v2289 = vunpack.c.l.b16 %v673
  %v2290 = vunpack.c.l.b16 %v674
  %v2291 = vunpack.c.l.b16 %v675
  %v2292 = vunpack.c.l.b16 %v676
  %v2293 = vunpack.c.l.b16 %v677
  %v2294 = vunpack.c.l.b16 %v678
  %v2295 = vunpack.c.l.b16 %v679
  %v2296 = vunpack.c.l.b16 %v680
  %v2297 = vunpack.c.l.b16 %v681
  %v2298 = vunpack.c.l.b16 %v682
  %v2299 = vunpack.c.l.b16 %v683
  %v2300 = vunpack.c.l.b16 %v684
  %v2301 = vunpack.c.l.b16 %v685
  %v2302 = vunpack.c.l.b16 %v686
  %v2303 = vunpack.c.l.b16 %v687
  %v2304 = vunpack.c.l.b16 %v688
  %v2305 = vunpack.c.l.b16 %v689
  %v2306 = vunpack.c.l.b16 %v690
  %v2307 = vunpack.c.l.b16 %v691
  %v2308 = vunpack.c.l.b16 %v692
  %v2309 = vunpack.c.l.b16 %v693
  %v2310 = vunpack.c.l.b16 %v694
  %v2311 = vunpack.c.l.b16 %v695
  %v2312 = vunpack.c.l.b16 %v696
  %v2313 = vunpack.c.l.b16 %v697
  %v2314 = vunpack.c.l.b16 %v698
  %v2315 = vunpack.c.l.b16 %v699
  %v2316 = vunpack.c.l.b16 %v700
  %v2317 = vunpack.c.l.b16 %v701
  %v2318 = vunpack.c.l.b16 %v702
  %v2319 = vunpack.c.l.b16 %v703
  %v2320 = vunpack.c.l.b16 %v704
  %v2321 = vunpack.c.l.b16 %v705
  %v2322 = vunpack.c.l.b16 %v706
  %v2323 = vunpack.c.l.b16 %v707
  %v2324 = vunpack.c.l.b16 %v708
  %v2325 = vunpack.c.l.b16 %v709
  %v2326 = vunpack.c.l.b16 %v710
  %v2327 = vunpack.c.l.b16 %v711
  %v2328 = vunpack.c.l.b16 %v712
  %v2329 = vunpack.c.l.b16 %v713
  %v2330 = vunpack.c.l.b16 %v714
  %v2331 = vunpack.c.l.b16 %v715
  %v2332 = vunpack.c.l.b16 %v716
  %v2333 = vunpack.c.l.b16 %v717
  %v2334 = vunpack.c.l.b16 %v718
  %v2335 = vunpack.c.l.b16 %v719
  %v2336 = vunpack.c.l.b16 %v720
  %v2337 = vunpack.c.l.b16 %v721
  %v2338 = vunpack.c.l.b16 %v722
  %v2339 = vunpack.c.l.b16 %v723
  %v2340 = vunpack.c.l.b16 %v724
  %v2341 = vunpack.c.l.b16 %v725
  %v2342 = vunpack.c.l.b16 %v726
  %v2343 = vunpack.c.l.b16 %v727
  %v2344 = vunpack.c.l.b16 %v728
  %v2345 = vunpack.c.l.b16 %v729
  %v2346 = vunpack.c.l.b16 %v730
  %v2347 = vunpack.c.l.b16 %v731
  %v2348 = vunpack.c.l.b16 %v732
  %v2349 = vunpack.c.l.b16 %v733
  %v2350 = vunpack.c.l.b16 %v734
  %v2351 = vunpack.c.l.b16 %v735
  %v2352 = vunpack.c.l.b16 %v736
  %v2353 = vunpack.c.l.b16 %v737
  %v2354 = vunpack.c.l.b16 %v738
  %v2355 = vunpack.c.l.b16 %v739
  %v2356 = vunpack.c.l.b16 %v740
  %v2357 = vunpack.c.l.b16 %v741
  %v2358 = vunpack.c.l.b16 %v742
  %v2359 = vunpack.c.l.b16 %v743
  %v2360 = vunpack.c.l.b16 %v744
  %v2361 = vunpack.c.l.b16 %v745
  %v2362 = vunpack.c.l.b16 %v746
  %v2363 = vunpack.c.l.b16 %v747
  %v2364 = vunpack.c.l.b16 %v748
  %v2365 = vunpack.c.l.b16 %v749
  %v2366 = vunpack.c.l.b16 %v750
  %v2367 = vunpack.c.l.b16 %v751
  %v2368 = vunpack.c.l.b16 %v752
  %v2369 = vunpack.c.l.b16 %v753
  %v2370 = vunpack.c.l.b16 %v754
  %v2371 = vunpack.c.l.b16 %v755
  %v2372 = vunpack.c.l.b16 %v756
  %v2373 = vunpack.c.l.b16 %v757
  %v2374 = vunpack.c.l.b16 %v758
  %v2375 = vunpack.c.l.b16 %v759
  %v2376 = vunpack.c.l.b16 %v760
  %v2377 = vunpack.c.l.b16 %v761
  %v2378 = vunpack.c.l.b16 %v762
  %v2379 = vunpack.c.l.b16 %v763
  %v2380 = vunpack.c.l.b16 %v764
  %v2381 = vunpack.c.l.b16 %v765
  %v2382 = vunpack.c.l.b16 %v766
  %v2383 = vunpack.c.l.b16 %v767
  %v2384 = vunpack.c.l.b16 %v768
  %v2385 = vunpack.c.l.b16 %v769
  %v2386 = vunpack.c.l.b16 %v770
  %v2387 = vunpack.c.l.b16 %v771
  %v2388 = vunpack.c.l.b16 %v772
  %v2389 = vunpack.c.l.b16 %v773
  %v2390 = vunpack.c.l.b16 %v774
  %v2391 = vunpack.c.l.b16 %v775
  %v2392 = vunpack.c.l.b16 %v776
  %v2393 = vunpack.c.l.b16 %v777
  %v2394 = vunpack.c.l.b16 %v778
  %v2395 = vunpack.c.l.b16 %v779
  %v2396 = vunpack.c.l.b16 %v780
  %v2397 = vunpack.c.l.b16 %v781
  %v2398 = vpack.c.b16 %v1673, %v1672
  %v2399 = vpack.c.b16 %v1675, %v1674
  %v2400 = vpack.c.b16 %v1677, %v1676
  %v2401 = vpack.c.b16 %v1679, %v1678
  %v2402 = vpack.c.b16 %v1681, %v1680
  %v2403 = vpack.c.b16 %v1683, %v1682
  %v2404 = vpack.c.b16 %v1685, %v1684
  %v2405 = vpack.c.b16 %v1687, %v1686
  %v2406 = vpack.c.b16 %v1689, %v1688
  %v2407 = vpack.c.b16 %v1691, %v1690
  %v2408 = vpack.c.b16 %v1693, %v1692
  %v2409 = vpack.c.b16 %v1695, %v1694
  %v2410 = vpack.c.b16 %v1697, %v1696
  %v2411 = vpack.c.b16 %v1699, %v1698
  %v2412 = vpack.c.b16 %v1701, %v1700
  %v2413 = vpack.c.b16 %v1703, %v1702
  %v2414 = vpack.c.b16 %v1705, %v1704
  %v2415 = vpack.c.b16 %v1707, %v1706
  %v2416 = vpack.c.b16 %v1709, %v1708
  %v2417 = vpack.c.b16 %v1711, %v1710
  %v2418 = vpack.c.b16 %v1713, %v1712
  %v2419 = vpack.c.b16 %v1715, %v1714
  %v2420 = vpack.c.b16 %v1717, %v1716
  %v2421 = vpack.c.b16 %v1719, %v1718
  %v2422 = vpack.c.b16 %v1721, %v1720
  %v2423 = vpack.c.b16 %v1723, %v1722
  %v2424 = vpack.c.b16 %v1725, %v1724
  %v2425 = vpack.c.b16 %v1727, %v1726
  %v2426 = vpack.c.b16 %v1729, %v1728
  %v2427 = vpack.c.b16 %v1731, %v1730
  %v2428 = vpack.c.b16 %v1733, %v1732
  %v2429 = vpack.c.b16 %v1735, %v1734
  %v2430 = vpack.c.b16 %v1737, %v1736
  %v2431 = vpack.c.b16 %v1739, %v1738
  %v2432 = vpack.c.b16 %v1741, %v1740
  %v2433 = vpack.c.b16 %v1743, %v1742
  %v2434 = vpack.c.b16 %v1745, %v1744
  %v2435 = vpack.c.b16 %v1747, %v1746
  %v2436 = vpack.c.b16 %v1749, %v1748
  %v2437 = vpack.c.b16 %v1751, %v1750
  %v2438 = vpack.c.b16 %v1753, %v1752
  %v2439 = vpack.c.b16 %v1755, %v1754
  %v2440 = vpack.c.b16 %v1757, %v1756
  %v2441 = vpack.c.b16 %v1759, %v1758
  %v2442 = vpack.c.b16 %v1761, %v1760
  %v2443 = vpack.c.b16 %v1763, %v1762
  %v2444 = vpack.c.b16 %v1765, %v1764
  %v2445 = vpack.c.b16 %v1767, %v1766
  %v2446 = vpack.c.b16 %v1769, %v1768
  %v2447 = vpack.c.b16 %v1771, %v1770
  %v2448 = vpack.c.b16 %v1773, %v1772
  %v2449 = vpack.c.b16 %v1775, %v1774
  %v2450 = vpack.c.b16 %v1777, %v1776
  %v2451 = vpack.c.b16 %v1779, %v1778
  %v2452 = vpack.c.b16 %v1781, %v1780
  %v2453 = vpack.c.b16 %v1783, %v1782
  %v2454 = vpack.c.b16 %v1785, %v1784
  %v2455 = vpack.c.b16 %v1787, %v1786
  %v2456 = vpack.c.b16 %v1789, %v1788
  %v2457 = vpack.c.b16 %v1791, %v1790
  %v2458 = vpack.c.b16 %v1793, %v1792
  %v2459 = vpack.c.b16 %v1795, %v1794
  %v2460 = vpack.c.b16 %v1797, %v1796
  %v2461 = vpack.c.b16 %v1799, %v1798
  %v2462 = vpack.c.b16 %v1801, %v1800
  %v2463 = vpack.c.b16 %v1803, %v1802
  %v2464 = vpack.c.b16 %v1805, %v1804
  %v2465 = vpack.c.b16 %v1807, %v1806
  %v2466 = vpack.c.b16 %v1809, %v1808
  %v2467 = vpack.c.b16 %v1811, %v1810
  %v2468 = vpack.c.b16 %v1813, %v1812
  %v2469 = vpack.c.b16 %v1815, %v1814
  %v2470 = vpack.c.b16 %v1817, %v1816
  %v2471 = vpack.c.b16 %v1819, %v1818
  %v2472 = vpack.c.b16 %v1821, %v1820
  %v2473 = vpack.c.b16 %v1823, %v1822
  %v2474 = vpack.c.b16 %v1825, %v1824
  %v2475 = vpack.c.b16 %v1827, %v1826
  %v2476 = vpack.c.b16 %v1829, %v1828
  %v2477 = vpack.c.b16 %v1831, %v1830
  %v2478 = vpack.c.b16 %v1833, %v1832
  %v2479 = vpack.c.b16 %v1835, %v1834
  %v2480 = vpack.c.b16 %v1837, %v1836
  %v2481 = vpack.c.b16 %v1839, %v1838
  %v2482 = vpack.c.b16 %v1841, %v1840
  %v2483 = vpack.c.b16 %v1843, %v1842
  %v2484 = vpack.c.b16 %v1845, %v1844
  %v2485 = vpack.c.b16 %v1847, %v1846
  %v2486 = vpack.c.b16 %v1849, %v1848
  %v2487 = vpack.c.b16 %v1851, %v1850
  %v2488 = vpack.c.b16 %v1853, %v1852
  %v2489 = vpack.c.b16 %v1855, %v1854
  %v2490 = vpack.c.b16 %v1857, %v1856
  %v2491 = vpack.c.b16 %v1859, %v1858
  %v2492 = vpack.c.b16 %v1861, %v1860
  %v2493 = vpack.c.b16 %v1863, %v1862
  %v2494 = vpack.c.b16 %v1865, %v1864
  %v2495 = vpack.c.b16 %v1867, %v1866
  %v2496 = vpack.c.b16 %v1869, %v1868
  %v2497 = vpack.c.b16 %v1871, %v1870
  %v2498 = vpack.c.b16 %v1873, %v1872
  %v2499 = vpack.c.b16 %v1875, %v1874
  %v2500 = vpack.c.b16 %v1877, %v1876
  %v2501 = vpack.c.b16 %v1879, %v1878
  %v2502 = vpack.c.b16 %v1881, %v1880
  %v2503 = vpack.c.b16 %v1883, %v1882
  %v2504 = vpack.c.b16 %v1885, %v1884
  %v2505 = vpack.c.b16 %v1887, %v1886
  %v2506 = vpack.c.b16 %v1889, %v1888
  %v2507 = vpack.c.b16 %v1891, %v1890
  %v2508 = vpack.c.b16 %v1893, %v1892
  %v2509 = vpack.c.b16 %v1895, %v1894
  %v2510 = vpack.c.b16 %v1897, %v1896
  %v2511 = vpack.c.b16 %v1899, %v1898
  %v2512 = vpack.c.b16 %v1901, %v1900
  %v2513 = vpack.c.b16 %v1903, %v1902
  %v2514 = vpack.c.b16 %v1905, %v1904
  %v2515 = vpack.c.b16 %v1907, %v1906
  %v2516 = vpack.c.b16 %v1909, %v1908
  %v2517 = vpack.c.b16 %v1911, %v1910
  %v2518 = vpack.c.b16 %v1913, %v1912
  %v2519 = vpack.c.b16 %v1915, %v1914
  %v2520 = vpack.c.b16 %v1917, %v1916
  %v2521 = vpack.c.b16 %v1919, %v1918
  %v2522 = vpack.c.b16 %v1921, %v1920
  %v2523 = vpack.c.b16 %v1923, %v1922
  %v2524 = vpack.c.b16 %v1925, %v1924
  %v2525 = vpack.c.b16 %v1927, %v1926
  %v2526 = vpack.c.b16 %v1929, %v1928
  %v2527 = vpack.c.b16 %v1931, %v1930
  %v2528 = vpack.c.b16 %v1933, %v1932
  %v2529 = vpack.c.b16 %v1935, %v1934
  %v2530 = vpack.c.b16 %v1937, %v1936
  %v2531 = vpack.c.b16 %v1939, %v1938
  %v2532 = vpack.c.b16 %v1941, %v1940
  %v2533 = vpack.c.b16 %v1943, %v1942
  %v2534 = vpack.c.b16 %v1945, %v1944
  %v2535 = vpack.c.b16 %v1947, %v1946
  %v2536 = vpack.c.b16 %v1949, %v1948
  %v2537 = vpack.c.b16 %v1951, %v1950
  %v2538 = vpack.c.b16 %v1953, %v1952
  %v2539 = vpack.c.b16 %v1955, %v1954
  %v2540 = vpack.c.b16 %v1957, %v1956
  %v2541 = vpack.c.b16 %v1959, %v1958
  %v2542 = vpack.c.b16 %v1961, %v1960
  %v2543 = vpack.c.b16 %v1963, %v1962
  %v2544 = vpack.c.b16 %v1965, %v1964
  %v2545 = vpack.c.b16 %v1967, %v1966
  %v2546 = vpack.c.b16 %v1969, %v1968
  %v2547 = vpack.c.b16 %v1971, %v1970
  %v2548 = vpack.c.b16 %v1973, %v1972
  %v2549 = vpack.c.b16 %v1975, %v1974
  %v2550 = vpack.c.b16 %v1977, %v1976
  %v2551 = vpack.c.b16 %v1979, %v1978
  %v2552 = vpack.c.b16 %v1981, %v1980
  %v2553 = vpack.c.b16 %v1983, %v1982
  %v2554 = vpack.c.b16 %v1985, %v1984
  %v2555 = vpack.c.b16 %v1987, %v1986
  %v2556 = vpack.c.b16 %v1989, %v1988
  %v2557 = vpack.c.b16 %v1991, %v1990
  %v2558 = vpack.c.b16 %v1993, %v1992
  %v2559 = vpack.c.b16 %v1995, %v1994
  %v2560 = vpack.c.b16 %v1997, %v1996
  %v2561 = vpack.c.b16 %v1999, %v1998
  %v2562 = vpack.c.b16 %v2001, %v2000
  %v2563 = vpack.c.b16 %v2003, %v2002
  %v2564 = vpack.c.b16 %v2005, %v2004
  %v2565 = vpack.c.b16 %v2007, %v2006
  %v2566 = vpack.c.b16 %v2009, %v2008
  %v2567 = vpack.c.b16 %v2011, %v2010
  %v2568 = vpack.c.b16 %v2013, %v2012
  %v2569 = vpack.c.b16 %v2015, %v2014
  %v2570 = vpack.c.b16 %v2017, %v2016
  %v2571 = vpack.c.b16 %v2019, %v2018
  %v2572 = vpack.c.b16 %v2021, %v2020
  %v2573 = vpack.c.b16 %v2023, %v2022
  %v2574 = vpack.c.b16 %v2025, %v2024
  %v2575 = vpack.c.b16 %v2027, %v2026
  %v2576 = vpack.c.b16 %v2029, %v2028
  %v2577 = vpack.c.b16 %v2031, %v2030
  %v2578 = vpack.c.b16 %v2033, %v2032
  %v2579 = vpack.c.b16 %v2035, %v2034
  %v2580 = vpack.c.b16 %v2037, %v2036
  %v2581 = vpack.c.b16 %v2039, %v2038
  %v2582 = vpack.c.b16 %v2041, %v2040
  %v2583 = vpack.c.b16 %v2043, %v2042
  %v2584 = vpack.c.b16 %v2045, %v2044
  %v2585 = vpack.c.b16 %v2047, %v2046
  %v2586 = vpack.c.b16 %v2049, %v2048
  %v2587 = vpack.c.b16 %v2051, %v2050
  %v2588 = vpack.c.b16 %v2053, %v2052
  %v2589 = vpack.c.b16 %v2055, %v2054
  %v2590 = vpack.c.b16 %v2057, %v2056
  %v2591 = vpack.c.b16 %v2059, %v2058
  %v2592 = vpack.c.b16 %v2061, %v2060
  %v2593 = vpack.c.b16 %v2063, %v2062
  %v2594 = vpack.c.b16 %v2065, %v2064
  %v2595 = vpack.c.b16 %v2067, %v2066
  %v2596 = vpack.c.b16 %v2069, %v2068
  %v2597 = vpack.c.b16 %v2071, %v2070
  %v2598 = vpack.c.b16 %v2073, %v2072
  %v2599 = vpack.c.b16 %v2075, %v2074
  %v2600 = vpack.c.b16 %v2077, %v2076
  %v2601 = vpack.c.b16 %v2079, %v2078
  %v2602 = vpack.c.b16 %v2081, %v2080
  %v2603 = vpack.c.b16 %v2083, %v2082
  %v2604 = vpack.c.b16 %v2085, %v2084
  %v2605 = vpack.c.b16 %v2087, %v2086
  %v2606 = vpack.c.b16 %v2089, %v2088
  %v2607 = vpack.c.b16 %v2091, %v2090
  %v2608 = vpack.c.b16 %v2093, %v2092
  %v2609 = vpack.c.b16 %v2095, %v2094
  %v2610 = vpack.c.b16 %v2097, %v2096
  %v2611 = vpack.c.b16 %v2099, %v2098
  %v2612 = vpack.c.b16 %v2101, %v2100
  %v2613 = vpack.c.b16 %v2103, %v2102
  %v2614 = vpack.c.b16 %v2105, %v2104
  %v2615 = vpack.c.b16 %v2107, %v2106
  %v2616 = vpack.c.b16 %v2109, %v2108
  %v2617 = vpack.c.b16 %v2111, %v2110
  %v2618 = vpack.c.b16 %v2113, %v2112
  %v2619 = vpack.c.b16 %v2115, %v2114
  %v2620 = vpack.c.b16 %v2117, %v2116
  %v2621 = vpack.c.b16 %v2119, %v2118
  %v2622 = vpack.c.b16 %v2121, %v2120
  %v2623 = vpack.c.b16 %v2123, %v2122
  %v2624 = vpack.c.b16 %v2125, %v2124
  %v2625 = vpack.c.b16 %v2127, %v2126
  %v2626 = vpack.c.b16 %v2129, %v2128
  %v2627 = vpack.c.b16 %v2131, %v2130
  %v2628 = vpack.c.b16 %v2133, %v2132
  %v2629 = vpack.c.b16 %v2135, %v2134
  %v2630 = vpack.c.b16 %v2137, %v2136
  %v2631 = vpack.c.b16 %v2139, %v2138
  %v2632 = vpack.c.b16 %v2141, %v2140
  %v2633 = vpack.c.b16 %v2143, %v2142
  %v2634 = vpack.c.b16 %v2145, %v2144
  %v2635 = vpack.c.b16 %v2147, %v2146
  %v2636 = vpack.c.b16 %v2149, %v2148
  %v2637 = vpack.c.b16 %v2151, %v2150
  %v2638 = vpack.c.b16 %v2153, %v2152
  %v2639 = vpack.c.b16 %v2155, %v2154
  %v2640 = vpack.c.b16 %v2157, %v2156
  %v2641 = vpack.c.b16 %v2159, %v2158
  %v2642 = vpack.c.b16 %v2161, %v2160
  %v2643 = vpack.c.b16 %v2163, %v2162
  %v2644 = vpack.c.b16 %v2165, %v2164
  %v2645 = vpack.c.b16 %v2167, %v2166
  %v2646 = vpack.c.b16 %v2169, %v2168
  %v2647 = vpack.c.b16 %v2171, %v2170
  %v2648 = vpack.c.b16 %v2173, %v2172
  %v2649 = vpack.c.b16 %v2175, %v2174
  %v2650 = vpack.c.b16 %v2177, %v2176
  %v2651 = vpack.c.b16 %v2179, %v2178
  %v2652 = vpack.c.b16 %v2181, %v2180
  %v2653 = vpack.c.b16 %v2183, %v2182
  %v2654 = vpack.c.b16 %v2185, %v2184
  %v2655 = vpack.c.b16 %v2187, %v2186
  %v2656 = vpack.c.b16 %v2189, %v2188
  %v2657 = vpack.c.b16 %v2191, %v2190
  %v2658 = vpack.c.b16 %v2193, %v2192
  %v2659 = vpack.c.b16 %v2195, %v2194
  %v2660 = vpack.c.b16 %v2197, %v2196
  %v2661 = vpack.c.b16 %v2199, %v2198
  %v2662 = vpack.c.b16 %v2201, %v2200
  %v2663 = vpack.c.b16 %v2203, %v2202
  %v2664 = vpack.c.b16 %v2205, %v2204
  %v2665 = vpack.c.b16 %v2207, %v2206
  %v2666 = vpack.c.b16 %v2209, %v2208
  %v2667 = vpack.c.b16 %v2211, %v2210
  %v2668 = vpack.c.b16 %v2213, %v2212
  %v2669 = vpack.c.b16 %v2215, %v2214
  %v2670 = vpack.c.b16 %v2217, %v2216
  %v2671 = vpack.c.b16 %v2219, %v2218
  %v2672 = vpack.c.b16 %v2221, %v2220
  %v2673 = vpack.c.b16 %v2223, %v2222
  %v2674 = vpack.c.b16 %v2225, %v2224
  %v2675 = vpack.c.b16 %v2227, %v2226
  %v2676 = vpack.c.b16 %v2229, %v2228
  %v2677 = vpack.c.b16 %v2231, %v2230
  %v2678 = vpack.c.b16 %v2233, %v2232
  %v2679 = vpack.c.b16 %v2235, %v2234
  %v2680 = vpack.c.b16 %v2237, %v2236
  %v2681 = vpack.c.b16 %v2239, %v2238
  %v2682 = vpack.c.b16 %v2241, %v2240
  %v2683 = vpack.c.b16 %v2243, %v2242
  %v2684 = vpack.c.b16 %v2245, %v2244
  %v2685 = vpack.c.b16 %v2247, %v2246
  %v2686 = vpack.c.b16 %v2249, %v2248
  %v2687 = vpack.c.b16 %v2251, %v2250
  %v2688 = vpack.c.b16 %v2253, %v2252
  %v2689 = vpack.c.b16 %v2255, %v2254
  %v2690 = vpack.c.b16 %v2257, %v2256
  %v2691 = vpack.c.b16 %v2259, %v2258
  %v2692 = vpack.c.b16 %v2261, %v2260
  %v2693 = vpack.c.b16 %v2263, %v2262
  %v2694 = vpack.c.b16 %v2265, %v2264
  %v2695 = vpack.c.b16 %v2267, %v2266
  %v2696 = vpack.c.b16 %v2269, %v2268
  %v2697 = vpack.c.b16 %v2271, %v2270
  %v2698 = vpack.c.b16 %v2273, %v2272
  %v2699 = vpack.c.b16 %v2275, %v2274
  %v2700 = vpack.c.b16 %v2277, %v2276
  %v2701 = vpack.c.b16 %v2279, %v2278
  %v2702 = vpack.c.b16 %v2281, %v2280
  %v2703 = vpack.c.b16 %v2283, %v2282
  %v2704 = vpack.c.b16 %v2285, %v2284
  %v2705 = vpack.c.b16 %v2287, %v2286
  %v2706 = vpack.c.b16 %v2289, %v2288
  %v2707 = vpack.c.b16 %v2291, %v2290
  %v2708 = vpack.c.b16 %v2293, %v2292
  %v2709 = vpack.c.b16 %v2295, %v2294
  %v2710 = vpack.c.b16 %v2297, %v2296
  %v2711 = vpack.c.b16 %v2299, %v2298
  %v2712 = vpack.c.b16 %v2301, %v2300
  %v2713 = vpack.c.b16 %v2303, %v2302
  %v2714 = vpack.c.b16 %v2305, %v2304
  %v2715 = vpack.c.b16 %v2307, %v2306
  %v2716 = vpack.c.b16 %v2309, %v2308
  %v2717 = vpack.c.b16 %v2311, %v2310
  %v2718 = vpack.c.b16 %v2313, %v2312
  %v2719 = vpack.c.b16 %v2315, %v2314
  %v2720 = vpack.c.b16 %v2317, %v2316
  %v2721 = vpack.c.b16 %v2319, %v2318
  %v2722 = vpack.c.b16 %v2321, %v2320
  %v2723 = vpack.c.b16 %v2323, %v2322
  %v2724 = vpack.c.b16 %v2325, %v2324
  %v2725 = vpack.c.b16 %v2327, %v2326
  %v2726 = vpack.c.b16 %v2329, %v2328
  %v2727 = vpack.c.b16 %v2331, %v2330
  %v2728 = vpack.c.b16 %v2333, %v2332
  %v2729 = vpack.c.b16 %v2335, %v2334
  %v2730 = vpack.c.b16 %v2337, %v2336
  %v2731 = vpack.c.b16 %v2339, %v2338
  %v2732 = vpack.c.b16 %v2341, %v2340
  %v2733 = vpack.c.b16 %v2343, %v2342
  %v2734 = vpack.c.b16 %v2345, %v2344
  %v2735 = vpack.c.b16 %v2347, %v2346
  %v2736 = vpack.c.b16 %v2349, %v2348
  %v2737 = vpack.c.b16 %v2351, %v2350
  %v2738 = vpack.c.b16 %v2353, %v2352
  %v2739 = vpack.c.b16 %v2355, %v2354
  %v2740 = vpack.c.b16 %v2357, %v2356
  %v2741 = vpack.c.b16 %v2359, %v2358
  %v2742 = vpack.c.b16 %v2361, %v2360
  %v2743 = vpack.c.b16 %v2363, %v2362
  %v2744 = vpack.c.b16 %v2365, %v2364
  %v2745 = vpack.c.b16 %v2367, %v2366
  %v2746 = vpack.c.b16 %v2369, %v2368
  %v2747 = vpack.c.b16 %v2371, %v2370
  %v2748 = vpack.c.b16 %v2373, %v2372
  %v2749 = vpack.c.b16 %v2375, %v2374
  %v2750 = vpack.c.b16 %v2377, %v2376
  %v2751 = vpack.c.b16 %v2379, %v2378
  %v2752 = vpack.c.b16 %v2381, %v2380
  %v2753 = vpack.c.b16 %v2383, %v2382
  %v2754 = vpack.c.b16 %v2385, %v2384
  %v2755 = vpack.c.b16 %v2387, %v2386
  %v2756 = vpack.c.b16 %v2389, %v2388
  %v2757 = vpack.c.b16 %v2391, %v2390
  %v2758 = vpack.c.b16 %v2393, %v2392
  %v2759 = vpack.c.b16 %v2395, %v2394
  %v2760 = vpack.c.b16 %v2397, %v2396
  %vm3124 = vcmask 392192
  %v3126 = vsel %vm3124, %v900, 0
  %3128 = vmatpush.bf16.msra.mxu0 %v2405
  %3129 = vmatpush.bf16.msra.mxu0 %v2404
  %3130 = vmatpush.bf16.msra.mxu0 %v2403
  %3131 = vmatpush.bf16.msra.mxu0 %v2402
  %3132 = vmatpush.bf16.msra.mxu0 %v2401
  %3133 = vmatpush.bf16.msra.mxu0 %v2400
  %3134 = vmatpush.bf16.msra.mxu0 %v2399
  %3135 = vmatpush.bf16.msra.mxu0 %v2398
  %3136 = vmatmul.bf16.gmra.mxu0 %v855
  %v3137 = vpop.f32.mrf.mxu0
  %v3138 = vadd.f32 %v784, %v3137
  %v3139 = vpop.f32.mrf.mxu0
  %3140 = vdwg.mxu0
  %3141 = vmatpush.bf16.msra.mxu0 %v2413
  %3142 = vmatpush.bf16.msra.mxu0 %v2412
  %3143 = vmatpush.bf16.msra.mxu0 %v2411
  %3144 = vmatpush.bf16.msra.mxu0 %v2410
  %3145 = vmatpush.bf16.msra.mxu0 %v2409
  %3146 = vmatpush.bf16.msra.mxu0 %v2408
  %3147 = vmatpush.bf16.msra.mxu0 %v2407
  %3148 = vmatpush.bf16.msra.mxu0 %v2406
  %3149 = vmatmul.bf16.gmra.mxu0 %v856
  %v3150 = vpop.f32.mrf.mxu0
  %v3151 = vadd.f32 %v3138, %v3150
  %v3152 = vpop.f32.mrf.mxu0
  %3153 = vdwg.mxu0
  %3154 = vmatpush.bf16.msra.mxu0 %v2421
  %3155 = vmatpush.bf16.msra.mxu0 %v2420
  %3156 = vmatpush.bf16.msra.mxu0 %v2419
  %3157 = vmatpush.bf16.msra.mxu0 %v2418
  %3158 = vmatpush.bf16.msra.mxu0 %v2417
  %3159 = vmatpush.bf16.msra.mxu0 %v2416
  %3160 = vmatpush.bf16.msra.mxu0 %v2415
  %3161 = vmatpush.bf16.msra.mxu0 %v2414
  %3162 = vmatmul.bf16.gmra.mxu0 %v857
  %v3163 = vpop.f32.mrf.mxu0
  %v3164 = vadd.f32 %v3151, %v3163
  %v3165 = vpop.f32.mrf.mxu0
  %3166 = vdwg.mxu0
  %3167 = vmatpush.bf16.msra.mxu0 %v2429
  %3168 = vmatpush.bf16.msra.mxu0 %v2428
  %3169 = vmatpush.bf16.msra.mxu0 %v2427
  %3170 = vmatpush.bf16.msra.mxu0 %v2426
  %3171 = vmatpush.bf16.msra.mxu0 %v2425
  %3172 = vmatpush.bf16.msra.mxu0 %v2424
  %3173 = vmatpush.bf16.msra.mxu0 %v2423
  %3174 = vmatpush.bf16.msra.mxu0 %v2422
  %3175 = vmatmul.bf16.gmra.mxu0 %v858
  %v3176 = vpop.f32.mrf.mxu0
  %v3177 = vadd.f32 %v3164, %v3176
  %v3178 = vpop.f32.mrf.mxu0
  %3179 = vdwg.mxu0
  %3180 = vmatpush.bf16.msra.mxu0 %v2437
  %3181 = vmatpush.bf16.msra.mxu0 %v2436
  %3182 = vmatpush.bf16.msra.mxu0 %v2435
  %3183 = vmatpush.bf16.msra.mxu0 %v2434
  %3184 = vmatpush.bf16.msra.mxu0 %v2433
  %3185 = vmatpush.bf16.msra.mxu0 %v2432
  %3186 = vmatpush.bf16.msra.mxu0 %v2431
  %3187 = vmatpush.bf16.msra.mxu0 %v2430
  %3188 = vmatmul.bf16.gmra.mxu0 %v859
  %v3189 = vpop.f32.mrf.mxu0
  %v3190 = vadd.f32 %v3177, %v3189
  %v3191 = vpop.f32.mrf.mxu0
  %3192 = vdwg.mxu0
  %3193 = vmatpush.bf16.msra.mxu0 %v2445
  %3194 = vmatpush.bf16.msra.mxu0 %v2444
  %3195 = vmatpush.bf16.msra.mxu0 %v2443
  %3196 = vmatpush.bf16.msra.mxu0 %v2442
  %3197 = vmatpush.bf16.msra.mxu0 %v2441
  %3198 = vmatpush.bf16.msra.mxu0 %v2440
  %3199 = vmatpush.bf16.msra.mxu0 %v2439
  %3200 = vmatpush.bf16.msra.mxu0 %v2438
  %3201 = vmatmul.bf16.gmra.mxu0 %v860
  %v3202 = vpop.f32.mrf.mxu0
  %v3203 = vadd.f32 %v3190, %v3202
  %v3204 = vpop.f32.mrf.mxu0
  %3205 = vdwg.mxu0
  %3206 = vmatpush.bf16.msra.mxu0 %v2453
  %3207 = vmatpush.bf16.msra.mxu0 %v2452
  %3208 = vmatpush.bf16.msra.mxu0 %v2451
  %3209 = vmatpush.bf16.msra.mxu0 %v2450
  %3210 = vmatpush.bf16.msra.mxu0 %v2449
  %3211 = vmatpush.bf16.msra.mxu0 %v2448
  %3212 = vmatpush.bf16.msra.mxu0 %v2447
  %3213 = vmatpush.bf16.msra.mxu0 %v2446
  %3214 = vmatmul.bf16.gmra.mxu0 %v861
  %v3215 = vpop.f32.mrf.mxu0
  %v3216 = vadd.f32 %v3203, %v3215
  %v3217 = vpop.f32.mrf.mxu0
  %3218 = vdwg.mxu0
  %3219 = vmatpush.bf16.msra.mxu0 %v2461
  %3220 = vmatpush.bf16.msra.mxu0 %v2460
  %3221 = vmatpush.bf16.msra.mxu0 %v2459
  %3222 = vmatpush.bf16.msra.mxu0 %v2458
  %3223 = vmatpush.bf16.msra.mxu0 %v2457
  %3224 = vmatpush.bf16.msra.mxu0 %v2456
  %3225 = vmatpush.bf16.msra.mxu0 %v2455
  %3226 = vmatpush.bf16.msra.mxu0 %v2454
  %3227 = vmatmul.bf16.gmra.mxu0 %v862
  %v3228 = vpop.f32.mrf.mxu0
  %v3229 = vadd.f32 %v3216, %v3228
  %v3230 = vpop.f32.mrf.mxu0
  %3231 = vdwg.mxu0
  %3232 = vmatpush.bf16.msra.mxu0 %v2469
  %3233 = vmatpush.bf16.msra.mxu0 %v2468
  %3234 = vmatpush.bf16.msra.mxu0 %v2467
  %3235 = vmatpush.bf16.msra.mxu0 %v2466
  %3236 = vmatpush.bf16.msra.mxu0 %v2465
  %3237 = vmatpush.bf16.msra.mxu0 %v2464
  %3238 = vmatpush.bf16.msra.mxu0 %v2463
  %3239 = vmatpush.bf16.msra.mxu0 %v2462
  %3240 = vmatmul.bf16.gmra.mxu0 %v863
  %v3241 = vpop.f32.mrf.mxu0
  %v3242 = vadd.f32 %v3229, %v3241
  %v3243 = vpop.f32.mrf.mxu0
  %3244 = vdwg.mxu0
  %3245 = vmatpush.bf16.msra.mxu0 %v2477
  %3246 = vmatpush.bf16.msra.mxu0 %v2476
  %3247 = vmatpush.bf16.msra.mxu0 %v2475
  %3248 = vmatpush.bf16.msra.mxu0 %v2474
  %3249 = vmatpush.bf16.msra.mxu0 %v2473
  %3250 = vmatpush.bf16.msra.mxu0 %v2472
  %3251 = vmatpush.bf16.msra.mxu0 %v2471
  %3252 = vmatpush.bf16.msra.mxu0 %v2470
  %3253 = vmatmul.bf16.gmra.mxu0 %v864
  %v3254 = vpop.f32.mrf.mxu0
  %v3255 = vadd.f32 %v3242, %v3254
  %v3256 = vpop.f32.mrf.mxu0
  %3257 = vdwg.mxu0
  %3258 = vmatpush.bf16.msra.mxu0 %v2485
  %3259 = vmatpush.bf16.msra.mxu0 %v2484
  %3260 = vmatpush.bf16.msra.mxu0 %v2483
  %3261 = vmatpush.bf16.msra.mxu0 %v2482
  %3262 = vmatpush.bf16.msra.mxu0 %v2481
  %3263 = vmatpush.bf16.msra.mxu0 %v2480
  %3264 = vmatpush.bf16.msra.mxu0 %v2479
  %3265 = vmatpush.bf16.msra.mxu0 %v2478
  %3266 = vmatmul.bf16.gmra.mxu0 %v865
  %v3267 = vpop.f32.mrf.mxu0
  %v3268 = vadd.f32 %v3255, %v3267
  %v3269 = vpop.f32.mrf.mxu0
  %3270 = vdwg.mxu0
  %3271 = vmatpush.bf16.msra.mxu0 %v2493
  %3272 = vmatpush.bf16.msra.mxu0 %v2492
  %3273 = vmatpush.bf16.msra.mxu0 %v2491
  %3274 = vmatpush.bf16.msra.mxu0 %v2490
  %3275 = vmatpush.bf16.msra.mxu0 %v2489
  %3276 = vmatpush.bf16.msra.mxu0 %v2488
  %3277 = vmatpush.bf16.msra.mxu0 %v2487
  %3278 = vmatpush.bf16.msra.mxu0 %v2486
  %3279 = vmatmul.bf16.gmra.mxu0 %v866
  %v3280 = vpop.f32.mrf.mxu0
  %v3281 = vadd.f32 %v3268, %v3280
  %v3282 = vpop.f32.mrf.mxu0
  %3283 = vdwg.mxu0
  %3284 = vmatpush.bf16.msra.mxu0 %v2501
  %3285 = vmatpush.bf16.msra.mxu0 %v2500
  %3286 = vmatpush.bf16.msra.mxu0 %v2499
  %3287 = vmatpush.bf16.msra.mxu0 %v2498
  %3288 = vmatpush.bf16.msra.mxu0 %v2497
  %3289 = vmatpush.bf16.msra.mxu0 %v2496
  %3290 = vmatpush.bf16.msra.mxu0 %v2495
  %3291 = vmatpush.bf16.msra.mxu0 %v2494
  %3292 = vmatmul.bf16.gmra.mxu0 %v867
  %v3293 = vpop.f32.mrf.mxu0
  %v3294 = vadd.f32 %v3281, %v3293
  %v3295 = vpop.f32.mrf.mxu0
  %3296 = vdwg.mxu0
  %3297 = vmatpush.bf16.msra.mxu0 %v2509
  %3298 = vmatpush.bf16.msra.mxu0 %v2508
  %3299 = vmatpush.bf16.msra.mxu0 %v2507
  %3300 = vmatpush.bf16.msra.mxu0 %v2506
  %3301 = vmatpush.bf16.msra.mxu0 %v2505
  %3302 = vmatpush.bf16.msra.mxu0 %v2504
  %3303 = vmatpush.bf16.msra.mxu0 %v2503
  %3304 = vmatpush.bf16.msra.mxu0 %v2502
  %3305 = vmatmul.bf16.gmra.mxu0 %v868
  %v3306 = vpop.f32.mrf.mxu0
  %v3307 = vadd.f32 %v3294, %v3306
  %v3308 = vpop.f32.mrf.mxu0
  %3309 = vdwg.mxu0
  %3310 = vmatpush.bf16.msra.mxu0 %v2517
  %3311 = vmatpush.bf16.msra.mxu0 %v2516
  %3312 = vmatpush.bf16.msra.mxu0 %v2515
  %3313 = vmatpush.bf16.msra.mxu0 %v2514
  %3314 = vmatpush.bf16.msra.mxu0 %v2513
  %3315 = vmatpush.bf16.msra.mxu0 %v2512
  %3316 = vmatpush.bf16.msra.mxu0 %v2511
  %3317 = vmatpush.bf16.msra.mxu0 %v2510
  %3318 = vmatmul.bf16.gmra.mxu0 %v869
  %v3319 = vpop.f32.mrf.mxu0
  %v3320 = vadd.f32 %v3307, %v3319
  %v3321 = vpop.f32.mrf.mxu0
  %3322 = vdwg.mxu0
  %3323 = vmatpush.bf16.msra.mxu0 %v2525
  %3324 = vmatpush.bf16.msra.mxu0 %v2524
  %3325 = vmatpush.bf16.msra.mxu0 %v2523
  %3326 = vmatpush.bf16.msra.mxu0 %v2522
  %3327 = vmatpush.bf16.msra.mxu0 %v2521
  %3328 = vmatpush.bf16.msra.mxu0 %v2520
  %3329 = vmatpush.bf16.msra.mxu0 %v2519
  %3330 = vmatpush.bf16.msra.mxu0 %v2518
  %3331 = vmatmul.bf16.gmra.mxu0 %v870
  %v3332 = vpop.f32.mrf.mxu0
  %v3333 = vadd.f32 %v3320, %v3332
  %v3334 = vpop.f32.mrf.mxu0
  %3335 = vdwg.mxu0
  %3336 = vmatpush.bf16.msra.mxu0 %v2533
  %3337 = vmatpush.bf16.msra.mxu0 %v2532
  %3338 = vmatpush.bf16.msra.mxu0 %v2531
  %3339 = vmatpush.bf16.msra.mxu0 %v2530
  %3340 = vmatpush.bf16.msra.mxu0 %v2529
  %3341 = vmatpush.bf16.msra.mxu0 %v2528
  %3342 = vmatpush.bf16.msra.mxu0 %v2527
  %3343 = vmatpush.bf16.msra.mxu0 %v2526
  %3344 = vmatmul.bf16.gmra.mxu0 %v871
  %v3345 = vpop.f32.mrf.mxu0
  %v3346 = vadd.f32 %v3333, %v3345
  %v3347 = vpop.f32.mrf.mxu0
  %3348 = vdwg.mxu0
  %3349 = vmatpush.bf16.msra.mxu0 %v2541
  %3350 = vmatpush.bf16.msra.mxu0 %v2540
  %3351 = vmatpush.bf16.msra.mxu0 %v2539
  %3352 = vmatpush.bf16.msra.mxu0 %v2538
  %3353 = vmatpush.bf16.msra.mxu0 %v2537
  %3354 = vmatpush.bf16.msra.mxu0 %v2536
  %3355 = vmatpush.bf16.msra.mxu0 %v2535
  %3356 = vmatpush.bf16.msra.mxu0 %v2534
  %3357 = vmatmul.bf16.gmra.mxu0 %v872
  %v3358 = vpop.f32.mrf.mxu0
  %v3359 = vadd.f32 %v3346, %v3358
  %v3360 = vpop.f32.mrf.mxu0
  %3361 = vdwg.mxu0
  %3362 = vmatpush.bf16.msra.mxu0 %v2549
  %3363 = vmatpush.bf16.msra.mxu0 %v2548
  %3364 = vmatpush.bf16.msra.mxu0 %v2547
  %3365 = vmatpush.bf16.msra.mxu0 %v2546
  %3366 = vmatpush.bf16.msra.mxu0 %v2545
  %3367 = vmatpush.bf16.msra.mxu0 %v2544
  %3368 = vmatpush.bf16.msra.mxu0 %v2543
  %3369 = vmatpush.bf16.msra.mxu0 %v2542
  %3370 = vmatmul.bf16.gmra.mxu0 %v873
  %v3371 = vpop.f32.mrf.mxu0
  %v3372 = vadd.f32 %v3359, %v3371
  %v3373 = vpop.f32.mrf.mxu0
  %3374 = vdwg.mxu0
  %3375 = vmatpush.bf16.msra.mxu0 %v2557
  %3376 = vmatpush.bf16.msra.mxu0 %v2556
  %3377 = vmatpush.bf16.msra.mxu0 %v2555
  %3378 = vmatpush.bf16.msra.mxu0 %v2554
  %3379 = vmatpush.bf16.msra.mxu0 %v2553
  %3380 = vmatpush.bf16.msra.mxu0 %v2552
  %3381 = vmatpush.bf16.msra.mxu0 %v2551
  %3382 = vmatpush.bf16.msra.mxu0 %v2550
  %3383 = vmatmul.bf16.gmra.mxu0 %v874
  %v3384 = vpop.f32.mrf.mxu0
  %v3385 = vadd.f32 %v3372, %v3384
  %v3386 = vpop.f32.mrf.mxu0
  %3387 = vdwg.mxu0
  %3388 = vmatpush.bf16.msra.mxu0 %v2565
  %3389 = vmatpush.bf16.msra.mxu0 %v2564
  %3390 = vmatpush.bf16.msra.mxu0 %v2563
  %3391 = vmatpush.bf16.msra.mxu0 %v2562
  %3392 = vmatpush.bf16.msra.mxu0 %v2561
  %3393 = vmatpush.bf16.msra.mxu0 %v2560
  %3394 = vmatpush.bf16.msra.mxu0 %v2559
  %3395 = vmatpush.bf16.msra.mxu0 %v2558
  %3396 = vmatmul.bf16.gmra.mxu0 %v875
  %v3397 = vpop.f32.mrf.mxu0
  %v3398 = vadd.f32 %v3385, %v3397
  %v3399 = vpop.f32.mrf.mxu0
  %3400 = vdwg.mxu0
  %3401 = vmatpush.bf16.msra.mxu0 %v2573
  %3402 = vmatpush.bf16.msra.mxu0 %v2572
  %3403 = vmatpush.bf16.msra.mxu0 %v2571
  %3404 = vmatpush.bf16.msra.mxu0 %v2570
  %3405 = vmatpush.bf16.msra.mxu0 %v2569
  %3406 = vmatpush.bf16.msra.mxu0 %v2568
  %3407 = vmatpush.bf16.msra.mxu0 %v2567
  %3408 = vmatpush.bf16.msra.mxu0 %v2566
  %3409 = vmatmul.bf16.gmra.mxu0 %v876
  %v3410 = vpop.f32.mrf.mxu0
  %v3411 = vadd.f32 %v3398, %v3410
  %v3412 = vpop.f32.mrf.mxu0
  %3413 = vdwg.mxu0
  %3414 = vmatpush.bf16.msra.mxu0 %v2581
  %3415 = vmatpush.bf16.msra.mxu0 %v2580
  %3416 = vmatpush.bf16.msra.mxu0 %v2579
  %3417 = vmatpush.bf16.msra.mxu0 %v2578
  %3418 = vmatpush.bf16.msra.mxu0 %v2577
  %3419 = vmatpush.bf16.msra.mxu0 %v2576
  %3420 = vmatpush.bf16.msra.mxu0 %v2575
  %3421 = vmatpush.bf16.msra.mxu0 %v2574
  %3422 = vmatmul.bf16.gmra.mxu0 %v877
  %v3423 = vpop.f32.mrf.mxu0
  %v3424 = vadd.f32 %v3411, %v3423
  %v3425 = vpop.f32.mrf.mxu0
  %3426 = vdwg.mxu0
  %3427 = vmatpush.bf16.msra.mxu0 %v2589
  %3428 = vmatpush.bf16.msra.mxu0 %v2588
  %3429 = vmatpush.bf16.msra.mxu0 %v2587
  %3430 = vmatpush.bf16.msra.mxu0 %v2586
  %3431 = vmatpush.bf16.msra.mxu0 %v2585
  %3432 = vmatpush.bf16.msra.mxu0 %v2584
  %3433 = vmatpush.bf16.msra.mxu0 %v2583
  %3434 = vmatpush.bf16.msra.mxu0 %v2582
  %3435 = vmatmul.bf16.gmra.mxu0 %v878
  %v3436 = vpop.f32.mrf.mxu0
  %v3437 = vadd.f32 %v3424, %v3436
  %v3438 = vpop.f32.mrf.mxu0
  %3439 = vdwg.mxu0
  %3440 = vmatpush.bf16.msra.mxu0 %v2597
  %3441 = vmatpush.bf16.msra.mxu0 %v2596
  %3442 = vmatpush.bf16.msra.mxu0 %v2595
  %3443 = vmatpush.bf16.msra.mxu0 %v2594
  %3444 = vmatpush.bf16.msra.mxu0 %v2593
  %3445 = vmatpush.bf16.msra.mxu0 %v2592
  %3446 = vmatpush.bf16.msra.mxu0 %v2591
  %3447 = vmatpush.bf16.msra.mxu0 %v2590
  %3448 = vmatmul.bf16.gmra.mxu0 %v879
  %v3449 = vpop.f32.mrf.mxu0
  %v3450 = vadd.f32 %v3437, %v3449
  %v3451 = vpop.f32.mrf.mxu0
  %3452 = vdwg.mxu0
  %3453 = vmatpush.bf16.msra.mxu0 %v2605
  %3454 = vmatpush.bf16.msra.mxu0 %v2604
  %3455 = vmatpush.bf16.msra.mxu0 %v2603
  %3456 = vmatpush.bf16.msra.mxu0 %v2602
  %3457 = vmatpush.bf16.msra.mxu0 %v2601
  %3458 = vmatpush.bf16.msra.mxu0 %v2600
  %3459 = vmatpush.bf16.msra.mxu0 %v2599
  %3460 = vmatpush.bf16.msra.mxu0 %v2598
  %3461 = vmatmul.bf16.gmra.mxu0 %v880
  %v3462 = vpop.f32.mrf.mxu0
  %v3463 = vadd.f32 %v3450, %v3462
  %v3464 = vpop.f32.mrf.mxu0
  %3465 = vdwg.mxu0
  %3466 = vmatpush.bf16.msra.mxu0 %v2613
  %3467 = vmatpush.bf16.msra.mxu0 %v2612
  %3468 = vmatpush.bf16.msra.mxu0 %v2611
  %3469 = vmatpush.bf16.msra.mxu0 %v2610
  %3470 = vmatpush.bf16.msra.mxu0 %v2609
  %3471 = vmatpush.bf16.msra.mxu0 %v2608
  %3472 = vmatpush.bf16.msra.mxu0 %v2607
  %3473 = vmatpush.bf16.msra.mxu0 %v2606
  %3474 = vmatmul.bf16.gmra.mxu0 %v881
  %v3475 = vpop.f32.mrf.mxu0
  %v3476 = vadd.f32 %v3463, %v3475
  %v3477 = vpop.f32.mrf.mxu0
  %3478 = vdwg.mxu0
  %3479 = vmatpush.bf16.msra.mxu0 %v2621
  %3480 = vmatpush.bf16.msra.mxu0 %v2620
  %3481 = vmatpush.bf16.msra.mxu0 %v2619
  %3482 = vmatpush.bf16.msra.mxu0 %v2618
  %3483 = vmatpush.bf16.msra.mxu0 %v2617
  %3484 = vmatpush.bf16.msra.mxu0 %v2616
  %3485 = vmatpush.bf16.msra.mxu0 %v2615
  %3486 = vmatpush.bf16.msra.mxu0 %v2614
  %3487 = vmatmul.bf16.gmra.mxu0 %v882
  %v3488 = vpop.f32.mrf.mxu0
  %v3489 = vadd.f32 %v3476, %v3488
  %v3490 = vpop.f32.mrf.mxu0
  %3491 = vdwg.mxu0
  %3492 = vmatpush.bf16.msra.mxu0 %v2629
  %3493 = vmatpush.bf16.msra.mxu0 %v2628
  %3494 = vmatpush.bf16.msra.mxu0 %v2627
  %3495 = vmatpush.bf16.msra.mxu0 %v2626
  %3496 = vmatpush.bf16.msra.mxu0 %v2625
  %3497 = vmatpush.bf16.msra.mxu0 %v2624
  %3498 = vmatpush.bf16.msra.mxu0 %v2623
  %3499 = vmatpush.bf16.msra.mxu0 %v2622
  %3500 = vmatmul.bf16.gmra.mxu0 %v883
  %v3501 = vpop.f32.mrf.mxu0
  %v3502 = vadd.f32 %v3489, %v3501
  %v3503 = vpop.f32.mrf.mxu0
  %3504 = vdwg.mxu0
  %3505 = vmatpush.bf16.msra.mxu0 %v2637
  %3506 = vmatpush.bf16.msra.mxu0 %v2636
  %3507 = vmatpush.bf16.msra.mxu0 %v2635
  %3508 = vmatpush.bf16.msra.mxu0 %v2634
  %3509 = vmatpush.bf16.msra.mxu0 %v2633
  %3510 = vmatpush.bf16.msra.mxu0 %v2632
  %3511 = vmatpush.bf16.msra.mxu0 %v2631
  %3512 = vmatpush.bf16.msra.mxu0 %v2630
  %3513 = vmatmul.bf16.gmra.mxu0 %v884
  %v3514 = vpop.f32.mrf.mxu0
  %v3515 = vadd.f32 %v3502, %v3514
  %v3516 = vpop.f32.mrf.mxu0
  %3517 = vdwg.mxu0
  %3518 = vmatpush.bf16.msra.mxu0 %v2645
  %3519 = vmatpush.bf16.msra.mxu0 %v2644
  %3520 = vmatpush.bf16.msra.mxu0 %v2643
  %3521 = vmatpush.bf16.msra.mxu0 %v2642
  %3522 = vmatpush.bf16.msra.mxu0 %v2641
  %3523 = vmatpush.bf16.msra.mxu0 %v2640
  %3524 = vmatpush.bf16.msra.mxu0 %v2639
  %3525 = vmatpush.bf16.msra.mxu0 %v2638
  %3526 = vmatmul.bf16.gmra.mxu0 %v885
  %v3527 = vpop.f32.mrf.mxu0
  %v3528 = vadd.f32 %v3515, %v3527
  %v3529 = vpop.f32.mrf.mxu0
  %3530 = vdwg.mxu0
  %3531 = vmatpush.bf16.msra.mxu0 %v2653
  %3532 = vmatpush.bf16.msra.mxu0 %v2652
  %3533 = vmatpush.bf16.msra.mxu0 %v2651
  %3534 = vmatpush.bf16.msra.mxu0 %v2650
  %3535 = vmatpush.bf16.msra.mxu0 %v2649
  %3536 = vmatpush.bf16.msra.mxu0 %v2648
  %3537 = vmatpush.bf16.msra.mxu0 %v2647
  %3538 = vmatpush.bf16.msra.mxu0 %v2646
  %3539 = vmatmul.bf16.gmra.mxu0 %v886
  %v3540 = vpop.f32.mrf.mxu0
  %v3541 = vadd.f32 %v3528, %v3540
  %v3542 = vpop.f32.mrf.mxu0
  %3543 = vdwg.mxu0
  %3544 = vmatpush.bf16.msra.mxu0 %v2661
  %3545 = vmatpush.bf16.msra.mxu0 %v2660
  %3546 = vmatpush.bf16.msra.mxu0 %v2659
  %3547 = vmatpush.bf16.msra.mxu0 %v2658
  %3548 = vmatpush.bf16.msra.mxu0 %v2657
  %3549 = vmatpush.bf16.msra.mxu0 %v2656
  %3550 = vmatpush.bf16.msra.mxu0 %v2655
  %3551 = vmatpush.bf16.msra.mxu0 %v2654
  %3552 = vmatmul.bf16.gmra.mxu0 %v887
  %v3553 = vpop.f32.mrf.mxu0
  %v3554 = vadd.f32 %v3541, %v3553
  %v3555 = vpop.f32.mrf.mxu0
  %3556 = vdwg.mxu0
  %3557 = vmatpush.bf16.msra.mxu0 %v2669
  %3558 = vmatpush.bf16.msra.mxu0 %v2668
  %3559 = vmatpush.bf16.msra.mxu0 %v2667
  %3560 = vmatpush.bf16.msra.mxu0 %v2666
  %3561 = vmatpush.bf16.msra.mxu0 %v2665
  %3562 = vmatpush.bf16.msra.mxu0 %v2664
  %3563 = vmatpush.bf16.msra.mxu0 %v2663
  %3564 = vmatpush.bf16.msra.mxu0 %v2662
  %3565 = vmatmul.bf16.gmra.mxu0 %v888
  %v3566 = vpop.f32.mrf.mxu0
  %v3567 = vadd.f32 %v3554, %v3566
  %v3568 = vpop.f32.mrf.mxu0
  %3569 = vdwg.mxu0
  %3570 = vmatpush.bf16.msra.mxu0 %v2677
  %3571 = vmatpush.bf16.msra.mxu0 %v2676
  %3572 = vmatpush.bf16.msra.mxu0 %v2675
  %3573 = vmatpush.bf16.msra.mxu0 %v2674
  %3574 = vmatpush.bf16.msra.mxu0 %v2673
  %3575 = vmatpush.bf16.msra.mxu0 %v2672
  %3576 = vmatpush.bf16.msra.mxu0 %v2671
  %3577 = vmatpush.bf16.msra.mxu0 %v2670
  %3578 = vmatmul.bf16.gmra.mxu0 %v889
  %v3579 = vpop.f32.mrf.mxu0
  %v3580 = vadd.f32 %v3567, %v3579
  %v3581 = vpop.f32.mrf.mxu0
  %3582 = vdwg.mxu0
  %3583 = vmatpush.bf16.msra.mxu0 %v2685
  %3584 = vmatpush.bf16.msra.mxu0 %v2684
  %3585 = vmatpush.bf16.msra.mxu0 %v2683
  %3586 = vmatpush.bf16.msra.mxu0 %v2682
  %3587 = vmatpush.bf16.msra.mxu0 %v2681
  %3588 = vmatpush.bf16.msra.mxu0 %v2680
  %3589 = vmatpush.bf16.msra.mxu0 %v2679
  %3590 = vmatpush.bf16.msra.mxu0 %v2678
  %3591 = vmatmul.bf16.gmra.mxu0 %v890
  %v3592 = vpop.f32.mrf.mxu0
  %v3593 = vadd.f32 %v3580, %v3592
  %v3594 = vpop.f32.mrf.mxu0
  %3595 = vdwg.mxu0
  %3596 = vmatpush.bf16.msra.mxu0 %v2693
  %3597 = vmatpush.bf16.msra.mxu0 %v2692
  %3598 = vmatpush.bf16.msra.mxu0 %v2691
  %3599 = vmatpush.bf16.msra.mxu0 %v2690
  %3600 = vmatpush.bf16.msra.mxu0 %v2689
  %3601 = vmatpush.bf16.msra.mxu0 %v2688
  %3602 = vmatpush.bf16.msra.mxu0 %v2687
  %3603 = vmatpush.bf16.msra.mxu0 %v2686
  %3604 = vmatmul.bf16.gmra.mxu0 %v891
  %v3605 = vpop.f32.mrf.mxu0
  %v3606 = vadd.f32 %v3593, %v3605
  %v3607 = vpop.f32.mrf.mxu0
  %3608 = vdwg.mxu0
  %3609 = vmatpush.bf16.msra.mxu0 %v2701
  %3610 = vmatpush.bf16.msra.mxu0 %v2700
  %3611 = vmatpush.bf16.msra.mxu0 %v2699
  %3612 = vmatpush.bf16.msra.mxu0 %v2698
  %3613 = vmatpush.bf16.msra.mxu0 %v2697
  %3614 = vmatpush.bf16.msra.mxu0 %v2696
  %3615 = vmatpush.bf16.msra.mxu0 %v2695
  %3616 = vmatpush.bf16.msra.mxu0 %v2694
  %3617 = vmatmul.bf16.gmra.mxu0 %v892
  %v3618 = vpop.f32.mrf.mxu0
  %v3619 = vadd.f32 %v3606, %v3618
  %v3620 = vpop.f32.mrf.mxu0
  %3621 = vdwg.mxu0
  %3622 = vmatpush.bf16.msra.mxu0 %v2709
  %3623 = vmatpush.bf16.msra.mxu0 %v2708
  %3624 = vmatpush.bf16.msra.mxu0 %v2707
  %3625 = vmatpush.bf16.msra.mxu0 %v2706
  %3626 = vmatpush.bf16.msra.mxu0 %v2705
  %3627 = vmatpush.bf16.msra.mxu0 %v2704
  %3628 = vmatpush.bf16.msra.mxu0 %v2703
  %3629 = vmatpush.bf16.msra.mxu0 %v2702
  %3630 = vmatmul.bf16.gmra.mxu0 %v893
  %v3631 = vpop.f32.mrf.mxu0
  %v3632 = vadd.f32 %v3619, %v3631
  %v3633 = vpop.f32.mrf.mxu0
  %3634 = vdwg.mxu0
  %3635 = vmatpush.bf16.msra.mxu0 %v2717
  %3636 = vmatpush.bf16.msra.mxu0 %v2716
  %3637 = vmatpush.bf16.msra.mxu0 %v2715
  %3638 = vmatpush.bf16.msra.mxu0 %v2714
  %3639 = vmatpush.bf16.msra.mxu0 %v2713
  %3640 = vmatpush.bf16.msra.mxu0 %v2712
  %3641 = vmatpush.bf16.msra.mxu0 %v2711
  %3642 = vmatpush.bf16.msra.mxu0 %v2710
  %3643 = vmatmul.bf16.gmra.mxu0 %v894
  %v3644 = vpop.f32.mrf.mxu0
  %v3645 = vadd.f32 %v3632, %v3644
  %v3646 = vpop.f32.mrf.mxu0
  %3647 = vdwg.mxu0
  %3648 = vmatpush.bf16.msra.mxu0 %v2725
  %3649 = vmatpush.bf16.msra.mxu0 %v2724
  %3650 = vmatpush.bf16.msra.mxu0 %v2723
  %3651 = vmatpush.bf16.msra.mxu0 %v2722
  %3652 = vmatpush.bf16.msra.mxu0 %v2721
  %3653 = vmatpush.bf16.msra.mxu0 %v2720
  %3654 = vmatpush.bf16.msra.mxu0 %v2719
  %3655 = vmatpush.bf16.msra.mxu0 %v2718
  %3656 = vmatmul.bf16.gmra.mxu0 %v895
  %v3657 = vpop.f32.mrf.mxu0
  %v3658 = vadd.f32 %v3645, %v3657
  %v3659 = vpop.f32.mrf.mxu0
  %3660 = vdwg.mxu0
  %3661 = vmatpush.bf16.msra.mxu0 %v2733
  %3662 = vmatpush.bf16.msra.mxu0 %v2732
  %3663 = vmatpush.bf16.msra.mxu0 %v2731
  %3664 = vmatpush.bf16.msra.mxu0 %v2730
  %3665 = vmatpush.bf16.msra.mxu0 %v2729
  %3666 = vmatpush.bf16.msra.mxu0 %v2728
  %3667 = vmatpush.bf16.msra.mxu0 %v2727
  %3668 = vmatpush.bf16.msra.mxu0 %v2726
  %3669 = vmatmul.bf16.gmra.mxu0 %v896
  %v3670 = vpop.f32.mrf.mxu0
  %v3671 = vadd.f32 %v3658, %v3670
  %v3672 = vpop.f32.mrf.mxu0
  %3673 = vdwg.mxu0
  %3674 = vmatpush.bf16.msra.mxu0 %v2741
  %3675 = vmatpush.bf16.msra.mxu0 %v2740
  %3676 = vmatpush.bf16.msra.mxu0 %v2739
  %3677 = vmatpush.bf16.msra.mxu0 %v2738
  %3678 = vmatpush.bf16.msra.mxu0 %v2737
  %3679 = vmatpush.bf16.msra.mxu0 %v2736
  %3680 = vmatpush.bf16.msra.mxu0 %v2735
  %3681 = vmatpush.bf16.msra.mxu0 %v2734
  %3682 = vmatmul.bf16.gmra.mxu0 %v897
  %v3683 = vpop.f32.mrf.mxu0
  %v3684 = vadd.f32 %v3671, %v3683
  %v3685 = vpop.f32.mrf.mxu0
  %3686 = vdwg.mxu0
  %3687 = vmatpush.bf16.msra.mxu0 %v2749
  %3688 = vmatpush.bf16.msra.mxu0 %v2748
  %3689 = vmatpush.bf16.msra.mxu0 %v2747
  %3690 = vmatpush.bf16.msra.mxu0 %v2746
  %3691 = vmatpush.bf16.msra.mxu0 %v2745
  %3692 = vmatpush.bf16.msra.mxu0 %v2744
  %3693 = vmatpush.bf16.msra.mxu0 %v2743
  %3694 = vmatpush.bf16.msra.mxu0 %v2742
  %3695 = vmatmul.bf16.gmra.mxu0 %v898
  %v3696 = vpop.f32.mrf.mxu0
  %v3697 = vadd.f32 %v3684, %v3696
  %v3698 = vpop.f32.mrf.mxu0
  %3699 = vdwg.mxu0
  %3700 = vmatpush.bf16.msra.mxu0 %v2757
  %3701 = vmatpush.bf16.msra.mxu0 %v2756
  %3702 = vmatpush.bf16.msra.mxu0 %v2755
  %3703 = vmatpush.bf16.msra.mxu0 %v2754
  %3704 = vmatpush.bf16.msra.mxu0 %v2753
  %3705 = vmatpush.bf16.msra.mxu0 %v2752
  %3706 = vmatpush.bf16.msra.mxu0 %v2751
  %3707 = vmatpush.bf16.msra.mxu0 %v2750
  %3708 = vmatmul.bf16.gmra.mxu0 %v899
  %v3709 = vpop.f32.mrf.mxu0
  %v3710 = vadd.f32 %v3697, %v3709
  %v3711 = vpop.f32.mrf.mxu0
  %3712 = vdwg.mxu0
  %3713 = vmatpush.bf16.msra.mxu0 0
  %3714 = vmatpush.bf16.msra.mxu0 0
  %3715 = vmatpush.bf16.msra.mxu0 0
  %3716 = vmatpush.bf16.msra.mxu0 0
  %3717 = vmatpush.bf16.msra.mxu0 0
  %3718 = vmatpush.bf16.msra.mxu0 %v2760
  %3719 = vmatpush.bf16.msra.mxu0 %v2759
  %3720 = vmatpush.bf16.msra.mxu0 %v2758
  %3721 = vmatmul.bf16.gmra.mxu0 %v3126
  %v3722 = vpop.f32.mrf.mxu0
  %v3723 = vadd.f32 %v3710, %v3722
  %v3724 = vpop.f32.mrf.mxu0
  %3725 = vdwg.mxu0
  %v3726 = vmax.f32 %v3723, 0.0
  %v3727 = vpack.c.bf16 %v3726, %v3726
  %v3728 = vld [vmem:[%s2] sm:$0xf]
  %v3729 = vld [vmem:[%s2 + $0x4] sm:$0xf]
  %v3730 = vld [vmem:[%s2 + $0x8] sm:$0xf]
  %v3731 = vld [vmem:[%s2 + $0xc] sm:$0xf]
  %v3732 = vld [vmem:[%s2 + $0x10] sm:$0xf]
  %v3733 = vld [vmem:[%s2 + $0x14] sm:$0xf]
  %v3734 = vld [vmem:[%s2 + $0x18] sm:$0xf]
  %v3735 = vld [vmem:[%s2 + $0x1c] sm:$0xf]
  %v3736 = vld [vmem:[%s2 + $0x20] sm:$0xf]
  %v3737 = vld [vmem:[%s2 + $0x24] sm:$0xf]
  %v3738 = vld [vmem:[%s2 + $0x28] sm:$0xf]
  %v3739 = vld [vmem:[%s2 + $0x2c] sm:$0xf]
  %v3740 = vld [vmem:[%s2 + $0x30] sm:$0xf]
  %v3741 = vld [vmem:[%s2 + $0x34] sm:$0xf]
  %v3742 = vld [vmem:[%s2 + $0x38] sm:$0xf]
  %v3743 = vld [vmem:[%s2 + $0x3c] sm:$0xf]
  %v3744 = vld [vmem:[%s6] sm:$0x1]
  %v3746 = vperm.slane %v3744, 0
  %v3764 = vunpack.c.l.b16 %v3728
  %v3765 = vunpack.c.l.b16 %v3729
  %v3766 = vunpack.c.l.b16 %v3730
  %v3767 = vunpack.c.l.b16 %v3731
  %v3768 = vunpack.c.l.b16 %v3732
  %v3769 = vunpack.c.l.b16 %v3733
  %v3770 = vunpack.c.l.b16 %v3734
  %v3771 = vunpack.c.l.b16 %v3735
  %v3772 = vunpack.c.l.b16 %v3736
  %v3773 = vunpack.c.l.b16 %v3737
  %v3774 = vunpack.c.l.b16 %v3738
  %v3775 = vunpack.c.l.b16 %v3739
  %v3776 = vunpack.c.l.b16 %v3740
  %v3777 = vunpack.c.l.b16 %v3741
  %v3778 = vunpack.c.l.b16 %v3742
  %v3779 = vunpack.c.l.b16 %v3743
  %v3780 = vpack.c.b16 %v3765, %v3764
  %v3781 = vpack.c.b16 %v3767, %v3766
  %v3782 = vpack.c.b16 %v3769, %v3768
  %v3783 = vpack.c.b16 %v3771, %v3770
  %v3784 = vpack.c.b16 %v3773, %v3772
  %v3785 = vpack.c.b16 %v3775, %v3774
  %v3786 = vpack.c.b16 %v3777, %v3776
  %v3787 = vpack.c.b16 %v3779, %v3778
  %3796 = vmatpush.bf16.msra.mxu0 %v3787
  %3797 = vmatpush.bf16.msra.mxu0 %v3786
  %3798 = vmatpush.bf16.msra.mxu0 %v3785
  %3799 = vmatpush.bf16.msra.mxu0 %v3784
  %3800 = vmatpush.bf16.msra.mxu0 %v3783
  %3801 = vmatpush.bf16.msra.mxu0 %v3782
  %3802 = vmatpush.bf16.msra.mxu0 %v3781
  %3803 = vmatpush.bf16.msra.mxu0 %v3780
  %3804 = vmatmul.bf16.gmra.mxu0 %v3727
  %v3805 = vpop.f32.mrf.mxu0
  %v3806 = vadd.f32 %v3746, %v3805
  %v3807 = vpop.f32.mrf.mxu0
  %3808 = vdwg.mxu0
  %v3809 = vmax.f32 %v3806, 0.0
  %v3810 = vpack.c.bf16 %v3809, %v3809
  %v3811 = vld [vmem:[%s3] sm:$0xf]
  %v3812 = vld [vmem:[%s3 + $0x4] sm:$0xf]
  %v3813 = vld [vmem:[%s3 + $0x8] sm:$0xf]
  %v3814 = vld [vmem:[%s3 + $0xc] sm:$0xf]
  %v3815 = vld [vmem:[%s3 + $0x10] sm:$0xf]
  %v3816 = vld [vmem:[%s3 + $0x14] sm:$0xf]
  %v3817 = vld [vmem:[%s3 + $0x18] sm:$0xf]
  %v3818 = vld [vmem:[%s3 + $0x1c] sm:$0xf]
  %v3819 = vld [vmem:[%s3 + $0x20] sm:$0xf]
  %v3820 = vld [vmem:[%s3 + $0x24] sm:$0xf]
  %v3821 = vld [vmem:[%s3 + $0x28] sm:$0xf]
  %v3822 = vld [vmem:[%s3 + $0x2c] sm:$0xf]
  %v3823 = vld [vmem:[%s3 + $0x30] sm:$0xf]
  %v3824 = vld [vmem:[%s3 + $0x34] sm:$0xf]
  %v3825 = vld [vmem:[%s3 + $0x38] sm:$0xf]
  %v3826 = vld [vmem:[%s3 + $0x3c] sm:$0xf]
  %v3827 = vld [vmem:[%s7] sm:$0x1]
  %v3829 = vperm.slane %v3827, 0
  %v3847 = vunpack.c.l.b16 %v3811
  %v3848 = vunpack.c.l.b16 %v3812
  %v3849 = vunpack.c.l.b16 %v3813
  %v3850 = vunpack.c.l.b16 %v3814
  %v3851 = vunpack.c.l.b16 %v3815
  %v3852 = vunpack.c.l.b16 %v3816
  %v3853 = vunpack.c.l.b16 %v3817
  %v3854 = vunpack.c.l.b16 %v3818
  %v3855 = vunpack.c.l.b16 %v3819
  %v3856 = vunpack.c.l.b16 %v3820
  %v3857 = vunpack.c.l.b16 %v3821
  %v3858 = vunpack.c.l.b16 %v3822
  %v3859 = vunpack.c.l.b16 %v3823
  %v3860 = vunpack.c.l.b16 %v3824
  %v3861 = vunpack.c.l.b16 %v3825
  %v3862 = vunpack.c.l.b16 %v3826
  %v3863 = vpack.c.b16 %v3848, %v3847
  %v3864 = vpack.c.b16 %v3850, %v3849
  %v3865 = vpack.c.b16 %v3852, %v3851
  %v3866 = vpack.c.b16 %v3854, %v3853
  %v3867 = vpack.c.b16 %v3856, %v3855
  %v3868 = vpack.c.b16 %v3858, %v3857
  %v3869 = vpack.c.b16 %v3860, %v3859
  %v3870 = vpack.c.b16 %v3862, %v3861
  %3879 = vmatpush.bf16.msra.mxu0 %v3870
  %3880 = vmatpush.bf16.msra.mxu0 %v3869
  %3881 = vmatpush.bf16.msra.mxu0 %v3868
  %3882 = vmatpush.bf16.msra.mxu0 %v3867
  %3883 = vmatpush.bf16.msra.mxu0 %v3866
  %3884 = vmatpush.bf16.msra.mxu0 %v3865
  %3885 = vmatpush.bf16.msra.mxu0 %v3864
  %3886 = vmatpush.bf16.msra.mxu0 %v3863
  %3887 = vmatmul.bf16.gmra.mxu0 %v3810
  %v3888 = vpop.f32.mrf.mxu0
  %v3889 = vadd.f32 %v3829, %v3888
  %v3890 = vpop.f32.mrf.mxu0
  %3891 = vdwg.mxu0
  %v3892 = vmax.f32 %v3889, 0.0
  %v3893 = vpack.c.bf16 %v3892, %v3892
  %v3894 = vld [vmem:[%s4] sm:$0xf]
  %v3895 = vld [vmem:[%s4 + $0x4] sm:$0xf]
  %v3896 = vld [vmem:[%s4 + $0x8] sm:$0xf]
  %v3897 = vld [vmem:[%s4 + $0xc] sm:$0xf]
  %v3898 = vld [vmem:[%s4 + $0x10] sm:$0xf]
  %v3899 = vld [vmem:[%s4 + $0x14] sm:$0xf]
  %v3900 = vld [vmem:[%s4 + $0x18] sm:$0xf]
  %v3901 = vld [vmem:[%s4 + $0x1c] sm:$0xf]
  %v3902 = vld [vmem:[%s4 + $0x20] sm:$0xf]
  %v3903 = vld [vmem:[%s4 + $0x24] sm:$0xf]
  %v3904 = vld [vmem:[%s4 + $0x28] sm:$0xf]
  %v3905 = vld [vmem:[%s4 + $0x2c] sm:$0xf]
  %v3906 = vld [vmem:[%s4 + $0x30] sm:$0xf]
  %v3907 = vld [vmem:[%s4 + $0x34] sm:$0xf]
  %v3908 = vld [vmem:[%s4 + $0x38] sm:$0xf]
  %v3909 = vld [vmem:[%s4 + $0x3c] sm:$0xf]
  %v3910 = vld [vmem:[%s8] sm:$0x1]
  %v3912 = vperm.slane %v3910, 0
  %v3930 = vunpack.c.l.b16 %v3894
  %v3931 = vunpack.c.l.b16 %v3895
  %v3932 = vunpack.c.l.b16 %v3896
  %v3933 = vunpack.c.l.b16 %v3897
  %v3934 = vunpack.c.l.b16 %v3898
  %v3935 = vunpack.c.l.b16 %v3899
  %v3936 = vunpack.c.l.b16 %v3900
  %v3937 = vunpack.c.l.b16 %v3901
  %v3938 = vunpack.c.l.b16 %v3902
  %v3939 = vunpack.c.l.b16 %v3903
  %v3940 = vunpack.c.l.b16 %v3904
  %v3941 = vunpack.c.l.b16 %v3905
  %v3942 = vunpack.c.l.b16 %v3906
  %v3943 = vunpack.c.l.b16 %v3907
  %v3944 = vunpack.c.l.b16 %v3908
  %v3945 = vunpack.c.l.b16 %v3909
  %v3946 = vpack.c.b16 %v3931, %v3930
  %v3947 = vpack.c.b16 %v3933, %v3932
  %v3948 = vpack.c.b16 %v3935, %v3934
  %v3949 = vpack.c.b16 %v3937, %v3936
  %v3950 = vpack.c.b16 %v3939, %v3938
  %v3951 = vpack.c.b16 %v3941, %v3940
  %v3952 = vpack.c.b16 %v3943, %v3942
  %v3953 = vpack.c.b16 %v3945, %v3944
  %3962 = vmatpush.bf16.msra.mxu0 %v3953
  %3963 = vmatpush.bf16.msra.mxu0 %v3952
  %3964 = vmatpush.bf16.msra.mxu0 %v3951
  %3965 = vmatpush.bf16.msra.mxu0 %v3950
  %3966 = vmatpush.bf16.msra.mxu0 %v3949
  %3967 = vmatpush.bf16.msra.mxu0 %v3948
  %3968 = vmatpush.bf16.msra.mxu0 %v3947
  %3969 = vmatpush.bf16.msra.mxu0 %v3946
  %3970 = vmatmul.bf16.gmra.mxu0 %v3893
  %v3971 = vpop.f32.mrf.mxu0
  %v3972 = vadd.f32 %v3912, %v3971
  %v3973 = vpop.f32.mrf.mxu0
  %3974 = vdwg.mxu0
  %3975 = vst [vmem:[%s9] sm:$0xff] %v3972
  // Predicated region
  $region38: #{my_network_forward.7} parent=0 // pred_check
    _
  $region39: #{my_network_forward.7} parent=0 // pred_check_branch
    %3977 = sbr.rel (0) target = $region41
  $region40: #{my_network_forward.7} parent=0 // pred_region
    _
  $region41: #{my_network_forward.7} parent=0 // pred_fallthru
    _
  // Predicated region
  $region42: #{my_network_forward.7} parent=0 // pred_check
    _
  $region43: #{my_network_forward.7} parent=0 // pred_check_branch
    %3979 = sbr.rel (0) target = $region45
  $region44: #{my_network_forward.7} parent=0 // pred_region
    _
  $region45: #{my_network_forward.7} parent=0 // pred_fallthru
    _

</llo_original>
